<compile_context>
chip_gen: v7x
topology: tpu7x:2x2x1
jax: 0.10.0
libtpu: 0.0.40
codegen_flags: <defaults>
</compile_context>

<pallas_src>
import jax
import jax.numpy as jnp
from jax.experimental import pallas as pl
from jax.experimental.pallas import tpu as pltpu

IN, H1, H2, H3, OUT = 8, 100, 100, 50, 1
PAD = 128  # padded feature/hidden width (one full lane tile)


def mlp_kernel(x_ref, w1_ref, b1_ref, w2_ref, b2_ref,
               w3_ref, b3_ref, w4_ref, b4_ref, out_ref):
    # hidden1 + ReLU : (TILE_B, 8) @ (8, 128) -> (TILE_B, 128)
    h = jnp.dot(x_ref[...], w1_ref[...], preferred_element_type=jnp.float32)
    h = jnp.maximum(h + b1_ref[...], 0.0)
    # hidden2 + ReLU : (TILE_B, 128) @ (128, 128)
    h = jnp.dot(h, w2_ref[...], preferred_element_type=jnp.float32)
    h = jnp.maximum(h + b2_ref[...], 0.0)
    # hidden3 + ReLU : (TILE_B, 128) @ (128, 128)  (lanes >= 50 stay exactly 0)
    h = jnp.dot(h, w3_ref[...], preferred_element_type=jnp.float32)
    h = jnp.maximum(h + b3_ref[...], 0.0)
    # predict (out_features == 1): VPU multiply + XLU lane-reduction instead of
    # burning a full 128-wide MXU pass; bias is a scalar read from SMEM.
    o = jnp.sum(h * w4_ref[...], axis=-1) + b4_ref[0, 0]   # (TILE_B,)
    out_ref[0, :] = o                                        # lane-dense row store


def _pad2(a, rows, cols):
    return jnp.pad(a, ((0, rows - a.shape[0]), (0, cols - a.shape[1])))


def _pad_params(params):
    """Pad logical (in,out)-layout params to 128-wide lane tiles (zeros)."""
    (w1, b1), (w2, b2), (w3, b3), (w4, b4) = params
    w1p = _pad2(w1, IN, PAD)          # (8, 128)
    b1p = _pad2(b1, 1, PAD)           # (1, 128)
    w2p = _pad2(w2, PAD, PAD)         # (128, 128)
    b2p = _pad2(b2, 1, PAD)
    w3p = _pad2(w3, PAD, PAD)         # (128, 128)
    b3p = _pad2(b3, 1, PAD)
    w4row = _pad2(w4.T, 1, PAD)       # (1, 128) row vector
    b4s = b4.reshape(1, 1)            # scalar for SMEM
    return w1p, b1p, w2p, b2p, w3p, b3p, w4row, b4s


def mlp_regression_forward(x, params, *, tile_b=256):
    """x: (B, 8) float32. Returns (B,) float32, matching PyTorch output[:, 0].

    tile_b: batch tile. Use a multiple of 128 (v5e) / 256 (v6e, v7x); raise it
    (e.g. 2048-4096) for large B — intermediates are only tile_b*128*4 bytes.
    """
    w1, b1, w2, b2, w3, b3, w4row, b4 = _pad_params(params)

    B = x.shape[0]
    n_blocks = pl.cdiv(B, tile_b)
    b_pad = n_blocks * tile_b
    if b_pad != B:
        x = jnp.pad(x, ((0, b_pad - B), (0, 0)))   # padded rows dropped below

    def resident(a):  # full array in VMEM, constant block index -> DMA'd once
        return pl.BlockSpec(a.shape, lambda i: (0, 0))

    out = pl.pallas_call(
        mlp_kernel,
        out_shape=jax.ShapeDtypeStruct((1, b_pad), jnp.float32),
        grid=(n_blocks,),
        in_specs=[
            pl.BlockSpec((tile_b, IN), lambda i: (i, 0)),      # x: tiled over batch
            resident(w1), resident(b1),
            resident(w2), resident(b2),
            resident(w3), resident(b3),
            resident(w4row),
            pl.BlockSpec(memory_space=pltpu.MemorySpace.SMEM),  # scalar bias
        ],
        out_specs=pl.BlockSpec((1, tile_b), lambda i: (0, i)),  # lane-dense slab
        compiler_params=pltpu.CompilerParams(
            dimension_semantics=("parallel",),
        ),
    )(x, w1, b1, w2, b2, w3, b3, w4row, b4)
    return out[0, :B]


def init_params(key):
    """Deterministic PyTorch-style init (uniform +-1/sqrt(fan_in)).

    Logical layout: weights (in_features, out_features), biases (1, out_features).
    """
    dims = [(IN, H1), (H1, H2), (H2, H3), (H3, OUT)]
    params = []
    for fan_in, fan_out in dims:
        key, kw, kb = jax.random.split(key, 3)
        bound = 1.0 / jnp.sqrt(jnp.float32(fan_in))
        w = jax.random.uniform(kw, (fan_in, fan_out), jnp.float32, -bound, bound)
        b = jax.random.uniform(kb, (1, fan_out), jnp.float32, -bound, bound)
        params.append((w, b))
    return params


def reference_forward(x, params):
    h = x
    for i, (w, b) in enumerate(params):
        h = h @ w + b
        if i < len(params) - 1:
            h = jnp.maximum(h, 0.0)
    return h[:, 0]


if __name__ == "__main__":
    key = jax.random.PRNGKey(0)
    key, kx = jax.random.split(key)

    batch = 16
    x = jax.random.normal(kx, (batch, IN), dtype=jnp.float32)
    params = init_params(key)

    y = mlp_regression_forward(x, params)
    y = jax.block_until_ready(y)

    y_ref = reference_forward(x, params)
    assert y.shape == (batch,)
    assert jnp.allclose(y, y_ref, atol=1e-5, rtol=1e-5)

    print("KERNEL_OK")
</pallas_src>

<mosaic_0001>
module attributes {stable_mosaic.version = 11 : i64} {
  func.func @mlp_kernel(%arg0: i32, %arg1: memref<256x8xf32, #tpu.memory_space<vmem>>, %arg2: memref<8x128xf32, #tpu.memory_space<vmem>>, %arg3: memref<1x128xf32, #tpu.memory_space<vmem>>, %arg4: memref<128x128xf32, #tpu.memory_space<vmem>>, %arg5: memref<1x128xf32, #tpu.memory_space<vmem>>, %arg6: memref<128x128xf32, #tpu.memory_space<vmem>>, %arg7: memref<1x128xf32, #tpu.memory_space<vmem>>, %arg8: memref<1x128xf32, #tpu.memory_space<vmem>>, %arg9: memref<1x1xf32, #tpu.memory_space<smem>>, %arg10: memref<1x256xf32, #tpu.memory_space<vmem>>) attributes {dimension_semantics = [#tpu.dimension_semantics<parallel>], iteration_bounds = array<i64: 1>, scalar_prefetch = 0 : i64, scratch_operands = 0 : i64, tpu.core_type = #tpu.core_type<tc>, window_params = [{transform_indices = @transform_0, window_bounds = array<i64: 256, 8>}, {pipeline_mode = #tpu.pipeline_mode<synchronous>, transform_indices = @transform_1, window_bounds = array<i64: 8, 128>}, {pipeline_mode = #tpu.pipeline_mode<synchronous>, transform_indices = @transform_2, window_bounds = array<i64: 1, 128>}, {pipeline_mode = #tpu.pipeline_mode<synchronous>, transform_indices = @transform_3, window_bounds = array<i64: 128, 128>}, {pipeline_mode = #tpu.pipeline_mode<synchronous>, transform_indices = @transform_4, window_bounds = array<i64: 1, 128>}, {pipeline_mode = #tpu.pipeline_mode<synchronous>, transform_indices = @transform_5, window_bounds = array<i64: 128, 128>}, {pipeline_mode = #tpu.pipeline_mode<synchronous>, transform_indices = @transform_6, window_bounds = array<i64: 1, 128>}, {pipeline_mode = #tpu.pipeline_mode<synchronous>, transform_indices = @transform_7, window_bounds = array<i64: 1, 128>}, {transform_indices = @transform_8, window_bounds = array<i64: 1, 1>}, {transform_indices = @transform_9, window_bounds = array<i64: 1, 256>}]} {
    %c0 = arith.constant 0 : index
    %c0_0 = arith.constant 0 : index
    %0 = vector.load %arg1[%c0, %c0_0] : memref<256x8xf32, #tpu.memory_space<vmem>>, vector<256x8xf32>
    %c0_1 = arith.constant 0 : index
    %c0_2 = arith.constant 0 : index
    %1 = vector.load %arg2[%c0_1, %c0_2] : memref<8x128xf32, #tpu.memory_space<vmem>>, vector<8x128xf32>
    %cst = arith.constant dense<0.000000e+00> : vector<256x128xf32>
    %2 = tpu.matmul %0, %1, %cst {dimension_numbers = #tpu.dot_dimension_numbers<[1], [0], [0], [1], [0, 0, 1, 1], [], []>} : vector<256x8xf32>, vector<8x128xf32>, vector<256x128xf32> -> vector<256x128xf32>
    %c0_3 = arith.constant 0 : index
    %c0_4 = arith.constant 0 : index
    %3 = vector.load %arg3[%c0_3, %c0_4] : memref<1x128xf32, #tpu.memory_space<vmem>>, vector<1x128xf32>
    %4 = vector.broadcast %3 : vector<1x128xf32> to vector<256x128xf32>
    %5 = arith.addf %2, %4 : vector<256x128xf32>
    %cst_5 = arith.constant 0.000000e+00 : f32
    %6 = vector.broadcast %cst_5 : f32 to vector<256x128xf32>
    %7 = arith.maximumf %5, %6 : vector<256x128xf32>
    %c0_6 = arith.constant 0 : index
    %c0_7 = arith.constant 0 : index
    %8 = vector.load %arg4[%c0_6, %c0_7] : memref<128x128xf32, #tpu.memory_space<vmem>>, vector<128x128xf32>
    %cst_8 = arith.constant dense<0.000000e+00> : vector<256x128xf32>
    %9 = tpu.matmul %7, %8, %cst_8 {dimension_numbers = #tpu.dot_dimension_numbers<[1], [0], [0], [1], [0, 0, 1, 1], [], []>} : vector<256x128xf32>, vector<128x128xf32>, vector<256x128xf32> -> vector<256x128xf32>
    %c0_9 = arith.constant 0 : index
    %c0_10 = arith.constant 0 : index
    %10 = vector.load %arg5[%c0_9, %c0_10] : memref<1x128xf32, #tpu.memory_space<vmem>>, vector<1x128xf32>
    %11 = vector.broadcast %10 : vector<1x128xf32> to vector<256x128xf32>
    %12 = arith.addf %9, %11 : vector<256x128xf32>
    %cst_11 = arith.constant 0.000000e+00 : f32
    %13 = vector.broadcast %cst_11 : f32 to vector<256x128xf32>
    %14 = arith.maximumf %12, %13 : vector<256x128xf32>
    %c0_12 = arith.constant 0 : index
    %c0_13 = arith.constant 0 : index
    %15 = vector.load %arg6[%c0_12, %c0_13] : memref<128x128xf32, #tpu.memory_space<vmem>>, vector<128x128xf32>
    %cst_14 = arith.constant dense<0.000000e+00> : vector<256x128xf32>
    %16 = tpu.matmul %14, %15, %cst_14 {dimension_numbers = #tpu.dot_dimension_numbers<[1], [0], [0], [1], [0, 0, 1, 1], [], []>} : vector<256x128xf32>, vector<128x128xf32>, vector<256x128xf32> -> vector<256x128xf32>
    %c0_15 = arith.constant 0 : index
    %c0_16 = arith.constant 0 : index
    %17 = vector.load %arg7[%c0_15, %c0_16] : memref<1x128xf32, #tpu.memory_space<vmem>>, vector<1x128xf32>
    %18 = vector.broadcast %17 : vector<1x128xf32> to vector<256x128xf32>
    %19 = arith.addf %16, %18 : vector<256x128xf32>
    %cst_17 = arith.constant 0.000000e+00 : f32
    %20 = vector.broadcast %cst_17 : f32 to vector<256x128xf32>
    %21 = arith.maximumf %19, %20 : vector<256x128xf32>
    %c0_18 = arith.constant 0 : index
    %c0_19 = arith.constant 0 : index
    %22 = vector.load %arg8[%c0_18, %c0_19] : memref<1x128xf32, #tpu.memory_space<vmem>>, vector<1x128xf32>
    %23 = vector.broadcast %22 : vector<1x128xf32> to vector<256x128xf32>
    %24 = arith.mulf %21, %23 : vector<256x128xf32>
    %cst_20 = arith.constant dense<0.000000e+00> : vector<256xf32>
    %25 = vector.multi_reduction <add>, %24, %cst_20 [1] : vector<256x128xf32> to vector<256xf32>
    %c0_21 = arith.constant 0 : index
    %c0_22 = arith.constant 0 : index
    %26 = memref.load %arg9[%c0_21, %c0_22] : memref<1x1xf32, #tpu.memory_space<smem>>
    %27 = vector.broadcast %26 : f32 to vector<256xf32>
    %28 = arith.addf %25, %27 : vector<256xf32>
    %c0_23 = arith.constant 0 : index
    %c0_24 = arith.constant 0 : index
    %29 = vector.load %arg10[%c0_23, %c0_24] : memref<1x256xf32, #tpu.memory_space<vmem>>, vector<1x256xf32>
    %30 = vector.shape_cast %29 : vector<1x256xf32> to vector<256xf32>
    %31 = vector.shape_cast %28 : vector<256xf32> to vector<1x256xf32>
    tpu.vector_store %arg10[%c0_23, %c0_24], %31 {strides = array<i32>} : memref<1x256xf32, #tpu.memory_space<vmem>>, vector<1x256xf32>,
    return
  }
  func.func @transform_0(%arg0: i32) -> (i32, i32) {
    %c0_i32 = arith.constant 0 : i32
    %c0_i32_0 = arith.constant 0 : i32
    return %arg0, %c0_i32 : i32, i32
  }
  func.func @transform_1(%arg0: i32) -> (i32, i32) {
    %c0_i32 = arith.constant 0 : i32
    %c0_i32_0 = arith.constant 0 : i32
    %c0_i32_1 = arith.constant 0 : i32
    return %c0_i32, %c0_i32_0 : i32, i32
  }
  func.func @transform_2(%arg0: i32) -> (i32, i32) {
    %c0_i32 = arith.constant 0 : i32
    %c0_i32_0 = arith.constant 0 : i32
    %c0_i32_1 = arith.constant 0 : i32
    return %c0_i32, %c0_i32_0 : i32, i32
  }
  func.func @transform_3(%arg0: i32) -> (i32, i32) {
    %c0_i32 = arith.constant 0 : i32
    %c0_i32_0 = arith.constant 0 : i32
    %c0_i32_1 = arith.constant 0 : i32
    return %c0_i32, %c0_i32_0 : i32, i32
  }
  func.func @transform_4(%arg0: i32) -> (i32, i32) {
    %c0_i32 = arith.constant 0 : i32
    %c0_i32_0 = arith.constant 0 : i32
    %c0_i32_1 = arith.constant 0 : i32
    return %c0_i32, %c0_i32_0 : i32, i32
  }
  func.func @transform_5(%arg0: i32) -> (i32, i32) {
    %c0_i32 = arith.constant 0 : i32
    %c0_i32_0 = arith.constant 0 : i32
    %c0_i32_1 = arith.constant 0 : i32
    return %c0_i32, %c0_i32_0 : i32, i32
  }
  func.func @transform_6(%arg0: i32) -> (i32, i32) {
    %c0_i32 = arith.constant 0 : i32
    %c0_i32_0 = arith.constant 0 : i32
    %c0_i32_1 = arith.constant 0 : i32
    return %c0_i32, %c0_i32_0 : i32, i32
  }
  func.func @transform_7(%arg0: i32) -> (i32, i32) {
    %c0_i32 = arith.constant 0 : i32
    %c0_i32_0 = arith.constant 0 : i32
    %c0_i32_1 = arith.constant 0 : i32
    return %c0_i32, %c0_i32_0 : i32, i32
  }
  func.func @transform_8(%arg0: i32) -> (i32, i32) {
    %c0_i32 = arith.constant 0 : i32
    %c0_i32_0 = arith.constant 0 : i32
    %c0_i32_1 = arith.constant 0 : i32
    return %c0_i32, %c0_i32_0 : i32, i32
  }
  func.func @transform_9(%arg0: i32) -> (i32, i32) {
    %c0_i32 = arith.constant 0 : i32
    %c0_i32_0 = arith.constant 0 : i32
    return %c0_i32, %arg0 : i32, i32
  }
}

</mosaic_0001>

<llo_original>
// kernel: tpu_custom_call.1
$region0: #{tpu_custom_call.1}
  #allocation0 [shape = 'u32[]', space=smem, size = 0x4, offset = 0x4, fixed_abs, tag = 'smem constant byte address 0x4 - core index']
  #allocation1 [shape = 'u32[144,128]{1,0:T(1,128)}', space=vmem, size = 0x12000, scoped, tag = 'internal scratch']
  #allocation2 [shape = 'f32[1,1]{1,0:T(1,128)S(6)}', space=smem, size = 0x200, scoped, tag = 'scoped memory for tpu_custom_call.1']
  %s0 = inlined_call_operand.vmem [shape: f32[256,8], index: 0, kind: input, shape index: {}]
  %s1 = inlined_call_operand.vmem [shape: f32[8,128], index: 1, kind: input, shape index: {}]
  %s2 = inlined_call_operand.vmem [shape: f32[1,128], index: 2, kind: input, shape index: {}]
  %s3 = inlined_call_operand.vmem [shape: f32[128,128], index: 3, kind: input, shape index: {}]
  %s4 = inlined_call_operand.vmem [shape: f32[1,128], index: 4, kind: input, shape index: {}]
  %s5 = inlined_call_operand.vmem [shape: f32[128,128], index: 5, kind: input, shape index: {}]
  %s6 = inlined_call_operand.vmem [shape: f32[1,128], index: 6, kind: input, shape index: {}]
  %s7 = inlined_call_operand.vmem [shape: f32[1,128], index: 7, kind: input, shape index: {}]
  %s8 = inlined_call_operand.<no memory space> [shape: f32[1,1], index: 8, kind: input, shape index: {}]
  %s9 = inlined_call_operand.hbm [shape: f32[1,256], index: 9, kind: output, shape index: {}]
  %s10 = sld [smem:[#allocation0]]
  $region46: #{tpu_custom_call.1} parent=0
    _
  %s12 = ssub.s32 1, %s10
  %s13 = scalar_select 0, %s12, %s10
  %14 = sst [smem:[#allocation2]] %s8
  $region1: #{tpu_custom_call.1} parent=0
    #allocation3 [shape = 'u8[1024]{0}', space=vmem, size = 0x400, scoped, tag = 'output window, operand 0, single buffered']
    #allocation4 [shape = 's32[1]{0}', space=sflag, size = 0x4, scoped, tag = 'scoped memory for tpu_custom_call.1']
    %15 = vsyncpa [#allocation4], 0
    // Predicated region
    $region2: #{tpu_custom_call.1} parent=1 // pred_check
      _
    $region3: #{tpu_custom_call.1} parent=1 // pred_check_branch
      %17 = sbr.rel (0) target = $region5
    $region4: #{tpu_custom_call.1} parent=1 // pred_region
      _
    $region5: #{tpu_custom_call.1} parent=1 // pred_fallthru
      _
    // Predicated region
    $region6: #{tpu_custom_call.1} parent=1 // pred_check
      _
    $region7: #{tpu_custom_call.1} parent=1 // pred_check_branch
      %19 = sbr.rel (0) target = $region9
    $region8: #{tpu_custom_call.1} parent=1 // pred_region
      _
    $region9: #{tpu_custom_call.1} parent=1 // pred_fallthru
      _
    // Predicated region
    $region10: #{tpu_custom_call.1} parent=1 // pred_check
      _
    $region11: #{tpu_custom_call.1} parent=1 // pred_check_branch
      %21 = sbr.rel (0) target = $region13
    $region12: #{tpu_custom_call.1} parent=1 // pred_region
      _
    $region13: #{tpu_custom_call.1} parent=1 // pred_fallthru
      _
    // Predicated region
    $region14: #{tpu_custom_call.1} parent=1 // pred_check
      _
    $region15: #{tpu_custom_call.1} parent=1 // pred_check_branch
      %23 = sbr.rel (0) target = $region17
    $region16: #{tpu_custom_call.1} parent=1 // pred_region
      _
    $region17: #{tpu_custom_call.1} parent=1 // pred_fallthru
      _
    // Predicated region
    $region18: #{tpu_custom_call.1} parent=1 // pred_check
      _
    $region19: #{tpu_custom_call.1} parent=1 // pred_check_branch
      %25 = sbr.rel (0) target = $region21
    $region20: #{tpu_custom_call.1} parent=1 // pred_region
      _
    $region21: #{tpu_custom_call.1} parent=1 // pred_fallthru
      _
    // Predicated region
    $region22: #{tpu_custom_call.1} parent=1 // pred_check
      _
    $region23: #{tpu_custom_call.1} parent=1 // pred_check_branch
      %27 = sbr.rel (0) target = $region25
    $region24: #{tpu_custom_call.1} parent=1 // pred_region
      _
    $region25: #{tpu_custom_call.1} parent=1 // pred_fallthru
      _
    // Predicated region
    $region26: #{tpu_custom_call.1} parent=1 // pred_check
      _
    $region27: #{tpu_custom_call.1} parent=1 // pred_check_branch
      %29 = sbr.rel (0) target = $region29
    $region28: #{tpu_custom_call.1} parent=1 // pred_region
      _
    $region29: #{tpu_custom_call.1} parent=1 // pred_fallthru
      _
    // Predicated region
    $region30: #{tpu_custom_call.1} parent=1 // pred_check
      _
    $region31: #{tpu_custom_call.1} parent=1 // pred_check_branch
      %31 = sbr.rel (0) target = $region33
    $region32: #{tpu_custom_call.1} parent=1 // pred_region
      _
    $region33: #{tpu_custom_call.1} parent=1 // pred_fallthru
      _
    // Predicated region
    $region34: #{tpu_custom_call.1} parent=1 // pred_check
      _
    $region35: #{tpu_custom_call.1} parent=1 // pred_check_branch
      %33 = sbr.rel (0) target = $region37
    $region36: #{tpu_custom_call.1} parent=1 // pred_region
      _
    $region37: #{tpu_custom_call.1} parent=1 // pred_fallthru
      _
    %v34 = vld [vmem:[%s0] sm:$0xff]
    %v35 = vld [vmem:[%s0 + $0x8] sm:$0xff]
    %v36 = vld [vmem:[%s0 + $0x10] sm:$0xff]
    %v37 = vld [vmem:[%s0 + $0x18] sm:$0xff]
    %v38 = vld [vmem:[%s0 + $0x20] sm:$0xff]
    %v39 = vld [vmem:[%s0 + $0x28] sm:$0xff]
    %v40 = vld [vmem:[%s0 + $0x30] sm:$0xff]
    %v41 = vld [vmem:[%s0 + $0x38] sm:$0xff]
    %v42 = vld [vmem:[%s0 + $0x40] sm:$0xff]
    %v43 = vld [vmem:[%s0 + $0x48] sm:$0xff]
    %v44 = vld [vmem:[%s0 + $0x50] sm:$0xff]
    %v45 = vld [vmem:[%s0 + $0x58] sm:$0xff]
    %v46 = vld [vmem:[%s0 + $0x60] sm:$0xff]
    %v47 = vld [vmem:[%s0 + $0x68] sm:$0xff]
    %v48 = vld [vmem:[%s0 + $0x70] sm:$0xff]
    %v49 = vld [vmem:[%s0 + $0x78] sm:$0xff]
    %v50 = vld [vmem:[%s0 + $0x80] sm:$0xff]
    %v51 = vld [vmem:[%s0 + $0x88] sm:$0xff]
    %v52 = vld [vmem:[%s0 + $0x90] sm:$0xff]
    %v53 = vld [vmem:[%s0 + $0x98] sm:$0xff]
    %v54 = vld [vmem:[%s0 + $0xa0] sm:$0xff]
    %v55 = vld [vmem:[%s0 + $0xa8] sm:$0xff]
    %v56 = vld [vmem:[%s0 + $0xb0] sm:$0xff]
    %v57 = vld [vmem:[%s0 + $0xb8] sm:$0xff]
    %v58 = vld [vmem:[%s0 + $0xc0] sm:$0xff]
    %v59 = vld [vmem:[%s0 + $0xc8] sm:$0xff]
    %v60 = vld [vmem:[%s0 + $0xd0] sm:$0xff]
    %v61 = vld [vmem:[%s0 + $0xd8] sm:$0xff]
    %v62 = vld [vmem:[%s0 + $0xe0] sm:$0xff]
    %v63 = vld [vmem:[%s0 + $0xe8] sm:$0xff]
    %v64 = vld [vmem:[%s0 + $0xf0] sm:$0xff]
    %v65 = vld [vmem:[%s0 + $0xf8] sm:$0xff]
    %v66 = vld [vmem:[%s1] sm:$0xff]
    %v67 = vld [vmem:[%s2] sm:$0x1]
    %v69 = vlaneseq
    %v70 = vshrl.u32 %v69, 7
    %v71 = vsub.s32 0, %v70
    %v72 = vrot.slane %v67, %v71
    %vm74 = vcmask 64512
    %v76 = vsel %vm74, %v34, 0
    %v79 = vsel %vm74, %v35, 0
    %v82 = vsel %vm74, %v36, 0
    %v85 = vsel %vm74, %v37, 0
    %v88 = vsel %vm74, %v38, 0
    %v91 = vsel %vm74, %v39, 0
    %v94 = vsel %vm74, %v40, 0
    %v97 = vsel %vm74, %v41, 0
    %v100 = vsel %vm74, %v42, 0
    %v103 = vsel %vm74, %v43, 0
    %v106 = vsel %vm74, %v44, 0
    %v109 = vsel %vm74, %v45, 0
    %v112 = vsel %vm74, %v46, 0
    %v115 = vsel %vm74, %v47, 0
    %v118 = vsel %vm74, %v48, 0
    %v121 = vsel %vm74, %v49, 0
    %v124 = vsel %vm74, %v50, 0
    %v127 = vsel %vm74, %v51, 0
    %v130 = vsel %vm74, %v52, 0
    %v133 = vsel %vm74, %v53, 0
    %v136 = vsel %vm74, %v54, 0
    %v139 = vsel %vm74, %v55, 0
    %v142 = vsel %vm74, %v56, 0
    %v145 = vsel %vm74, %v57, 0
    %v148 = vsel %vm74, %v58, 0
    %v151 = vsel %vm74, %v59, 0
    %v154 = vsel %vm74, %v60, 0
    %v157 = vsel %vm74, %v61, 0
    %v160 = vsel %vm74, %v62, 0
    %v163 = vsel %vm74, %v63, 0
    %v166 = vsel %vm74, %v64, 0
    %v169 = vsel %vm74, %v65, 0
    %171 = vmatprep.subr.mxu0 0.0
    %172 = vmatpush1.msra.mxu0 %v66
    %173 = vmatprep.subr.mxu0 0.0
    %174 = vmatpush1.msra.mxu0 0.0
    %175 = vmatprep.subr.mxu0 0.0
    %176 = vmatpush1.msra.mxu0 0.0
    %177 = vmatprep.subr.mxu0 0.0
    %178 = vmatpush1.msra.mxu0 0.0
    %179 = vmatprep.subr.mxu0 0.0
    %180 = vmatpush1.msra.mxu0 0.0
    %181 = vmatprep.subr.mxu0 0.0
    %182 = vmatpush1.msra.mxu0 0.0
    %183 = vmatprep.subr.mxu0 0.0
    %184 = vmatpush1.msra.mxu0 0.0
    %185 = vmatprep.subr.mxu0 0.0
    %186 = vmatpush1.msra.mxu0 0.0
    %187 = vmatprep.subr.mxu0 0.0
    %188 = vmatpush1.msra.mxu0 0.0
    %189 = vmatprep.subr.mxu0 0.0
    %190 = vmatpush1.msra.mxu0 0.0
    %191 = vmatprep.subr.mxu0 0.0
    %192 = vmatpush1.msra.mxu0 0.0
    %193 = vmatprep.subr.mxu0 0.0
    %194 = vmatpush1.msra.mxu0 0.0
    %195 = vmatprep.subr.mxu0 0.0
    %196 = vmatpush1.msra.mxu0 0.0
    %197 = vmatprep.subr.mxu0 0.0
    %198 = vmatpush1.msra.mxu0 0.0
    %199 = vmatprep.subr.mxu0 0.0
    %200 = vmatpush1.msra.mxu0 0.0
    %201 = vmatprep.subr.mxu0 0.0
    %202 = vmatpush1.msra.mxu0 0.0
    %203 = vmatprep.subr.mxu0 0.0
    %204 = vmatpush1.msra.mxu0 0.0
    %205 = vmatprep.subr.mxu0 0.0
    %206 = vmatpush1.msra.mxu0 0.0
    %207 = vmatprep.subr.mxu0 0.0
    %208 = vmatpush1.msra.mxu0 0.0
    %209 = vmatprep.subr.mxu0 0.0
    %210 = vmatpush1.msra.mxu0 0.0
    %211 = vmatprep.subr.mxu0 0.0
    %212 = vmatpush1.msra.mxu0 0.0
    %213 = vmatprep.subr.mxu0 0.0
    %214 = vmatpush1.msra.mxu0 0.0
    %215 = vmatprep.subr.mxu0 0.0
    %216 = vmatpush1.msra.mxu0 0.0
    %217 = vmatprep.subr.mxu0 0.0
    %218 = vmatpush1.msra.mxu0 0.0
    %219 = vmatprep.subr.mxu0 0.0
    %220 = vmatpush1.msra.mxu0 0.0
    %221 = vmatprep.subr.mxu0 0.0
    %222 = vmatpush1.msra.mxu0 0.0
    %223 = vmatprep.subr.mxu0 0.0
    %224 = vmatpush1.msra.mxu0 0.0
    %225 = vmatprep.subr.mxu0 0.0
    %226 = vmatpush1.msra.mxu0 0.0
    %227 = vmatprep.subr.mxu0 0.0
    %228 = vmatpush1.msra.mxu0 0.0
    %229 = vmatprep.subr.mxu0 0.0
    %230 = vmatpush1.msra.mxu0 0.0
    %231 = vmatprep.subr.mxu0 0.0
    %232 = vmatpush1.msra.mxu0 0.0
    %233 = vmatprep.subr.mxu0 0.0
    %234 = vmatpush1.msra.mxu0 0.0
    %235 = vmatprep.mubr.f32.mxu0 0.0
    %236 = vmatmul.mubr.f32.gmra.mrb[0].mxu0 %v76
    %v237 = vpop.f32.mrb[0].mxu0
    %v238 = vadd.f32 %v72, %v237
    %v239 = vpop.f32.mrb[0].mxu0
    %240 = vmatprep.mubr.f32.mxu0 0.0
    %241 = vmatmul.mubr.f32.gmra.mrb[0].mxu0 %v79
    %v242 = vpop.f32.mrb[0].mxu0
    %v243 = vadd.f32 %v72, %v242
    %v244 = vpop.f32.mrb[0].mxu0
    %245 = vmatprep.mubr.f32.mxu0 0.0
    %246 = vmatmul.mubr.f32.gmra.mrb[0].mxu0 %v82
    %v247 = vpop.f32.mrb[0].mxu0
    %v248 = vadd.f32 %v72, %v247
    %v249 = vpop.f32.mrb[0].mxu0
    %250 = vmatprep.mubr.f32.mxu0 0.0
    %251 = vmatmul.mubr.f32.gmra.mrb[0].mxu0 %v85
    %v252 = vpop.f32.mrb[0].mxu0
    %v253 = vadd.f32 %v72, %v252
    %v254 = vpop.f32.mrb[0].mxu0
    %255 = vmatprep.mubr.f32.mxu0 0.0
    %256 = vmatmul.mubr.f32.gmra.mrb[0].mxu0 %v88
    %v257 = vpop.f32.mrb[0].mxu0
    %v258 = vadd.f32 %v72, %v257
    %v259 = vpop.f32.mrb[0].mxu0
    %260 = vmatprep.mubr.f32.mxu0 0.0
    %261 = vmatmul.mubr.f32.gmra.mrb[0].mxu0 %v91
    %v262 = vpop.f32.mrb[0].mxu0
    %v263 = vadd.f32 %v72, %v262
    %v264 = vpop.f32.mrb[0].mxu0
    %265 = vmatprep.mubr.f32.mxu0 0.0
    %266 = vmatmul.mubr.f32.gmra.mrb[0].mxu0 %v94
    %v267 = vpop.f32.mrb[0].mxu0
    %v268 = vadd.f32 %v72, %v267
    %v269 = vpop.f32.mrb[0].mxu0
    %270 = vmatprep.mubr.f32.mxu0 0.0
    %271 = vmatmul.mubr.f32.gmra.mrb[0].mxu0 %v97
    %v272 = vpop.f32.mrb[0].mxu0
    %v273 = vadd.f32 %v72, %v272
    %v274 = vpop.f32.mrb[0].mxu0
    %275 = vmatprep.mubr.f32.mxu0 0.0
    %276 = vmatmul.mubr.f32.gmra.mrb[0].mxu0 %v100
    %v277 = vpop.f32.mrb[0].mxu0
    %v278 = vadd.f32 %v72, %v277
    %v279 = vpop.f32.mrb[0].mxu0
    %280 = vmatprep.mubr.f32.mxu0 0.0
    %281 = vmatmul.mubr.f32.gmra.mrb[0].mxu0 %v103
    %v282 = vpop.f32.mrb[0].mxu0
    %v283 = vadd.f32 %v72, %v282
    %v284 = vpop.f32.mrb[0].mxu0
    %285 = vmatprep.mubr.f32.mxu0 0.0
    %286 = vmatmul.mubr.f32.gmra.mrb[0].mxu0 %v106
    %v287 = vpop.f32.mrb[0].mxu0
    %v288 = vadd.f32 %v72, %v287
    %v289 = vpop.f32.mrb[0].mxu0
    %290 = vmatprep.mubr.f32.mxu0 0.0
    %291 = vmatmul.mubr.f32.gmra.mrb[0].mxu0 %v109
    %v292 = vpop.f32.mrb[0].mxu0
    %v293 = vadd.f32 %v72, %v292
    %v294 = vpop.f32.mrb[0].mxu0
    %295 = vmatprep.mubr.f32.mxu0 0.0
    %296 = vmatmul.mubr.f32.gmra.mrb[0].mxu0 %v112
    %v297 = vpop.f32.mrb[0].mxu0
    %v298 = vadd.f32 %v72, %v297
    %v299 = vpop.f32.mrb[0].mxu0
    %300 = vmatprep.mubr.f32.mxu0 0.0
    %301 = vmatmul.mubr.f32.gmra.mrb[0].mxu0 %v115
    %v302 = vpop.f32.mrb[0].mxu0
    %v303 = vadd.f32 %v72, %v302
    %v304 = vpop.f32.mrb[0].mxu0
    %305 = vmatprep.mubr.f32.mxu0 0.0
    %306 = vmatmul.mubr.f32.gmra.mrb[0].mxu0 %v118
    %v307 = vpop.f32.mrb[0].mxu0
    %v308 = vadd.f32 %v72, %v307
    %v309 = vpop.f32.mrb[0].mxu0
    %310 = vmatprep.mubr.f32.mxu0 0.0
    %311 = vmatmul.mubr.f32.gmra.mrb[0].mxu0 %v121
    %v312 = vpop.f32.mrb[0].mxu0
    %v313 = vadd.f32 %v72, %v312
    %v314 = vpop.f32.mrb[0].mxu0
    %315 = vmatprep.mubr.f32.mxu0 0.0
    %316 = vmatmul.mubr.f32.gmra.mrb[0].mxu0 %v124
    %v317 = vpop.f32.mrb[0].mxu0
    %v318 = vadd.f32 %v72, %v317
    %v319 = vpop.f32.mrb[0].mxu0
    %320 = vmatprep.mubr.f32.mxu0 0.0
    %321 = vmatmul.mubr.f32.gmra.mrb[0].mxu0 %v127
    %v322 = vpop.f32.mrb[0].mxu0
    %v323 = vadd.f32 %v72, %v322
    %v324 = vpop.f32.mrb[0].mxu0
    %325 = vmatprep.mubr.f32.mxu0 0.0
    %326 = vmatmul.mubr.f32.gmra.mrb[0].mxu0 %v130
    %v327 = vpop.f32.mrb[0].mxu0
    %v328 = vadd.f32 %v72, %v327
    %v329 = vpop.f32.mrb[0].mxu0
    %330 = vmatprep.mubr.f32.mxu0 0.0
    %331 = vmatmul.mubr.f32.gmra.mrb[0].mxu0 %v133
    %v332 = vpop.f32.mrb[0].mxu0
    %v333 = vadd.f32 %v72, %v332
    %v334 = vpop.f32.mrb[0].mxu0
    %335 = vmatprep.mubr.f32.mxu0 0.0
    %336 = vmatmul.mubr.f32.gmra.mrb[0].mxu0 %v136
    %v337 = vpop.f32.mrb[0].mxu0
    %v338 = vadd.f32 %v72, %v337
    %v339 = vpop.f32.mrb[0].mxu0
    %340 = vmatprep.mubr.f32.mxu0 0.0
    %341 = vmatmul.mubr.f32.gmra.mrb[0].mxu0 %v139
    %v342 = vpop.f32.mrb[0].mxu0
    %v343 = vadd.f32 %v72, %v342
    %v344 = vpop.f32.mrb[0].mxu0
    %345 = vmatprep.mubr.f32.mxu0 0.0
    %346 = vmatmul.mubr.f32.gmra.mrb[0].mxu0 %v142
    %v347 = vpop.f32.mrb[0].mxu0
    %v348 = vadd.f32 %v72, %v347
    %v349 = vpop.f32.mrb[0].mxu0
    %350 = vmatprep.mubr.f32.mxu0 0.0
    %351 = vmatmul.mubr.f32.gmra.mrb[0].mxu0 %v145
    %v352 = vpop.f32.mrb[0].mxu0
    %v353 = vadd.f32 %v72, %v352
    %v354 = vpop.f32.mrb[0].mxu0
    %355 = vmatprep.mubr.f32.mxu0 0.0
    %356 = vmatmul.mubr.f32.gmra.mrb[0].mxu0 %v148
    %v357 = vpop.f32.mrb[0].mxu0
    %v358 = vadd.f32 %v72, %v357
    %v359 = vpop.f32.mrb[0].mxu0
    %360 = vmatprep.mubr.f32.mxu0 0.0
    %361 = vmatmul.mubr.f32.gmra.mrb[0].mxu0 %v151
    %v362 = vpop.f32.mrb[0].mxu0
    %v363 = vadd.f32 %v72, %v362
    %v364 = vpop.f32.mrb[0].mxu0
    %365 = vmatprep.mubr.f32.mxu0 0.0
    %366 = vmatmul.mubr.f32.gmra.mrb[0].mxu0 %v154
    %v367 = vpop.f32.mrb[0].mxu0
    %v368 = vadd.f32 %v72, %v367
    %v369 = vpop.f32.mrb[0].mxu0
    %370 = vmatprep.mubr.f32.mxu0 0.0
    %371 = vmatmul.mubr.f32.gmra.mrb[0].mxu0 %v157
    %v372 = vpop.f32.mrb[0].mxu0
    %v373 = vadd.f32 %v72, %v372
    %v374 = vpop.f32.mrb[0].mxu0
    %375 = vmatprep.mubr.f32.mxu0 0.0
    %376 = vmatmul.mubr.f32.gmra.mrb[0].mxu0 %v160
    %v377 = vpop.f32.mrb[0].mxu0
    %v378 = vadd.f32 %v72, %v377
    %v379 = vpop.f32.mrb[0].mxu0
    %380 = vmatprep.mubr.f32.mxu0 0.0
    %381 = vmatmul.mubr.f32.gmra.mrb[0].mxu0 %v163
    %v382 = vpop.f32.mrb[0].mxu0
    %v383 = vadd.f32 %v72, %v382
    %v384 = vpop.f32.mrb[0].mxu0
    %385 = vmatprep.mubr.f32.mxu0 0.0
    %386 = vmatmul.mubr.f32.gmra.mrb[0].mxu0 %v166
    %v387 = vpop.f32.mrb[0].mxu0
    %v388 = vadd.f32 %v72, %v387
    %v389 = vpop.f32.mrb[0].mxu0
    %390 = vmatprep.mubr.f32.mxu0 0.0
    %391 = vmatmul.mubr.f32.gmra.mrb[0].mxu0 %v169
    %v392 = vpop.f32.mrb[0].mxu0
    %v393 = vadd.f32 %v72, %v392
    %v394 = vpop.f32.mrb[0].mxu0
    %395 = vdwg.mxu0
    %v396 = vmax.f32 %v238, 0.0
    %v397 = vmax.f32 %v243, 0.0
    %v398 = vmax.f32 %v248, 0.0
    %v399 = vmax.f32 %v253, 0.0
    %v400 = vmax.f32 %v258, 0.0
    %v401 = vmax.f32 %v263, 0.0
    %v402 = vmax.f32 %v268, 0.0
    %v403 = vmax.f32 %v273, 0.0
    %v404 = vmax.f32 %v278, 0.0
    %v405 = vmax.f32 %v283, 0.0
    %v406 = vmax.f32 %v288, 0.0
    %v407 = vmax.f32 %v293, 0.0
    %v408 = vmax.f32 %v298, 0.0
    %v409 = vmax.f32 %v303, 0.0
    %v410 = vmax.f32 %v308, 0.0
    %v411 = vmax.f32 %v313, 0.0
    %v412 = vmax.f32 %v318, 0.0
    %v413 = vmax.f32 %v323, 0.0
    %v414 = vmax.f32 %v328, 0.0
    %v415 = vmax.f32 %v333, 0.0
    %v416 = vmax.f32 %v338, 0.0
    %v417 = vmax.f32 %v343, 0.0
    %v418 = vmax.f32 %v348, 0.0
    %v419 = vmax.f32 %v353, 0.0
    %v420 = vmax.f32 %v358, 0.0
    %v421 = vmax.f32 %v363, 0.0
    %v422 = vmax.f32 %v368, 0.0
    %v423 = vmax.f32 %v373, 0.0
    %v424 = vmax.f32 %v378, 0.0
    %v425 = vmax.f32 %v383, 0.0
    %v426 = vmax.f32 %v388, 0.0
    %v427 = vmax.f32 %v393, 0.0
    %v428 = vld [vmem:[%s3] sm:$0xff]
    %v429 = vld [vmem:[%s3 + $0x8] sm:$0xff]
    %v430 = vld [vmem:[%s3 + $0x10] sm:$0xff]
    %v431 = vld [vmem:[%s3 + $0x18] sm:$0xff]
    %v432 = vld [vmem:[%s3 + $0x20] sm:$0xff]
    %v433 = vld [vmem:[%s3 + $0x28] sm:$0xff]
    %v434 = vld [vmem:[%s3 + $0x30] sm:$0xff]
    %v435 = vld [vmem:[%s3 + $0x38] sm:$0xff]
    %v436 = vld [vmem:[%s3 + $0x40] sm:$0xff]
    %v437 = vld [vmem:[%s3 + $0x48] sm:$0xff]
    %v438 = vld [vmem:[%s3 + $0x50] sm:$0xff]
    %v439 = vld [vmem:[%s3 + $0x58] sm:$0xff]
    %v440 = vld [vmem:[%s3 + $0x60] sm:$0xff]
    %v441 = vld [vmem:[%s3 + $0x68] sm:$0xff]
    %v442 = vld [vmem:[%s3 + $0x70] sm:$0xff]
    %v443 = vld [vmem:[%s3 + $0x78] sm:$0xff]
    %v444 = vld [vmem:[%s4] sm:$0x1]
    %v446 = vlaneseq
    %v447 = vshrl.u32 %v446, 7
    %v448 = vsub.s32 0, %v447
    %v449 = vrot.slane %v444, %v448
    %451 = vmatprep.subr.mxu0 0.0
    %452 = vmatpush1.msra.mxu0 %v428
    %453 = vmatprep.subr.mxu0 0.0
    %454 = vmatpush1.msra.mxu0 %v429
    %455 = vmatprep.subr.mxu0 0.0
    %456 = vmatpush1.msra.mxu0 %v430
    %457 = vmatprep.subr.mxu0 0.0
    %458 = vmatpush1.msra.mxu0 %v431
    %459 = vmatprep.subr.mxu0 0.0
    %460 = vmatpush1.msra.mxu0 %v432
    %461 = vmatprep.subr.mxu0 0.0
    %462 = vmatpush1.msra.mxu0 %v433
    %463 = vmatprep.subr.mxu0 0.0
    %464 = vmatpush1.msra.mxu0 %v434
    %465 = vmatprep.subr.mxu0 0.0
    %466 = vmatpush1.msra.mxu0 %v435
    %467 = vmatprep.subr.mxu0 0.0
    %468 = vmatpush1.msra.mxu0 %v436
    %469 = vmatprep.subr.mxu0 0.0
    %470 = vmatpush1.msra.mxu0 %v437
    %471 = vmatprep.subr.mxu0 0.0
    %472 = vmatpush1.msra.mxu0 %v438
    %473 = vmatprep.subr.mxu0 0.0
    %474 = vmatpush1.msra.mxu0 %v439
    %475 = vmatprep.subr.mxu0 0.0
    %476 = vmatpush1.msra.mxu0 %v440
    %477 = vmatprep.subr.mxu0 0.0
    %478 = vmatpush1.msra.mxu0 %v441
    %479 = vmatprep.subr.mxu0 0.0
    %480 = vmatpush1.msra.mxu0 %v442
    %481 = vmatprep.subr.mxu0 0.0
    %482 = vmatpush1.msra.mxu0 %v443
    %483 = vmatprep.subr.mxu0 0.0
    %484 = vmatpush1.msra.mxu0 0.0
    %485 = vmatprep.subr.mxu0 0.0
    %486 = vmatpush1.msra.mxu0 0.0
    %487 = vmatprep.subr.mxu0 0.0
    %488 = vmatpush1.msra.mxu0 0.0
    %489 = vmatprep.subr.mxu0 0.0
    %490 = vmatpush1.msra.mxu0 0.0
    %491 = vmatprep.subr.mxu0 0.0
    %492 = vmatpush1.msra.mxu0 0.0
    %493 = vmatprep.subr.mxu0 0.0
    %494 = vmatpush1.msra.mxu0 0.0
    %495 = vmatprep.subr.mxu0 0.0
    %496 = vmatpush1.msra.mxu0 0.0
    %497 = vmatprep.subr.mxu0 0.0
    %498 = vmatpush1.msra.mxu0 0.0
    %499 = vmatprep.subr.mxu0 0.0
    %500 = vmatpush1.msra.mxu0 0.0
    %501 = vmatprep.subr.mxu0 0.0
    %502 = vmatpush1.msra.mxu0 0.0
    %503 = vmatprep.subr.mxu0 0.0
    %504 = vmatpush1.msra.mxu0 0.0
    %505 = vmatprep.subr.mxu0 0.0
    %506 = vmatpush1.msra.mxu0 0.0
    %507 = vmatprep.subr.mxu0 0.0
    %508 = vmatpush1.msra.mxu0 0.0
    %509 = vmatprep.subr.mxu0 0.0
    %510 = vmatpush1.msra.mxu0 0.0
    %511 = vmatprep.subr.mxu0 0.0
    %512 = vmatpush1.msra.mxu0 0.0
    %513 = vmatprep.subr.mxu0 0.0
    %514 = vmatpush1.msra.mxu0 0.0
    %515 = vmatprep.mubr.f32.mxu0 0.0
    %516 = vmatmul.mubr.f32.gmra.mrb[0].mxu0 %v396
    %v517 = vpop.f32.mrb[0].mxu0
    %v518 = vadd.f32 %v449, %v517
    %v519 = vpop.f32.mrb[0].mxu0
    %520 = vmatprep.mubr.f32.mxu0 0.0
    %521 = vmatmul.mubr.f32.gmra.mrb[0].mxu0 %v397
    %v522 = vpop.f32.mrb[0].mxu0
    %v523 = vadd.f32 %v449, %v522
    %v524 = vpop.f32.mrb[0].mxu0
    %525 = vmatprep.mubr.f32.mxu0 0.0
    %526 = vmatmul.mubr.f32.gmra.mrb[0].mxu0 %v398
    %v527 = vpop.f32.mrb[0].mxu0
    %v528 = vadd.f32 %v449, %v527
    %v529 = vpop.f32.mrb[0].mxu0
    %530 = vmatprep.mubr.f32.mxu0 0.0
    %531 = vmatmul.mubr.f32.gmra.mrb[0].mxu0 %v399
    %v532 = vpop.f32.mrb[0].mxu0
    %v533 = vadd.f32 %v449, %v532
    %v534 = vpop.f32.mrb[0].mxu0
    %535 = vmatprep.mubr.f32.mxu0 0.0
    %536 = vmatmul.mubr.f32.gmra.mrb[0].mxu0 %v400
    %v537 = vpop.f32.mrb[0].mxu0
    %v538 = vadd.f32 %v449, %v537
    %v539 = vpop.f32.mrb[0].mxu0
    %540 = vmatprep.mubr.f32.mxu0 0.0
    %541 = vmatmul.mubr.f32.gmra.mrb[0].mxu0 %v401
    %v542 = vpop.f32.mrb[0].mxu0
    %v543 = vadd.f32 %v449, %v542
    %v544 = vpop.f32.mrb[0].mxu0
    %545 = vmatprep.mubr.f32.mxu0 0.0
    %546 = vmatmul.mubr.f32.gmra.mrb[0].mxu0 %v402
    %v547 = vpop.f32.mrb[0].mxu0
    %v548 = vadd.f32 %v449, %v547
    %v549 = vpop.f32.mrb[0].mxu0
    %550 = vmatprep.mubr.f32.mxu0 0.0
    %551 = vmatmul.mubr.f32.gmra.mrb[0].mxu0 %v403
    %v552 = vpop.f32.mrb[0].mxu0
    %v553 = vadd.f32 %v449, %v552
    %v554 = vpop.f32.mrb[0].mxu0
    %555 = vmatprep.mubr.f32.mxu0 0.0
    %556 = vmatmul.mubr.f32.gmra.mrb[0].mxu0 %v404
    %v557 = vpop.f32.mrb[0].mxu0
    %v558 = vadd.f32 %v449, %v557
    %v559 = vpop.f32.mrb[0].mxu0
    %560 = vmatprep.mubr.f32.mxu0 0.0
    %561 = vmatmul.mubr.f32.gmra.mrb[0].mxu0 %v405
    %v562 = vpop.f32.mrb[0].mxu0
    %v563 = vadd.f32 %v449, %v562
    %v564 = vpop.f32.mrb[0].mxu0
    %565 = vmatprep.mubr.f32.mxu0 0.0
    %566 = vmatmul.mubr.f32.gmra.mrb[0].mxu0 %v406
    %v567 = vpop.f32.mrb[0].mxu0
    %v568 = vadd.f32 %v449, %v567
    %v569 = vpop.f32.mrb[0].mxu0
    %570 = vmatprep.mubr.f32.mxu0 0.0
    %571 = vmatmul.mubr.f32.gmra.mrb[0].mxu0 %v407
    %v572 = vpop.f32.mrb[0].mxu0
    %v573 = vadd.f32 %v449, %v572
    %v574 = vpop.f32.mrb[0].mxu0
    %575 = vmatprep.mubr.f32.mxu0 0.0
    %576 = vmatmul.mubr.f32.gmra.mrb[0].mxu0 %v408
    %v577 = vpop.f32.mrb[0].mxu0
    %v578 = vadd.f32 %v449, %v577
    %v579 = vpop.f32.mrb[0].mxu0
    %580 = vmatprep.mubr.f32.mxu0 0.0
    %581 = vmatmul.mubr.f32.gmra.mrb[0].mxu0 %v409
    %v582 = vpop.f32.mrb[0].mxu0
    %v583 = vadd.f32 %v449, %v582
    %v584 = vpop.f32.mrb[0].mxu0
    %585 = vmatprep.mubr.f32.mxu0 0.0
    %586 = vmatmul.mubr.f32.gmra.mrb[0].mxu0 %v410
    %v587 = vpop.f32.mrb[0].mxu0
    %v588 = vadd.f32 %v449, %v587
    %v589 = vpop.f32.mrb[0].mxu0
    %590 = vmatprep.mubr.f32.mxu0 0.0
    %591 = vmatmul.mubr.f32.gmra.mrb[0].mxu0 %v411
    %v592 = vpop.f32.mrb[0].mxu0
    %v593 = vadd.f32 %v449, %v592
    %v594 = vpop.f32.mrb[0].mxu0
    %595 = vmatprep.mubr.f32.mxu0 0.0
    %596 = vmatmul.mubr.f32.gmra.mrb[0].mxu0 %v412
    %v597 = vpop.f32.mrb[0].mxu0
    %v598 = vadd.f32 %v449, %v597
    %v599 = vpop.f32.mrb[0].mxu0
    %600 = vmatprep.mubr.f32.mxu0 0.0
    %601 = vmatmul.mubr.f32.gmra.mrb[0].mxu0 %v413
    %v602 = vpop.f32.mrb[0].mxu0
    %v603 = vadd.f32 %v449, %v602
    %v604 = vpop.f32.mrb[0].mxu0
    %605 = vmatprep.mubr.f32.mxu0 0.0
    %606 = vmatmul.mubr.f32.gmra.mrb[0].mxu0 %v414
    %v607 = vpop.f32.mrb[0].mxu0
    %v608 = vadd.f32 %v449, %v607
    %v609 = vpop.f32.mrb[0].mxu0
    %610 = vmatprep.mubr.f32.mxu0 0.0
    %611 = vmatmul.mubr.f32.gmra.mrb[0].mxu0 %v415
    %v612 = vpop.f32.mrb[0].mxu0
    %v613 = vadd.f32 %v449, %v612
    %v614 = vpop.f32.mrb[0].mxu0
    %615 = vmatprep.mubr.f32.mxu0 0.0
    %616 = vmatmul.mubr.f32.gmra.mrb[0].mxu0 %v416
    %v617 = vpop.f32.mrb[0].mxu0
    %v618 = vadd.f32 %v449, %v617
    %v619 = vpop.f32.mrb[0].mxu0
    %620 = vmatprep.mubr.f32.mxu0 0.0
    %621 = vmatmul.mubr.f32.gmra.mrb[0].mxu0 %v417
    %v622 = vpop.f32.mrb[0].mxu0
    %v623 = vadd.f32 %v449, %v622
    %v624 = vpop.f32.mrb[0].mxu0
    %625 = vmatprep.mubr.f32.mxu0 0.0
    %626 = vmatmul.mubr.f32.gmra.mrb[0].mxu0 %v418
    %v627 = vpop.f32.mrb[0].mxu0
    %v628 = vadd.f32 %v449, %v627
    %v629 = vpop.f32.mrb[0].mxu0
    %630 = vmatprep.mubr.f32.mxu0 0.0
    %631 = vmatmul.mubr.f32.gmra.mrb[0].mxu0 %v419
    %v632 = vpop.f32.mrb[0].mxu0
    %v633 = vadd.f32 %v449, %v632
    %v634 = vpop.f32.mrb[0].mxu0
    %635 = vmatprep.mubr.f32.mxu0 0.0
    %636 = vmatmul.mubr.f32.gmra.mrb[0].mxu0 %v420
    %v637 = vpop.f32.mrb[0].mxu0
    %v638 = vadd.f32 %v449, %v637
    %v639 = vpop.f32.mrb[0].mxu0
    %640 = vmatprep.mubr.f32.mxu0 0.0
    %641 = vmatmul.mubr.f32.gmra.mrb[0].mxu0 %v421
    %v642 = vpop.f32.mrb[0].mxu0
    %v643 = vadd.f32 %v449, %v642
    %v644 = vpop.f32.mrb[0].mxu0
    %645 = vmatprep.mubr.f32.mxu0 0.0
    %646 = vmatmul.mubr.f32.gmra.mrb[0].mxu0 %v422
    %v647 = vpop.f32.mrb[0].mxu0
    %v648 = vadd.f32 %v449, %v647
    %v649 = vpop.f32.mrb[0].mxu0
    %650 = vmatprep.mubr.f32.mxu0 0.0
    %651 = vmatmul.mubr.f32.gmra.mrb[0].mxu0 %v423
    %v652 = vpop.f32.mrb[0].mxu0
    %v653 = vadd.f32 %v449, %v652
    %v654 = vpop.f32.mrb[0].mxu0
    %655 = vmatprep.mubr.f32.mxu0 0.0
    %656 = vmatmul.mubr.f32.gmra.mrb[0].mxu0 %v424
    %v657 = vpop.f32.mrb[0].mxu0
    %v658 = vadd.f32 %v449, %v657
    %v659 = vpop.f32.mrb[0].mxu0
    %660 = vmatprep.mubr.f32.mxu0 0.0
    %661 = vmatmul.mubr.f32.gmra.mrb[0].mxu0 %v425
    %v662 = vpop.f32.mrb[0].mxu0
    %v663 = vadd.f32 %v449, %v662
    %v664 = vpop.f32.mrb[0].mxu0
    %665 = vmatprep.mubr.f32.mxu0 0.0
    %666 = vmatmul.mubr.f32.gmra.mrb[0].mxu0 %v426
    %v667 = vpop.f32.mrb[0].mxu0
    %v668 = vadd.f32 %v449, %v667
    %v669 = vpop.f32.mrb[0].mxu0
    %670 = vmatprep.mubr.f32.mxu0 0.0
    %671 = vmatmul.mubr.f32.gmra.mrb[0].mxu0 %v427
    %v672 = vpop.f32.mrb[0].mxu0
    %v673 = vadd.f32 %v449, %v672
    %v674 = vpop.f32.mrb[0].mxu0
    %675 = vdwg.mxu0
    %v676 = vmax.f32 %v518, 0.0
    %v677 = vmax.f32 %v523, 0.0
    %v678 = vmax.f32 %v528, 0.0
    %v679 = vmax.f32 %v533, 0.0
    %v680 = vmax.f32 %v538, 0.0
    %v681 = vmax.f32 %v543, 0.0
    %v682 = vmax.f32 %v548, 0.0
    %v683 = vmax.f32 %v553, 0.0
    %v684 = vmax.f32 %v558, 0.0
    %v685 = vmax.f32 %v563, 0.0
    %v686 = vmax.f32 %v568, 0.0
    %v687 = vmax.f32 %v573, 0.0
    %v688 = vmax.f32 %v578, 0.0
    %v689 = vmax.f32 %v583, 0.0
    %v690 = vmax.f32 %v588, 0.0
    %v691 = vmax.f32 %v593, 0.0
    %v692 = vmax.f32 %v598, 0.0
    %v693 = vmax.f32 %v603, 0.0
    %v694 = vmax.f32 %v608, 0.0
    %v695 = vmax.f32 %v613, 0.0
    %v696 = vmax.f32 %v618, 0.0
    %v697 = vmax.f32 %v623, 0.0
    %v698 = vmax.f32 %v628, 0.0
    %v699 = vmax.f32 %v633, 0.0
    %v700 = vmax.f32 %v638, 0.0
    %v701 = vmax.f32 %v643, 0.0
    %v702 = vmax.f32 %v648, 0.0
    %v703 = vmax.f32 %v653, 0.0
    %v704 = vmax.f32 %v658, 0.0
    %v705 = vmax.f32 %v663, 0.0
    %v706 = vmax.f32 %v668, 0.0
    %v707 = vmax.f32 %v673, 0.0
    %v708 = vld [vmem:[%s5] sm:$0xff]
    %v709 = vld [vmem:[%s5 + $0x8] sm:$0xff]
    %v710 = vld [vmem:[%s5 + $0x10] sm:$0xff]
    %v711 = vld [vmem:[%s5 + $0x18] sm:$0xff]
    %v712 = vld [vmem:[%s5 + $0x20] sm:$0xff]
    %v713 = vld [vmem:[%s5 + $0x28] sm:$0xff]
    %v714 = vld [vmem:[%s5 + $0x30] sm:$0xff]
    %v715 = vld [vmem:[%s5 + $0x38] sm:$0xff]
    %v716 = vld [vmem:[%s5 + $0x40] sm:$0xff]
    %v717 = vld [vmem:[%s5 + $0x48] sm:$0xff]
    %v718 = vld [vmem:[%s5 + $0x50] sm:$0xff]
    %v719 = vld [vmem:[%s5 + $0x58] sm:$0xff]
    %v720 = vld [vmem:[%s5 + $0x60] sm:$0xff]
    %v721 = vld [vmem:[%s5 + $0x68] sm:$0xff]
    %v722 = vld [vmem:[%s5 + $0x70] sm:$0xff]
    %v723 = vld [vmem:[%s5 + $0x78] sm:$0xff]
    %v724 = vld [vmem:[%s6] sm:$0x1]
    %v726 = vlaneseq
    %v727 = vshrl.u32 %v726, 7
    %v728 = vsub.s32 0, %v727
    %v729 = vrot.slane %v724, %v728
    %731 = vmatprep.subr.mxu0 0.0
    %732 = vmatpush1.msra.mxu0 %v708
    %733 = vmatprep.subr.mxu0 0.0
    %734 = vmatpush1.msra.mxu0 %v709
    %735 = vmatprep.subr.mxu0 0.0
    %736 = vmatpush1.msra.mxu0 %v710
    %737 = vmatprep.subr.mxu0 0.0
    %738 = vmatpush1.msra.mxu0 %v711
    %739 = vmatprep.subr.mxu0 0.0
    %740 = vmatpush1.msra.mxu0 %v712
    %741 = vmatprep.subr.mxu0 0.0
    %742 = vmatpush1.msra.mxu0 %v713
    %743 = vmatprep.subr.mxu0 0.0
    %744 = vmatpush1.msra.mxu0 %v714
    %745 = vmatprep.subr.mxu0 0.0
    %746 = vmatpush1.msra.mxu0 %v715
    %747 = vmatprep.subr.mxu0 0.0
    %748 = vmatpush1.msra.mxu0 %v716
    %749 = vmatprep.subr.mxu0 0.0
    %750 = vmatpush1.msra.mxu0 %v717
    %751 = vmatprep.subr.mxu0 0.0
    %752 = vmatpush1.msra.mxu0 %v718
    %753 = vmatprep.subr.mxu0 0.0
    %754 = vmatpush1.msra.mxu0 %v719
    %755 = vmatprep.subr.mxu0 0.0
    %756 = vmatpush1.msra.mxu0 %v720
    %757 = vmatprep.subr.mxu0 0.0
    %758 = vmatpush1.msra.mxu0 %v721
    %759 = vmatprep.subr.mxu0 0.0
    %760 = vmatpush1.msra.mxu0 %v722
    %761 = vmatprep.subr.mxu0 0.0
    %762 = vmatpush1.msra.mxu0 %v723
    %763 = vmatprep.subr.mxu0 0.0
    %764 = vmatpush1.msra.mxu0 0.0
    %765 = vmatprep.subr.mxu0 0.0
    %766 = vmatpush1.msra.mxu0 0.0
    %767 = vmatprep.subr.mxu0 0.0
    %768 = vmatpush1.msra.mxu0 0.0
    %769 = vmatprep.subr.mxu0 0.0
    %770 = vmatpush1.msra.mxu0 0.0
    %771 = vmatprep.subr.mxu0 0.0
    %772 = vmatpush1.msra.mxu0 0.0
    %773 = vmatprep.subr.mxu0 0.0
    %774 = vmatpush1.msra.mxu0 0.0
    %775 = vmatprep.subr.mxu0 0.0
    %776 = vmatpush1.msra.mxu0 0.0
    %777 = vmatprep.subr.mxu0 0.0
    %778 = vmatpush1.msra.mxu0 0.0
    %779 = vmatprep.subr.mxu0 0.0
    %780 = vmatpush1.msra.mxu0 0.0
    %781 = vmatprep.subr.mxu0 0.0
    %782 = vmatpush1.msra.mxu0 0.0
    %783 = vmatprep.subr.mxu0 0.0
    %784 = vmatpush1.msra.mxu0 0.0
    %785 = vmatprep.subr.mxu0 0.0
    %786 = vmatpush1.msra.mxu0 0.0
    %787 = vmatprep.subr.mxu0 0.0
    %788 = vmatpush1.msra.mxu0 0.0
    %789 = vmatprep.subr.mxu0 0.0
    %790 = vmatpush1.msra.mxu0 0.0
    %791 = vmatprep.subr.mxu0 0.0
    %792 = vmatpush1.msra.mxu0 0.0
    %793 = vmatprep.subr.mxu0 0.0
    %794 = vmatpush1.msra.mxu0 0.0
    %795 = vmatprep.mubr.f32.mxu0 0.0
    %796 = vmatmul.mubr.f32.gmra.mrb[0].mxu0 %v676
    %v797 = vpop.f32.mrb[0].mxu0
    %v798 = vadd.f32 %v729, %v797
    %v799 = vpop.f32.mrb[0].mxu0
    %800 = vmatprep.mubr.f32.mxu0 0.0
    %801 = vmatmul.mubr.f32.gmra.mrb[0].mxu0 %v677
    %v802 = vpop.f32.mrb[0].mxu0
    %v803 = vadd.f32 %v729, %v802
    %v804 = vpop.f32.mrb[0].mxu0
    %805 = vmatprep.mubr.f32.mxu0 0.0
    %806 = vmatmul.mubr.f32.gmra.mrb[0].mxu0 %v678
    %v807 = vpop.f32.mrb[0].mxu0
    %v808 = vadd.f32 %v729, %v807
    %v809 = vpop.f32.mrb[0].mxu0
    %810 = vmatprep.mubr.f32.mxu0 0.0
    %811 = vmatmul.mubr.f32.gmra.mrb[0].mxu0 %v679
    %v812 = vpop.f32.mrb[0].mxu0
    %v813 = vadd.f32 %v729, %v812
    %v814 = vpop.f32.mrb[0].mxu0
    %815 = vmatprep.mubr.f32.mxu0 0.0
    %816 = vmatmul.mubr.f32.gmra.mrb[0].mxu0 %v680
    %v817 = vpop.f32.mrb[0].mxu0
    %v818 = vadd.f32 %v729, %v817
    %v819 = vpop.f32.mrb[0].mxu0
    %820 = vmatprep.mubr.f32.mxu0 0.0
    %821 = vmatmul.mubr.f32.gmra.mrb[0].mxu0 %v681
    %v822 = vpop.f32.mrb[0].mxu0
    %v823 = vadd.f32 %v729, %v822
    %v824 = vpop.f32.mrb[0].mxu0
    %825 = vmatprep.mubr.f32.mxu0 0.0
    %826 = vmatmul.mubr.f32.gmra.mrb[0].mxu0 %v682
    %v827 = vpop.f32.mrb[0].mxu0
    %v828 = vadd.f32 %v729, %v827
    %v829 = vpop.f32.mrb[0].mxu0
    %830 = vmatprep.mubr.f32.mxu0 0.0
    %831 = vmatmul.mubr.f32.gmra.mrb[0].mxu0 %v683
    %v832 = vpop.f32.mrb[0].mxu0
    %v833 = vadd.f32 %v729, %v832
    %v834 = vpop.f32.mrb[0].mxu0
    %835 = vmatprep.mubr.f32.mxu0 0.0
    %836 = vmatmul.mubr.f32.gmra.mrb[0].mxu0 %v684
    %v837 = vpop.f32.mrb[0].mxu0
    %v838 = vadd.f32 %v729, %v837
    %v839 = vpop.f32.mrb[0].mxu0
    %840 = vmatprep.mubr.f32.mxu0 0.0
    %841 = vmatmul.mubr.f32.gmra.mrb[0].mxu0 %v685
    %v842 = vpop.f32.mrb[0].mxu0
    %v843 = vadd.f32 %v729, %v842
    %v844 = vpop.f32.mrb[0].mxu0
    %845 = vmatprep.mubr.f32.mxu0 0.0
    %846 = vmatmul.mubr.f32.gmra.mrb[0].mxu0 %v686
    %v847 = vpop.f32.mrb[0].mxu0
    %v848 = vadd.f32 %v729, %v847
    %v849 = vpop.f32.mrb[0].mxu0
    %850 = vmatprep.mubr.f32.mxu0 0.0
    %851 = vmatmul.mubr.f32.gmra.mrb[0].mxu0 %v687
    %v852 = vpop.f32.mrb[0].mxu0
    %v853 = vadd.f32 %v729, %v852
    %v854 = vpop.f32.mrb[0].mxu0
    %855 = vmatprep.mubr.f32.mxu0 0.0
    %856 = vmatmul.mubr.f32.gmra.mrb[0].mxu0 %v688
    %v857 = vpop.f32.mrb[0].mxu0
    %v858 = vadd.f32 %v729, %v857
    %v859 = vpop.f32.mrb[0].mxu0
    %860 = vmatprep.mubr.f32.mxu0 0.0
    %861 = vmatmul.mubr.f32.gmra.mrb[0].mxu0 %v689
    %v862 = vpop.f32.mrb[0].mxu0
    %v863 = vadd.f32 %v729, %v862
    %v864 = vpop.f32.mrb[0].mxu0
    %865 = vmatprep.mubr.f32.mxu0 0.0
    %866 = vmatmul.mubr.f32.gmra.mrb[0].mxu0 %v690
    %v867 = vpop.f32.mrb[0].mxu0
    %v868 = vadd.f32 %v729, %v867
    %v869 = vpop.f32.mrb[0].mxu0
    %870 = vmatprep.mubr.f32.mxu0 0.0
    %871 = vmatmul.mubr.f32.gmra.mrb[0].mxu0 %v691
    %v872 = vpop.f32.mrb[0].mxu0
    %v873 = vadd.f32 %v729, %v872
    %v874 = vpop.f32.mrb[0].mxu0
    %875 = vmatprep.mubr.f32.mxu0 0.0
    %876 = vmatmul.mubr.f32.gmra.mrb[0].mxu0 %v692
    %v877 = vpop.f32.mrb[0].mxu0
    %v878 = vadd.f32 %v729, %v877
    %v879 = vpop.f32.mrb[0].mxu0
    %880 = vmatprep.mubr.f32.mxu0 0.0
    %881 = vmatmul.mubr.f32.gmra.mrb[0].mxu0 %v693
    %v882 = vpop.f32.mrb[0].mxu0
    %v883 = vadd.f32 %v729, %v882
    %v884 = vpop.f32.mrb[0].mxu0
    %885 = vmatprep.mubr.f32.mxu0 0.0
    %886 = vmatmul.mubr.f32.gmra.mrb[0].mxu0 %v694
    %v887 = vpop.f32.mrb[0].mxu0
    %v888 = vadd.f32 %v729, %v887
    %v889 = vpop.f32.mrb[0].mxu0
    %890 = vmatprep.mubr.f32.mxu0 0.0
    %891 = vmatmul.mubr.f32.gmra.mrb[0].mxu0 %v695
    %v892 = vpop.f32.mrb[0].mxu0
    %v893 = vadd.f32 %v729, %v892
    %v894 = vpop.f32.mrb[0].mxu0
    %895 = vmatprep.mubr.f32.mxu0 0.0
    %896 = vmatmul.mubr.f32.gmra.mrb[0].mxu0 %v696
    %v897 = vpop.f32.mrb[0].mxu0
    %v898 = vadd.f32 %v729, %v897
    %v899 = vpop.f32.mrb[0].mxu0
    %900 = vmatprep.mubr.f32.mxu0 0.0
    %901 = vmatmul.mubr.f32.gmra.mrb[0].mxu0 %v697
    %v902 = vpop.f32.mrb[0].mxu0
    %v903 = vadd.f32 %v729, %v902
    %v904 = vpop.f32.mrb[0].mxu0
    %905 = vmatprep.mubr.f32.mxu0 0.0
    %906 = vmatmul.mubr.f32.gmra.mrb[0].mxu0 %v698
    %v907 = vpop.f32.mrb[0].mxu0
    %v908 = vadd.f32 %v729, %v907
    %v909 = vpop.f32.mrb[0].mxu0
    %910 = vmatprep.mubr.f32.mxu0 0.0
    %911 = vmatmul.mubr.f32.gmra.mrb[0].mxu0 %v699
    %v912 = vpop.f32.mrb[0].mxu0
    %v913 = vadd.f32 %v729, %v912
    %v914 = vpop.f32.mrb[0].mxu0
    %915 = vmatprep.mubr.f32.mxu0 0.0
    %916 = vmatmul.mubr.f32.gmra.mrb[0].mxu0 %v700
    %v917 = vpop.f32.mrb[0].mxu0
    %v918 = vadd.f32 %v729, %v917
    %v919 = vpop.f32.mrb[0].mxu0
    %920 = vmatprep.mubr.f32.mxu0 0.0
    %921 = vmatmul.mubr.f32.gmra.mrb[0].mxu0 %v701
    %v922 = vpop.f32.mrb[0].mxu0
    %v923 = vadd.f32 %v729, %v922
    %v924 = vpop.f32.mrb[0].mxu0
    %925 = vmatprep.mubr.f32.mxu0 0.0
    %926 = vmatmul.mubr.f32.gmra.mrb[0].mxu0 %v702
    %v927 = vpop.f32.mrb[0].mxu0
    %v928 = vadd.f32 %v729, %v927
    %v929 = vpop.f32.mrb[0].mxu0
    %930 = vmatprep.mubr.f32.mxu0 0.0
    %931 = vmatmul.mubr.f32.gmra.mrb[0].mxu0 %v703
    %v932 = vpop.f32.mrb[0].mxu0
    %v933 = vadd.f32 %v729, %v932
    %v934 = vpop.f32.mrb[0].mxu0
    %935 = vmatprep.mubr.f32.mxu0 0.0
    %936 = vmatmul.mubr.f32.gmra.mrb[0].mxu0 %v704
    %v937 = vpop.f32.mrb[0].mxu0
    %v938 = vadd.f32 %v729, %v937
    %v939 = vpop.f32.mrb[0].mxu0
    %940 = vmatprep.mubr.f32.mxu0 0.0
    %941 = vmatmul.mubr.f32.gmra.mrb[0].mxu0 %v705
    %v942 = vpop.f32.mrb[0].mxu0
    %v943 = vadd.f32 %v729, %v942
    %v944 = vpop.f32.mrb[0].mxu0
    %945 = vmatprep.mubr.f32.mxu0 0.0
    %946 = vmatmul.mubr.f32.gmra.mrb[0].mxu0 %v706
    %v947 = vpop.f32.mrb[0].mxu0
    %v948 = vadd.f32 %v729, %v947
    %v949 = vpop.f32.mrb[0].mxu0
    %950 = vmatprep.mubr.f32.mxu0 0.0
    %951 = vmatmul.mubr.f32.gmra.mrb[0].mxu0 %v707
    %v952 = vpop.f32.mrb[0].mxu0
    %v953 = vadd.f32 %v729, %v952
    %v954 = vpop.f32.mrb[0].mxu0
    %955 = vdwg.mxu0
    %v956 = vmax.f32 %v798, 0.0
    %v957 = vmax.f32 %v803, 0.0
    %v958 = vmax.f32 %v808, 0.0
    %v959 = vmax.f32 %v813, 0.0
    %v960 = vmax.f32 %v818, 0.0
    %v961 = vmax.f32 %v823, 0.0
    %v962 = vmax.f32 %v828, 0.0
    %v963 = vmax.f32 %v833, 0.0
    %v964 = vmax.f32 %v838, 0.0
    %v965 = vmax.f32 %v843, 0.0
    %v966 = vmax.f32 %v848, 0.0
    %v967 = vmax.f32 %v853, 0.0
    %v968 = vmax.f32 %v858, 0.0
    %v969 = vmax.f32 %v863, 0.0
    %v970 = vmax.f32 %v868, 0.0
    %v971 = vmax.f32 %v873, 0.0
    %v972 = vmax.f32 %v878, 0.0
    %v973 = vmax.f32 %v883, 0.0
    %v974 = vmax.f32 %v888, 0.0
    %v975 = vmax.f32 %v893, 0.0
    %v976 = vmax.f32 %v898, 0.0
    %v977 = vmax.f32 %v903, 0.0
    %v978 = vmax.f32 %v908, 0.0
    %v979 = vmax.f32 %v913, 0.0
    %v980 = vmax.f32 %v918, 0.0
    %v981 = vmax.f32 %v923, 0.0
    %v982 = vmax.f32 %v928, 0.0
    %v983 = vmax.f32 %v933, 0.0
    %v984 = vmax.f32 %v938, 0.0
    %v985 = vmax.f32 %v943, 0.0
    %v986 = vmax.f32 %v948, 0.0
    %v987 = vmax.f32 %v953, 0.0
    %v988 = vld [vmem:[%s7] sm:$0x1]
    %v990 = vlaneseq
    %v991 = vshrl.u32 %v990, 7
    %v992 = vsub.s32 0, %v991
    %v993 = vrot.slane %v988, %v992
    %v995 = vmul.f32 %v956, %v993
    %v996 = vmul.f32 %v957, %v993
    %v997 = vmul.f32 %v958, %v993
    %v998 = vmul.f32 %v959, %v993
    %v999 = vmul.f32 %v960, %v993
    %v1000 = vmul.f32 %v961, %v993
    %v1001 = vmul.f32 %v962, %v993
    %v1002 = vmul.f32 %v963, %v993
    %v1003 = vmul.f32 %v964, %v993
    %v1004 = vmul.f32 %v965, %v993
    %v1005 = vmul.f32 %v966, %v993
    %v1006 = vmul.f32 %v967, %v993
    %v1007 = vmul.f32 %v968, %v993
    %v1008 = vmul.f32 %v969, %v993
    %v1009 = vmul.f32 %v970, %v993
    %v1010 = vmul.f32 %v971, %v993
    %v1011 = vmul.f32 %v972, %v993
    %v1012 = vmul.f32 %v973, %v993
    %v1013 = vmul.f32 %v974, %v993
    %v1014 = vmul.f32 %v975, %v993
    %v1015 = vmul.f32 %v976, %v993
    %v1016 = vmul.f32 %v977, %v993
    %v1017 = vmul.f32 %v978, %v993
    %v1018 = vmul.f32 %v979, %v993
    %v1019 = vmul.f32 %v980, %v993
    %v1020 = vmul.f32 %v981, %v993
    %v1021 = vmul.f32 %v982, %v993
    %v1022 = vmul.f32 %v983, %v993
    %v1023 = vmul.f32 %v984, %v993
    %v1024 = vmul.f32 %v985, %v993
    %v1025 = vmul.f32 %v986, %v993
    %v1026 = vmul.f32 %v987, %v993
    %1027 = vadd.xlane.f32.xlu0 %v995
    %v1028 = vpop.xlane.xlu0 %1027
    %1029 = vadd.xlane.f32.xlu0 %v996
    %v1030 = vpop.xlane.xlu0 %1029
    %1031 = vadd.xlane.f32.xlu0 %v997
    %v1032 = vpop.xlane.xlu0 %1031
    %1033 = vadd.xlane.f32.xlu0 %v998
    %v1034 = vpop.xlane.xlu0 %1033
    %1035 = vadd.xlane.f32.xlu0 %v999
    %v1036 = vpop.xlane.xlu0 %1035
    %1037 = vadd.xlane.f32.xlu0 %v1000
    %v1038 = vpop.xlane.xlu0 %1037
    %1039 = vadd.xlane.f32.xlu0 %v1001
    %v1040 = vpop.xlane.xlu0 %1039
    %1041 = vadd.xlane.f32.xlu0 %v1002
    %v1042 = vpop.xlane.xlu0 %1041
    %1043 = vadd.xlane.f32.xlu0 %v1003
    %v1044 = vpop.xlane.xlu0 %1043
    %1045 = vadd.xlane.f32.xlu0 %v1004
    %v1046 = vpop.xlane.xlu0 %1045
    %1047 = vadd.xlane.f32.xlu0 %v1005
    %v1048 = vpop.xlane.xlu0 %1047
    %1049 = vadd.xlane.f32.xlu0 %v1006
    %v1050 = vpop.xlane.xlu0 %1049
    %1051 = vadd.xlane.f32.xlu0 %v1007
    %v1052 = vpop.xlane.xlu0 %1051
    %1053 = vadd.xlane.f32.xlu0 %v1008
    %v1054 = vpop.xlane.xlu0 %1053
    %1055 = vadd.xlane.f32.xlu0 %v1009
    %v1056 = vpop.xlane.xlu0 %1055
    %1057 = vadd.xlane.f32.xlu0 %v1010
    %v1058 = vpop.xlane.xlu0 %1057
    %1059 = vadd.xlane.f32.xlu0 %v1011
    %v1060 = vpop.xlane.xlu0 %1059
    %1061 = vadd.xlane.f32.xlu0 %v1012
    %v1062 = vpop.xlane.xlu0 %1061
    %1063 = vadd.xlane.f32.xlu0 %v1013
    %v1064 = vpop.xlane.xlu0 %1063
    %1065 = vadd.xlane.f32.xlu0 %v1014
    %v1066 = vpop.xlane.xlu0 %1065
    %1067 = vadd.xlane.f32.xlu0 %v1015
    %v1068 = vpop.xlane.xlu0 %1067
    %1069 = vadd.xlane.f32.xlu0 %v1016
    %v1070 = vpop.xlane.xlu0 %1069
    %1071 = vadd.xlane.f32.xlu0 %v1017
    %v1072 = vpop.xlane.xlu0 %1071
    %1073 = vadd.xlane.f32.xlu0 %v1018
    %v1074 = vpop.xlane.xlu0 %1073
    %1075 = vadd.xlane.f32.xlu0 %v1019
    %v1076 = vpop.xlane.xlu0 %1075
    %1077 = vadd.xlane.f32.xlu0 %v1020
    %v1078 = vpop.xlane.xlu0 %1077
    %1079 = vadd.xlane.f32.xlu0 %v1021
    %v1080 = vpop.xlane.xlu0 %1079
    %1081 = vadd.xlane.f32.xlu0 %v1022
    %v1082 = vpop.xlane.xlu0 %1081
    %1083 = vadd.xlane.f32.xlu0 %v1023
    %v1084 = vpop.xlane.xlu0 %1083
    %1085 = vadd.xlane.f32.xlu0 %v1024
    %v1086 = vpop.xlane.xlu0 %1085
    %1087 = vadd.xlane.f32.xlu0 %v1025
    %v1088 = vpop.xlane.xlu0 %1087
    %1089 = vadd.xlane.f32.xlu0 %v1026
    %v1090 = vpop.xlane.xlu0 %1089
    %s1091 = sld [smem:[#allocation2]]
    %v1092 = vstv %s1091
    %v1093 = vadd.f32 %v1028, %v1092
    %v1094 = vadd.f32 %v1030, %v1092
    %v1095 = vadd.f32 %v1032, %v1092
    %v1096 = vadd.f32 %v1034, %v1092
    %v1097 = vadd.f32 %v1036, %v1092
    %v1098 = vadd.f32 %v1038, %v1092
    %v1099 = vadd.f32 %v1040, %v1092
    %v1100 = vadd.f32 %v1042, %v1092
    %v1101 = vadd.f32 %v1044, %v1092
    %v1102 = vadd.f32 %v1046, %v1092
    %v1103 = vadd.f32 %v1048, %v1092
    %v1104 = vadd.f32 %v1050, %v1092
    %v1105 = vadd.f32 %v1052, %v1092
    %v1106 = vadd.f32 %v1054, %v1092
    %v1107 = vadd.f32 %v1056, %v1092
    %v1108 = vadd.f32 %v1058, %v1092
    %v1109 = vadd.f32 %v1060, %v1092
    %v1110 = vadd.f32 %v1062, %v1092
    %v1111 = vadd.f32 %v1064, %v1092
    %v1112 = vadd.f32 %v1066, %v1092
    %v1113 = vadd.f32 %v1068, %v1092
    %v1114 = vadd.f32 %v1070, %v1092
    %v1115 = vadd.f32 %v1072, %v1092
    %v1116 = vadd.f32 %v1074, %v1092
    %v1117 = vadd.f32 %v1076, %v1092
    %v1118 = vadd.f32 %v1078, %v1092
    %v1119 = vadd.f32 %v1080, %v1092
    %v1120 = vadd.f32 %v1082, %v1092
    %v1121 = vadd.f32 %v1084, %v1092
    %v1122 = vadd.f32 %v1086, %v1092
    %v1123 = vadd.f32 %v1088, %v1092
    %v1124 = vadd.f32 %v1090, %v1092
    %v1157 = vlaneseq
    %v1158 = vshrl.u32 %v1157, 7
    %v1159 = vsub.s32 0, %v1158
    %v1160 = vrot.slane %v1093, %v1159
    %v1161 = vlaneseq
    %v1162 = vshrl.u32 %v1161, 7
    %v1163 = vsub.s32 1, %v1162
    %v1164 = vrot.slane %v1093, %v1163
    %v1165 = vlaneseq
    %v1166 = vshrl.u32 %v1165, 7
    %v1167 = vsub.s32 2, %v1166
    %v1168 = vrot.slane %v1093, %v1167
    %v1169 = vlaneseq
    %v1170 = vshrl.u32 %v1169, 7
    %v1171 = vsub.s32 3, %v1170
    %v1172 = vrot.slane %v1093, %v1171
    %v1173 = vlaneseq
    %v1174 = vshrl.u32 %v1173, 7
    %v1175 = vsub.s32 4, %v1174
    %v1176 = vrot.slane %v1093, %v1175
    %v1177 = vlaneseq
    %v1178 = vshrl.u32 %v1177, 7
    %v1179 = vsub.s32 5, %v1178
    %v1180 = vrot.slane %v1093, %v1179
    %v1181 = vlaneseq
    %v1182 = vshrl.u32 %v1181, 7
    %v1183 = vsub.s32 6, %v1182
    %v1184 = vrot.slane %v1093, %v1183
    %v1185 = vlaneseq
    %v1186 = vshrl.u32 %v1185, 7
    %v1187 = vsub.s32 7, %v1186
    %v1188 = vrot.slane %v1093, %v1187
    %v1189 = vlaneseq
    %v1190 = vshrl.u32 %v1189, 7
    %v1191 = vsub.s32 0, %v1190
    %v1192 = vrot.slane %v1094, %v1191
    %v1193 = vlaneseq
    %v1194 = vshrl.u32 %v1193, 7
    %v1195 = vsub.s32 1, %v1194
    %v1196 = vrot.slane %v1094, %v1195
    %v1197 = vlaneseq
    %v1198 = vshrl.u32 %v1197, 7
    %v1199 = vsub.s32 2, %v1198
    %v1200 = vrot.slane %v1094, %v1199
    %v1201 = vlaneseq
    %v1202 = vshrl.u32 %v1201, 7
    %v1203 = vsub.s32 3, %v1202
    %v1204 = vrot.slane %v1094, %v1203
    %v1205 = vlaneseq
    %v1206 = vshrl.u32 %v1205, 7
    %v1207 = vsub.s32 4, %v1206
    %v1208 = vrot.slane %v1094, %v1207
    %v1209 = vlaneseq
    %v1210 = vshrl.u32 %v1209, 7
    %v1211 = vsub.s32 5, %v1210
    %v1212 = vrot.slane %v1094, %v1211
    %v1213 = vlaneseq
    %v1214 = vshrl.u32 %v1213, 7
    %v1215 = vsub.s32 6, %v1214
    %v1216 = vrot.slane %v1094, %v1215
    %v1217 = vlaneseq
    %v1218 = vshrl.u32 %v1217, 7
    %v1219 = vsub.s32 7, %v1218
    %v1220 = vrot.slane %v1094, %v1219
    %v1221 = vlaneseq
    %v1222 = vshrl.u32 %v1221, 7
    %v1223 = vsub.s32 0, %v1222
    %v1224 = vrot.slane %v1095, %v1223
    %v1225 = vlaneseq
    %v1226 = vshrl.u32 %v1225, 7
    %v1227 = vsub.s32 1, %v1226
    %v1228 = vrot.slane %v1095, %v1227
    %v1229 = vlaneseq
    %v1230 = vshrl.u32 %v1229, 7
    %v1231 = vsub.s32 2, %v1230
    %v1232 = vrot.slane %v1095, %v1231
    %v1233 = vlaneseq
    %v1234 = vshrl.u32 %v1233, 7
    %v1235 = vsub.s32 3, %v1234
    %v1236 = vrot.slane %v1095, %v1235
    %v1237 = vlaneseq
    %v1238 = vshrl.u32 %v1237, 7
    %v1239 = vsub.s32 4, %v1238
    %v1240 = vrot.slane %v1095, %v1239
    %v1241 = vlaneseq
    %v1242 = vshrl.u32 %v1241, 7
    %v1243 = vsub.s32 5, %v1242
    %v1244 = vrot.slane %v1095, %v1243
    %v1245 = vlaneseq
    %v1246 = vshrl.u32 %v1245, 7
    %v1247 = vsub.s32 6, %v1246
    %v1248 = vrot.slane %v1095, %v1247
    %v1249 = vlaneseq
    %v1250 = vshrl.u32 %v1249, 7
    %v1251 = vsub.s32 7, %v1250
    %v1252 = vrot.slane %v1095, %v1251
    %v1253 = vlaneseq
    %v1254 = vshrl.u32 %v1253, 7
    %v1255 = vsub.s32 0, %v1254
    %v1256 = vrot.slane %v1096, %v1255
    %v1257 = vlaneseq
    %v1258 = vshrl.u32 %v1257, 7
    %v1259 = vsub.s32 1, %v1258
    %v1260 = vrot.slane %v1096, %v1259
    %v1261 = vlaneseq
    %v1262 = vshrl.u32 %v1261, 7
    %v1263 = vsub.s32 2, %v1262
    %v1264 = vrot.slane %v1096, %v1263
    %v1265 = vlaneseq
    %v1266 = vshrl.u32 %v1265, 7
    %v1267 = vsub.s32 3, %v1266
    %v1268 = vrot.slane %v1096, %v1267
    %v1269 = vlaneseq
    %v1270 = vshrl.u32 %v1269, 7
    %v1271 = vsub.s32 4, %v1270
    %v1272 = vrot.slane %v1096, %v1271
    %v1273 = vlaneseq
    %v1274 = vshrl.u32 %v1273, 7
    %v1275 = vsub.s32 5, %v1274
    %v1276 = vrot.slane %v1096, %v1275
    %v1277 = vlaneseq
    %v1278 = vshrl.u32 %v1277, 7
    %v1279 = vsub.s32 6, %v1278
    %v1280 = vrot.slane %v1096, %v1279
    %v1281 = vlaneseq
    %v1282 = vshrl.u32 %v1281, 7
    %v1283 = vsub.s32 7, %v1282
    %v1284 = vrot.slane %v1096, %v1283
    %v1285 = vlaneseq
    %v1286 = vshrl.u32 %v1285, 7
    %v1287 = vsub.s32 0, %v1286
    %v1288 = vrot.slane %v1097, %v1287
    %v1289 = vlaneseq
    %v1290 = vshrl.u32 %v1289, 7
    %v1291 = vsub.s32 1, %v1290
    %v1292 = vrot.slane %v1097, %v1291
    %v1293 = vlaneseq
    %v1294 = vshrl.u32 %v1293, 7
    %v1295 = vsub.s32 2, %v1294
    %v1296 = vrot.slane %v1097, %v1295
    %v1297 = vlaneseq
    %v1298 = vshrl.u32 %v1297, 7
    %v1299 = vsub.s32 3, %v1298
    %v1300 = vrot.slane %v1097, %v1299
    %v1301 = vlaneseq
    %v1302 = vshrl.u32 %v1301, 7
    %v1303 = vsub.s32 4, %v1302
    %v1304 = vrot.slane %v1097, %v1303
    %v1305 = vlaneseq
    %v1306 = vshrl.u32 %v1305, 7
    %v1307 = vsub.s32 5, %v1306
    %v1308 = vrot.slane %v1097, %v1307
    %v1309 = vlaneseq
    %v1310 = vshrl.u32 %v1309, 7
    %v1311 = vsub.s32 6, %v1310
    %v1312 = vrot.slane %v1097, %v1311
    %v1313 = vlaneseq
    %v1314 = vshrl.u32 %v1313, 7
    %v1315 = vsub.s32 7, %v1314
    %v1316 = vrot.slane %v1097, %v1315
    %v1317 = vlaneseq
    %v1318 = vshrl.u32 %v1317, 7
    %v1319 = vsub.s32 0, %v1318
    %v1320 = vrot.slane %v1098, %v1319
    %v1321 = vlaneseq
    %v1322 = vshrl.u32 %v1321, 7
    %v1323 = vsub.s32 1, %v1322
    %v1324 = vrot.slane %v1098, %v1323
    %v1325 = vlaneseq
    %v1326 = vshrl.u32 %v1325, 7
    %v1327 = vsub.s32 2, %v1326
    %v1328 = vrot.slane %v1098, %v1327
    %v1329 = vlaneseq
    %v1330 = vshrl.u32 %v1329, 7
    %v1331 = vsub.s32 3, %v1330
    %v1332 = vrot.slane %v1098, %v1331
    %v1333 = vlaneseq
    %v1334 = vshrl.u32 %v1333, 7
    %v1335 = vsub.s32 4, %v1334
    %v1336 = vrot.slane %v1098, %v1335
    %v1337 = vlaneseq
    %v1338 = vshrl.u32 %v1337, 7
    %v1339 = vsub.s32 5, %v1338
    %v1340 = vrot.slane %v1098, %v1339
    %v1341 = vlaneseq
    %v1342 = vshrl.u32 %v1341, 7
    %v1343 = vsub.s32 6, %v1342
    %v1344 = vrot.slane %v1098, %v1343
    %v1345 = vlaneseq
    %v1346 = vshrl.u32 %v1345, 7
    %v1347 = vsub.s32 7, %v1346
    %v1348 = vrot.slane %v1098, %v1347
    %v1349 = vlaneseq
    %v1350 = vshrl.u32 %v1349, 7
    %v1351 = vsub.s32 0, %v1350
    %v1352 = vrot.slane %v1099, %v1351
    %v1353 = vlaneseq
    %v1354 = vshrl.u32 %v1353, 7
    %v1355 = vsub.s32 1, %v1354
    %v1356 = vrot.slane %v1099, %v1355
    %v1357 = vlaneseq
    %v1358 = vshrl.u32 %v1357, 7
    %v1359 = vsub.s32 2, %v1358
    %v1360 = vrot.slane %v1099, %v1359
    %v1361 = vlaneseq
    %v1362 = vshrl.u32 %v1361, 7
    %v1363 = vsub.s32 3, %v1362
    %v1364 = vrot.slane %v1099, %v1363
    %v1365 = vlaneseq
    %v1366 = vshrl.u32 %v1365, 7
    %v1367 = vsub.s32 4, %v1366
    %v1368 = vrot.slane %v1099, %v1367
    %v1369 = vlaneseq
    %v1370 = vshrl.u32 %v1369, 7
    %v1371 = vsub.s32 5, %v1370
    %v1372 = vrot.slane %v1099, %v1371
    %v1373 = vlaneseq
    %v1374 = vshrl.u32 %v1373, 7
    %v1375 = vsub.s32 6, %v1374
    %v1376 = vrot.slane %v1099, %v1375
    %v1377 = vlaneseq
    %v1378 = vshrl.u32 %v1377, 7
    %v1379 = vsub.s32 7, %v1378
    %v1380 = vrot.slane %v1099, %v1379
    %v1381 = vlaneseq
    %v1382 = vshrl.u32 %v1381, 7
    %v1383 = vsub.s32 0, %v1382
    %v1384 = vrot.slane %v1100, %v1383
    %v1385 = vlaneseq
    %v1386 = vshrl.u32 %v1385, 7
    %v1387 = vsub.s32 1, %v1386
    %v1388 = vrot.slane %v1100, %v1387
    %v1389 = vlaneseq
    %v1390 = vshrl.u32 %v1389, 7
    %v1391 = vsub.s32 2, %v1390
    %v1392 = vrot.slane %v1100, %v1391
    %v1393 = vlaneseq
    %v1394 = vshrl.u32 %v1393, 7
    %v1395 = vsub.s32 3, %v1394
    %v1396 = vrot.slane %v1100, %v1395
    %v1397 = vlaneseq
    %v1398 = vshrl.u32 %v1397, 7
    %v1399 = vsub.s32 4, %v1398
    %v1400 = vrot.slane %v1100, %v1399
    %v1401 = vlaneseq
    %v1402 = vshrl.u32 %v1401, 7
    %v1403 = vsub.s32 5, %v1402
    %v1404 = vrot.slane %v1100, %v1403
    %v1405 = vlaneseq
    %v1406 = vshrl.u32 %v1405, 7
    %v1407 = vsub.s32 6, %v1406
    %v1408 = vrot.slane %v1100, %v1407
    %v1409 = vlaneseq
    %v1410 = vshrl.u32 %v1409, 7
    %v1411 = vsub.s32 7, %v1410
    %v1412 = vrot.slane %v1100, %v1411
    %v1413 = vlaneseq
    %v1414 = vshrl.u32 %v1413, 7
    %v1415 = vsub.s32 0, %v1414
    %v1416 = vrot.slane %v1101, %v1415
    %v1417 = vlaneseq
    %v1418 = vshrl.u32 %v1417, 7
    %v1419 = vsub.s32 1, %v1418
    %v1420 = vrot.slane %v1101, %v1419
    %v1421 = vlaneseq
    %v1422 = vshrl.u32 %v1421, 7
    %v1423 = vsub.s32 2, %v1422
    %v1424 = vrot.slane %v1101, %v1423
    %v1425 = vlaneseq
    %v1426 = vshrl.u32 %v1425, 7
    %v1427 = vsub.s32 3, %v1426
    %v1428 = vrot.slane %v1101, %v1427
    %v1429 = vlaneseq
    %v1430 = vshrl.u32 %v1429, 7
    %v1431 = vsub.s32 4, %v1430
    %v1432 = vrot.slane %v1101, %v1431
    %v1433 = vlaneseq
    %v1434 = vshrl.u32 %v1433, 7
    %v1435 = vsub.s32 5, %v1434
    %v1436 = vrot.slane %v1101, %v1435
    %v1437 = vlaneseq
    %v1438 = vshrl.u32 %v1437, 7
    %v1439 = vsub.s32 6, %v1438
    %v1440 = vrot.slane %v1101, %v1439
    %v1441 = vlaneseq
    %v1442 = vshrl.u32 %v1441, 7
    %v1443 = vsub.s32 7, %v1442
    %v1444 = vrot.slane %v1101, %v1443
    %v1445 = vlaneseq
    %v1446 = vshrl.u32 %v1445, 7
    %v1447 = vsub.s32 0, %v1446
    %v1448 = vrot.slane %v1102, %v1447
    %v1449 = vlaneseq
    %v1450 = vshrl.u32 %v1449, 7
    %v1451 = vsub.s32 1, %v1450
    %v1452 = vrot.slane %v1102, %v1451
    %v1453 = vlaneseq
    %v1454 = vshrl.u32 %v1453, 7
    %v1455 = vsub.s32 2, %v1454
    %v1456 = vrot.slane %v1102, %v1455
    %v1457 = vlaneseq
    %v1458 = vshrl.u32 %v1457, 7
    %v1459 = vsub.s32 3, %v1458
    %v1460 = vrot.slane %v1102, %v1459
    %v1461 = vlaneseq
    %v1462 = vshrl.u32 %v1461, 7
    %v1463 = vsub.s32 4, %v1462
    %v1464 = vrot.slane %v1102, %v1463
    %v1465 = vlaneseq
    %v1466 = vshrl.u32 %v1465, 7
    %v1467 = vsub.s32 5, %v1466
    %v1468 = vrot.slane %v1102, %v1467
    %v1469 = vlaneseq
    %v1470 = vshrl.u32 %v1469, 7
    %v1471 = vsub.s32 6, %v1470
    %v1472 = vrot.slane %v1102, %v1471
    %v1473 = vlaneseq
    %v1474 = vshrl.u32 %v1473, 7
    %v1475 = vsub.s32 7, %v1474
    %v1476 = vrot.slane %v1102, %v1475
    %v1477 = vlaneseq
    %v1478 = vshrl.u32 %v1477, 7
    %v1479 = vsub.s32 0, %v1478
    %v1480 = vrot.slane %v1103, %v1479
    %v1481 = vlaneseq
    %v1482 = vshrl.u32 %v1481, 7
    %v1483 = vsub.s32 1, %v1482
    %v1484 = vrot.slane %v1103, %v1483
    %v1485 = vlaneseq
    %v1486 = vshrl.u32 %v1485, 7
    %v1487 = vsub.s32 2, %v1486
    %v1488 = vrot.slane %v1103, %v1487
    %v1489 = vlaneseq
    %v1490 = vshrl.u32 %v1489, 7
    %v1491 = vsub.s32 3, %v1490
    %v1492 = vrot.slane %v1103, %v1491
    %v1493 = vlaneseq
    %v1494 = vshrl.u32 %v1493, 7
    %v1495 = vsub.s32 4, %v1494
    %v1496 = vrot.slane %v1103, %v1495
    %v1497 = vlaneseq
    %v1498 = vshrl.u32 %v1497, 7
    %v1499 = vsub.s32 5, %v1498
    %v1500 = vrot.slane %v1103, %v1499
    %v1501 = vlaneseq
    %v1502 = vshrl.u32 %v1501, 7
    %v1503 = vsub.s32 6, %v1502
    %v1504 = vrot.slane %v1103, %v1503
    %v1505 = vlaneseq
    %v1506 = vshrl.u32 %v1505, 7
    %v1507 = vsub.s32 7, %v1506
    %v1508 = vrot.slane %v1103, %v1507
    %v1509 = vlaneseq
    %v1510 = vshrl.u32 %v1509, 7
    %v1511 = vsub.s32 0, %v1510
    %v1512 = vrot.slane %v1104, %v1511
    %v1513 = vlaneseq
    %v1514 = vshrl.u32 %v1513, 7
    %v1515 = vsub.s32 1, %v1514
    %v1516 = vrot.slane %v1104, %v1515
    %v1517 = vlaneseq
    %v1518 = vshrl.u32 %v1517, 7
    %v1519 = vsub.s32 2, %v1518
    %v1520 = vrot.slane %v1104, %v1519
    %v1521 = vlaneseq
    %v1522 = vshrl.u32 %v1521, 7
    %v1523 = vsub.s32 3, %v1522
    %v1524 = vrot.slane %v1104, %v1523
    %v1525 = vlaneseq
    %v1526 = vshrl.u32 %v1525, 7
    %v1527 = vsub.s32 4, %v1526
    %v1528 = vrot.slane %v1104, %v1527
    %v1529 = vlaneseq
    %v1530 = vshrl.u32 %v1529, 7
    %v1531 = vsub.s32 5, %v1530
    %v1532 = vrot.slane %v1104, %v1531
    %v1533 = vlaneseq
    %v1534 = vshrl.u32 %v1533, 7
    %v1535 = vsub.s32 6, %v1534
    %v1536 = vrot.slane %v1104, %v1535
    %v1537 = vlaneseq
    %v1538 = vshrl.u32 %v1537, 7
    %v1539 = vsub.s32 7, %v1538
    %v1540 = vrot.slane %v1104, %v1539
    %v1541 = vlaneseq
    %v1542 = vshrl.u32 %v1541, 7
    %v1543 = vsub.s32 0, %v1542
    %v1544 = vrot.slane %v1105, %v1543
    %v1545 = vlaneseq
    %v1546 = vshrl.u32 %v1545, 7
    %v1547 = vsub.s32 1, %v1546
    %v1548 = vrot.slane %v1105, %v1547
    %v1549 = vlaneseq
    %v1550 = vshrl.u32 %v1549, 7
    %v1551 = vsub.s32 2, %v1550
    %v1552 = vrot.slane %v1105, %v1551
    %v1553 = vlaneseq
    %v1554 = vshrl.u32 %v1553, 7
    %v1555 = vsub.s32 3, %v1554
    %v1556 = vrot.slane %v1105, %v1555
    %v1557 = vlaneseq
    %v1558 = vshrl.u32 %v1557, 7
    %v1559 = vsub.s32 4, %v1558
    %v1560 = vrot.slane %v1105, %v1559
    %v1561 = vlaneseq
    %v1562 = vshrl.u32 %v1561, 7
    %v1563 = vsub.s32 5, %v1562
    %v1564 = vrot.slane %v1105, %v1563
    %v1565 = vlaneseq
    %v1566 = vshrl.u32 %v1565, 7
    %v1567 = vsub.s32 6, %v1566
    %v1568 = vrot.slane %v1105, %v1567
    %v1569 = vlaneseq
    %v1570 = vshrl.u32 %v1569, 7
    %v1571 = vsub.s32 7, %v1570
    %v1572 = vrot.slane %v1105, %v1571
    %v1573 = vlaneseq
    %v1574 = vshrl.u32 %v1573, 7
    %v1575 = vsub.s32 0, %v1574
    %v1576 = vrot.slane %v1106, %v1575
    %v1577 = vlaneseq
    %v1578 = vshrl.u32 %v1577, 7
    %v1579 = vsub.s32 1, %v1578
    %v1580 = vrot.slane %v1106, %v1579
    %v1581 = vlaneseq
    %v1582 = vshrl.u32 %v1581, 7
    %v1583 = vsub.s32 2, %v1582
    %v1584 = vrot.slane %v1106, %v1583
    %v1585 = vlaneseq
    %v1586 = vshrl.u32 %v1585, 7
    %v1587 = vsub.s32 3, %v1586
    %v1588 = vrot.slane %v1106, %v1587
    %v1589 = vlaneseq
    %v1590 = vshrl.u32 %v1589, 7
    %v1591 = vsub.s32 4, %v1590
    %v1592 = vrot.slane %v1106, %v1591
    %v1593 = vlaneseq
    %v1594 = vshrl.u32 %v1593, 7
    %v1595 = vsub.s32 5, %v1594
    %v1596 = vrot.slane %v1106, %v1595
    %v1597 = vlaneseq
    %v1598 = vshrl.u32 %v1597, 7
    %v1599 = vsub.s32 6, %v1598
    %v1600 = vrot.slane %v1106, %v1599
    %v1601 = vlaneseq
    %v1602 = vshrl.u32 %v1601, 7
    %v1603 = vsub.s32 7, %v1602
    %v1604 = vrot.slane %v1106, %v1603
    %v1605 = vlaneseq
    %v1606 = vshrl.u32 %v1605, 7
    %v1607 = vsub.s32 0, %v1606
    %v1608 = vrot.slane %v1107, %v1607
    %v1609 = vlaneseq
    %v1610 = vshrl.u32 %v1609, 7
    %v1611 = vsub.s32 1, %v1610
    %v1612 = vrot.slane %v1107, %v1611
    %v1613 = vlaneseq
    %v1614 = vshrl.u32 %v1613, 7
    %v1615 = vsub.s32 2, %v1614
    %v1616 = vrot.slane %v1107, %v1615
    %v1617 = vlaneseq
    %v1618 = vshrl.u32 %v1617, 7
    %v1619 = vsub.s32 3, %v1618
    %v1620 = vrot.slane %v1107, %v1619
    %v1621 = vlaneseq
    %v1622 = vshrl.u32 %v1621, 7
    %v1623 = vsub.s32 4, %v1622
    %v1624 = vrot.slane %v1107, %v1623
    %v1625 = vlaneseq
    %v1626 = vshrl.u32 %v1625, 7
    %v1627 = vsub.s32 5, %v1626
    %v1628 = vrot.slane %v1107, %v1627
    %v1629 = vlaneseq
    %v1630 = vshrl.u32 %v1629, 7
    %v1631 = vsub.s32 6, %v1630
    %v1632 = vrot.slane %v1107, %v1631
    %v1633 = vlaneseq
    %v1634 = vshrl.u32 %v1633, 7
    %v1635 = vsub.s32 7, %v1634
    %v1636 = vrot.slane %v1107, %v1635
    %v1637 = vlaneseq
    %v1638 = vshrl.u32 %v1637, 7
    %v1639 = vsub.s32 0, %v1638
    %v1640 = vrot.slane %v1108, %v1639
    %v1641 = vlaneseq
    %v1642 = vshrl.u32 %v1641, 7
    %v1643 = vsub.s32 1, %v1642
    %v1644 = vrot.slane %v1108, %v1643
    %v1645 = vlaneseq
    %v1646 = vshrl.u32 %v1645, 7
    %v1647 = vsub.s32 2, %v1646
    %v1648 = vrot.slane %v1108, %v1647
    %v1649 = vlaneseq
    %v1650 = vshrl.u32 %v1649, 7
    %v1651 = vsub.s32 3, %v1650
    %v1652 = vrot.slane %v1108, %v1651
    %v1653 = vlaneseq
    %v1654 = vshrl.u32 %v1653, 7
    %v1655 = vsub.s32 4, %v1654
    %v1656 = vrot.slane %v1108, %v1655
    %v1657 = vlaneseq
    %v1658 = vshrl.u32 %v1657, 7
    %v1659 = vsub.s32 5, %v1658
    %v1660 = vrot.slane %v1108, %v1659
    %v1661 = vlaneseq
    %v1662 = vshrl.u32 %v1661, 7
    %v1663 = vsub.s32 6, %v1662
    %v1664 = vrot.slane %v1108, %v1663
    %v1665 = vlaneseq
    %v1666 = vshrl.u32 %v1665, 7
    %v1667 = vsub.s32 7, %v1666
    %v1668 = vrot.slane %v1108, %v1667
    %v1669 = vlaneseq
    %v1670 = vshrl.u32 %v1669, 7
    %v1671 = vsub.s32 0, %v1670
    %v1672 = vrot.slane %v1109, %v1671
    %v1673 = vlaneseq
    %v1674 = vshrl.u32 %v1673, 7
    %v1675 = vsub.s32 1, %v1674
    %v1676 = vrot.slane %v1109, %v1675
    %v1677 = vlaneseq
    %v1678 = vshrl.u32 %v1677, 7
    %v1679 = vsub.s32 2, %v1678
    %v1680 = vrot.slane %v1109, %v1679
    %v1681 = vlaneseq
    %v1682 = vshrl.u32 %v1681, 7
    %v1683 = vsub.s32 3, %v1682
    %v1684 = vrot.slane %v1109, %v1683
    %v1685 = vlaneseq
    %v1686 = vshrl.u32 %v1685, 7
    %v1687 = vsub.s32 4, %v1686
    %v1688 = vrot.slane %v1109, %v1687
    %v1689 = vlaneseq
    %v1690 = vshrl.u32 %v1689, 7
    %v1691 = vsub.s32 5, %v1690
    %v1692 = vrot.slane %v1109, %v1691
    %v1693 = vlaneseq
    %v1694 = vshrl.u32 %v1693, 7
    %v1695 = vsub.s32 6, %v1694
    %v1696 = vrot.slane %v1109, %v1695
    %v1697 = vlaneseq
    %v1698 = vshrl.u32 %v1697, 7
    %v1699 = vsub.s32 7, %v1698
    %v1700 = vrot.slane %v1109, %v1699
    %v1701 = vlaneseq
    %v1702 = vshrl.u32 %v1701, 7
    %v1703 = vsub.s32 0, %v1702
    %v1704 = vrot.slane %v1110, %v1703
    %v1705 = vlaneseq
    %v1706 = vshrl.u32 %v1705, 7
    %v1707 = vsub.s32 1, %v1706
    %v1708 = vrot.slane %v1110, %v1707
    %v1709 = vlaneseq
    %v1710 = vshrl.u32 %v1709, 7
    %v1711 = vsub.s32 2, %v1710
    %v1712 = vrot.slane %v1110, %v1711
    %v1713 = vlaneseq
    %v1714 = vshrl.u32 %v1713, 7
    %v1715 = vsub.s32 3, %v1714
    %v1716 = vrot.slane %v1110, %v1715
    %v1717 = vlaneseq
    %v1718 = vshrl.u32 %v1717, 7
    %v1719 = vsub.s32 4, %v1718
    %v1720 = vrot.slane %v1110, %v1719
    %v1721 = vlaneseq
    %v1722 = vshrl.u32 %v1721, 7
    %v1723 = vsub.s32 5, %v1722
    %v1724 = vrot.slane %v1110, %v1723
    %v1725 = vlaneseq
    %v1726 = vshrl.u32 %v1725, 7
    %v1727 = vsub.s32 6, %v1726
    %v1728 = vrot.slane %v1110, %v1727
    %v1729 = vlaneseq
    %v1730 = vshrl.u32 %v1729, 7
    %v1731 = vsub.s32 7, %v1730
    %v1732 = vrot.slane %v1110, %v1731
    %v1733 = vlaneseq
    %v1734 = vshrl.u32 %v1733, 7
    %v1735 = vsub.s32 0, %v1734
    %v1736 = vrot.slane %v1111, %v1735
    %v1737 = vlaneseq
    %v1738 = vshrl.u32 %v1737, 7
    %v1739 = vsub.s32 1, %v1738
    %v1740 = vrot.slane %v1111, %v1739
    %v1741 = vlaneseq
    %v1742 = vshrl.u32 %v1741, 7
    %v1743 = vsub.s32 2, %v1742
    %v1744 = vrot.slane %v1111, %v1743
    %v1745 = vlaneseq
    %v1746 = vshrl.u32 %v1745, 7
    %v1747 = vsub.s32 3, %v1746
    %v1748 = vrot.slane %v1111, %v1747
    %v1749 = vlaneseq
    %v1750 = vshrl.u32 %v1749, 7
    %v1751 = vsub.s32 4, %v1750
    %v1752 = vrot.slane %v1111, %v1751
    %v1753 = vlaneseq
    %v1754 = vshrl.u32 %v1753, 7
    %v1755 = vsub.s32 5, %v1754
    %v1756 = vrot.slane %v1111, %v1755
    %v1757 = vlaneseq
    %v1758 = vshrl.u32 %v1757, 7
    %v1759 = vsub.s32 6, %v1758
    %v1760 = vrot.slane %v1111, %v1759
    %v1761 = vlaneseq
    %v1762 = vshrl.u32 %v1761, 7
    %v1763 = vsub.s32 7, %v1762
    %v1764 = vrot.slane %v1111, %v1763
    %v1765 = vlaneseq
    %v1766 = vshrl.u32 %v1765, 7
    %v1767 = vsub.s32 0, %v1766
    %v1768 = vrot.slane %v1112, %v1767
    %v1769 = vlaneseq
    %v1770 = vshrl.u32 %v1769, 7
    %v1771 = vsub.s32 1, %v1770
    %v1772 = vrot.slane %v1112, %v1771
    %v1773 = vlaneseq
    %v1774 = vshrl.u32 %v1773, 7
    %v1775 = vsub.s32 2, %v1774
    %v1776 = vrot.slane %v1112, %v1775
    %v1777 = vlaneseq
    %v1778 = vshrl.u32 %v1777, 7
    %v1779 = vsub.s32 3, %v1778
    %v1780 = vrot.slane %v1112, %v1779
    %v1781 = vlaneseq
    %v1782 = vshrl.u32 %v1781, 7
    %v1783 = vsub.s32 4, %v1782
    %v1784 = vrot.slane %v1112, %v1783
    %v1785 = vlaneseq
    %v1786 = vshrl.u32 %v1785, 7
    %v1787 = vsub.s32 5, %v1786
    %v1788 = vrot.slane %v1112, %v1787
    %v1789 = vlaneseq
    %v1790 = vshrl.u32 %v1789, 7
    %v1791 = vsub.s32 6, %v1790
    %v1792 = vrot.slane %v1112, %v1791
    %v1793 = vlaneseq
    %v1794 = vshrl.u32 %v1793, 7
    %v1795 = vsub.s32 7, %v1794
    %v1796 = vrot.slane %v1112, %v1795
    %v1797 = vlaneseq
    %v1798 = vshrl.u32 %v1797, 7
    %v1799 = vsub.s32 0, %v1798
    %v1800 = vrot.slane %v1113, %v1799
    %v1801 = vlaneseq
    %v1802 = vshrl.u32 %v1801, 7
    %v1803 = vsub.s32 1, %v1802
    %v1804 = vrot.slane %v1113, %v1803
    %v1805 = vlaneseq
    %v1806 = vshrl.u32 %v1805, 7
    %v1807 = vsub.s32 2, %v1806
    %v1808 = vrot.slane %v1113, %v1807
    %v1809 = vlaneseq
    %v1810 = vshrl.u32 %v1809, 7
    %v1811 = vsub.s32 3, %v1810
    %v1812 = vrot.slane %v1113, %v1811
    %v1813 = vlaneseq
    %v1814 = vshrl.u32 %v1813, 7
    %v1815 = vsub.s32 4, %v1814
    %v1816 = vrot.slane %v1113, %v1815
    %v1817 = vlaneseq
    %v1818 = vshrl.u32 %v1817, 7
    %v1819 = vsub.s32 5, %v1818
    %v1820 = vrot.slane %v1113, %v1819
    %v1821 = vlaneseq
    %v1822 = vshrl.u32 %v1821, 7
    %v1823 = vsub.s32 6, %v1822
    %v1824 = vrot.slane %v1113, %v1823
    %v1825 = vlaneseq
    %v1826 = vshrl.u32 %v1825, 7
    %v1827 = vsub.s32 7, %v1826
    %v1828 = vrot.slane %v1113, %v1827
    %v1829 = vlaneseq
    %v1830 = vshrl.u32 %v1829, 7
    %v1831 = vsub.s32 0, %v1830
    %v1832 = vrot.slane %v1114, %v1831
    %v1833 = vlaneseq
    %v1834 = vshrl.u32 %v1833, 7
    %v1835 = vsub.s32 1, %v1834
    %v1836 = vrot.slane %v1114, %v1835
    %v1837 = vlaneseq
    %v1838 = vshrl.u32 %v1837, 7
    %v1839 = vsub.s32 2, %v1838
    %v1840 = vrot.slane %v1114, %v1839
    %v1841 = vlaneseq
    %v1842 = vshrl.u32 %v1841, 7
    %v1843 = vsub.s32 3, %v1842
    %v1844 = vrot.slane %v1114, %v1843
    %v1845 = vlaneseq
    %v1846 = vshrl.u32 %v1845, 7
    %v1847 = vsub.s32 4, %v1846
    %v1848 = vrot.slane %v1114, %v1847
    %v1849 = vlaneseq
    %v1850 = vshrl.u32 %v1849, 7
    %v1851 = vsub.s32 5, %v1850
    %v1852 = vrot.slane %v1114, %v1851
    %v1853 = vlaneseq
    %v1854 = vshrl.u32 %v1853, 7
    %v1855 = vsub.s32 6, %v1854
    %v1856 = vrot.slane %v1114, %v1855
    %v1857 = vlaneseq
    %v1858 = vshrl.u32 %v1857, 7
    %v1859 = vsub.s32 7, %v1858
    %v1860 = vrot.slane %v1114, %v1859
    %v1861 = vlaneseq
    %v1862 = vshrl.u32 %v1861, 7
    %v1863 = vsub.s32 0, %v1862
    %v1864 = vrot.slane %v1115, %v1863
    %v1865 = vlaneseq
    %v1866 = vshrl.u32 %v1865, 7
    %v1867 = vsub.s32 1, %v1866
    %v1868 = vrot.slane %v1115, %v1867
    %v1869 = vlaneseq
    %v1870 = vshrl.u32 %v1869, 7
    %v1871 = vsub.s32 2, %v1870
    %v1872 = vrot.slane %v1115, %v1871
    %v1873 = vlaneseq
    %v1874 = vshrl.u32 %v1873, 7
    %v1875 = vsub.s32 3, %v1874
    %v1876 = vrot.slane %v1115, %v1875
    %v1877 = vlaneseq
    %v1878 = vshrl.u32 %v1877, 7
    %v1879 = vsub.s32 4, %v1878
    %v1880 = vrot.slane %v1115, %v1879
    %v1881 = vlaneseq
    %v1882 = vshrl.u32 %v1881, 7
    %v1883 = vsub.s32 5, %v1882
    %v1884 = vrot.slane %v1115, %v1883
    %v1885 = vlaneseq
    %v1886 = vshrl.u32 %v1885, 7
    %v1887 = vsub.s32 6, %v1886
    %v1888 = vrot.slane %v1115, %v1887
    %v1889 = vlaneseq
    %v1890 = vshrl.u32 %v1889, 7
    %v1891 = vsub.s32 7, %v1890
    %v1892 = vrot.slane %v1115, %v1891
    %v1893 = vlaneseq
    %v1894 = vshrl.u32 %v1893, 7
    %v1895 = vsub.s32 0, %v1894
    %v1896 = vrot.slane %v1116, %v1895
    %v1897 = vlaneseq
    %v1898 = vshrl.u32 %v1897, 7
    %v1899 = vsub.s32 1, %v1898
    %v1900 = vrot.slane %v1116, %v1899
    %v1901 = vlaneseq
    %v1902 = vshrl.u32 %v1901, 7
    %v1903 = vsub.s32 2, %v1902
    %v1904 = vrot.slane %v1116, %v1903
    %v1905 = vlaneseq
    %v1906 = vshrl.u32 %v1905, 7
    %v1907 = vsub.s32 3, %v1906
    %v1908 = vrot.slane %v1116, %v1907
    %v1909 = vlaneseq
    %v1910 = vshrl.u32 %v1909, 7
    %v1911 = vsub.s32 4, %v1910
    %v1912 = vrot.slane %v1116, %v1911
    %v1913 = vlaneseq
    %v1914 = vshrl.u32 %v1913, 7
    %v1915 = vsub.s32 5, %v1914
    %v1916 = vrot.slane %v1116, %v1915
    %v1917 = vlaneseq
    %v1918 = vshrl.u32 %v1917, 7
    %v1919 = vsub.s32 6, %v1918
    %v1920 = vrot.slane %v1116, %v1919
    %v1921 = vlaneseq
    %v1922 = vshrl.u32 %v1921, 7
    %v1923 = vsub.s32 7, %v1922
    %v1924 = vrot.slane %v1116, %v1923
    %v1925 = vlaneseq
    %v1926 = vshrl.u32 %v1925, 7
    %v1927 = vsub.s32 0, %v1926
    %v1928 = vrot.slane %v1117, %v1927
    %v1929 = vlaneseq
    %v1930 = vshrl.u32 %v1929, 7
    %v1931 = vsub.s32 1, %v1930
    %v1932 = vrot.slane %v1117, %v1931
    %v1933 = vlaneseq
    %v1934 = vshrl.u32 %v1933, 7
    %v1935 = vsub.s32 2, %v1934
    %v1936 = vrot.slane %v1117, %v1935
    %v1937 = vlaneseq
    %v1938 = vshrl.u32 %v1937, 7
    %v1939 = vsub.s32 3, %v1938
    %v1940 = vrot.slane %v1117, %v1939
    %v1941 = vlaneseq
    %v1942 = vshrl.u32 %v1941, 7
    %v1943 = vsub.s32 4, %v1942
    %v1944 = vrot.slane %v1117, %v1943
    %v1945 = vlaneseq
    %v1946 = vshrl.u32 %v1945, 7
    %v1947 = vsub.s32 5, %v1946
    %v1948 = vrot.slane %v1117, %v1947
    %v1949 = vlaneseq
    %v1950 = vshrl.u32 %v1949, 7
    %v1951 = vsub.s32 6, %v1950
    %v1952 = vrot.slane %v1117, %v1951
    %v1953 = vlaneseq
    %v1954 = vshrl.u32 %v1953, 7
    %v1955 = vsub.s32 7, %v1954
    %v1956 = vrot.slane %v1117, %v1955
    %v1957 = vlaneseq
    %v1958 = vshrl.u32 %v1957, 7
    %v1959 = vsub.s32 0, %v1958
    %v1960 = vrot.slane %v1118, %v1959
    %v1961 = vlaneseq
    %v1962 = vshrl.u32 %v1961, 7
    %v1963 = vsub.s32 1, %v1962
    %v1964 = vrot.slane %v1118, %v1963
    %v1965 = vlaneseq
    %v1966 = vshrl.u32 %v1965, 7
    %v1967 = vsub.s32 2, %v1966
    %v1968 = vrot.slane %v1118, %v1967
    %v1969 = vlaneseq
    %v1970 = vshrl.u32 %v1969, 7
    %v1971 = vsub.s32 3, %v1970
    %v1972 = vrot.slane %v1118, %v1971
    %v1973 = vlaneseq
    %v1974 = vshrl.u32 %v1973, 7
    %v1975 = vsub.s32 4, %v1974
    %v1976 = vrot.slane %v1118, %v1975
    %v1977 = vlaneseq
    %v1978 = vshrl.u32 %v1977, 7
    %v1979 = vsub.s32 5, %v1978
    %v1980 = vrot.slane %v1118, %v1979
    %v1981 = vlaneseq
    %v1982 = vshrl.u32 %v1981, 7
    %v1983 = vsub.s32 6, %v1982
    %v1984 = vrot.slane %v1118, %v1983
    %v1985 = vlaneseq
    %v1986 = vshrl.u32 %v1985, 7
    %v1987 = vsub.s32 7, %v1986
    %v1988 = vrot.slane %v1118, %v1987
    %v1989 = vlaneseq
    %v1990 = vshrl.u32 %v1989, 7
    %v1991 = vsub.s32 0, %v1990
    %v1992 = vrot.slane %v1119, %v1991
    %v1993 = vlaneseq
    %v1994 = vshrl.u32 %v1993, 7
    %v1995 = vsub.s32 1, %v1994
    %v1996 = vrot.slane %v1119, %v1995
    %v1997 = vlaneseq
    %v1998 = vshrl.u32 %v1997, 7
    %v1999 = vsub.s32 2, %v1998
    %v2000 = vrot.slane %v1119, %v1999
    %v2001 = vlaneseq
    %v2002 = vshrl.u32 %v2001, 7
    %v2003 = vsub.s32 3, %v2002
    %v2004 = vrot.slane %v1119, %v2003
    %v2005 = vlaneseq
    %v2006 = vshrl.u32 %v2005, 7
    %v2007 = vsub.s32 4, %v2006
    %v2008 = vrot.slane %v1119, %v2007
    %v2009 = vlaneseq
    %v2010 = vshrl.u32 %v2009, 7
    %v2011 = vsub.s32 5, %v2010
    %v2012 = vrot.slane %v1119, %v2011
    %v2013 = vlaneseq
    %v2014 = vshrl.u32 %v2013, 7
    %v2015 = vsub.s32 6, %v2014
    %v2016 = vrot.slane %v1119, %v2015
    %v2017 = vlaneseq
    %v2018 = vshrl.u32 %v2017, 7
    %v2019 = vsub.s32 7, %v2018
    %v2020 = vrot.slane %v1119, %v2019
    %v2021 = vlaneseq
    %v2022 = vshrl.u32 %v2021, 7
    %v2023 = vsub.s32 0, %v2022
    %v2024 = vrot.slane %v1120, %v2023
    %v2025 = vlaneseq
    %v2026 = vshrl.u32 %v2025, 7
    %v2027 = vsub.s32 1, %v2026
    %v2028 = vrot.slane %v1120, %v2027
    %v2029 = vlaneseq
    %v2030 = vshrl.u32 %v2029, 7
    %v2031 = vsub.s32 2, %v2030
    %v2032 = vrot.slane %v1120, %v2031
    %v2033 = vlaneseq
    %v2034 = vshrl.u32 %v2033, 7
    %v2035 = vsub.s32 3, %v2034
    %v2036 = vrot.slane %v1120, %v2035
    %v2037 = vlaneseq
    %v2038 = vshrl.u32 %v2037, 7
    %v2039 = vsub.s32 4, %v2038
    %v2040 = vrot.slane %v1120, %v2039
    %v2041 = vlaneseq
    %v2042 = vshrl.u32 %v2041, 7
    %v2043 = vsub.s32 5, %v2042
    %v2044 = vrot.slane %v1120, %v2043
    %v2045 = vlaneseq
    %v2046 = vshrl.u32 %v2045, 7
    %v2047 = vsub.s32 6, %v2046
    %v2048 = vrot.slane %v1120, %v2047
    %v2049 = vlaneseq
    %v2050 = vshrl.u32 %v2049, 7
    %v2051 = vsub.s32 7, %v2050
    %v2052 = vrot.slane %v1120, %v2051
    %v2053 = vlaneseq
    %v2054 = vshrl.u32 %v2053, 7
    %v2055 = vsub.s32 0, %v2054
    %v2056 = vrot.slane %v1121, %v2055
    %v2057 = vlaneseq
    %v2058 = vshrl.u32 %v2057, 7
    %v2059 = vsub.s32 1, %v2058
    %v2060 = vrot.slane %v1121, %v2059
    %v2061 = vlaneseq
    %v2062 = vshrl.u32 %v2061, 7
    %v2063 = vsub.s32 2, %v2062
    %v2064 = vrot.slane %v1121, %v2063
    %v2065 = vlaneseq
    %v2066 = vshrl.u32 %v2065, 7
    %v2067 = vsub.s32 3, %v2066
    %v2068 = vrot.slane %v1121, %v2067
    %v2069 = vlaneseq
    %v2070 = vshrl.u32 %v2069, 7
    %v2071 = vsub.s32 4, %v2070
    %v2072 = vrot.slane %v1121, %v2071
    %v2073 = vlaneseq
    %v2074 = vshrl.u32 %v2073, 7
    %v2075 = vsub.s32 5, %v2074
    %v2076 = vrot.slane %v1121, %v2075
    %v2077 = vlaneseq
    %v2078 = vshrl.u32 %v2077, 7
    %v2079 = vsub.s32 6, %v2078
    %v2080 = vrot.slane %v1121, %v2079
    %v2081 = vlaneseq
    %v2082 = vshrl.u32 %v2081, 7
    %v2083 = vsub.s32 7, %v2082
    %v2084 = vrot.slane %v1121, %v2083
    %v2085 = vlaneseq
    %v2086 = vshrl.u32 %v2085, 7
    %v2087 = vsub.s32 0, %v2086
    %v2088 = vrot.slane %v1122, %v2087
    %v2089 = vlaneseq
    %v2090 = vshrl.u32 %v2089, 7
    %v2091 = vsub.s32 1, %v2090
    %v2092 = vrot.slane %v1122, %v2091
    %v2093 = vlaneseq
    %v2094 = vshrl.u32 %v2093, 7
    %v2095 = vsub.s32 2, %v2094
    %v2096 = vrot.slane %v1122, %v2095
    %v2097 = vlaneseq
    %v2098 = vshrl.u32 %v2097, 7
    %v2099 = vsub.s32 3, %v2098
    %v2100 = vrot.slane %v1122, %v2099
    %v2101 = vlaneseq
    %v2102 = vshrl.u32 %v2101, 7
    %v2103 = vsub.s32 4, %v2102
    %v2104 = vrot.slane %v1122, %v2103
    %v2105 = vlaneseq
    %v2106 = vshrl.u32 %v2105, 7
    %v2107 = vsub.s32 5, %v2106
    %v2108 = vrot.slane %v1122, %v2107
    %v2109 = vlaneseq
    %v2110 = vshrl.u32 %v2109, 7
    %v2111 = vsub.s32 6, %v2110
    %v2112 = vrot.slane %v1122, %v2111
    %v2113 = vlaneseq
    %v2114 = vshrl.u32 %v2113, 7
    %v2115 = vsub.s32 7, %v2114
    %v2116 = vrot.slane %v1122, %v2115
    %v2117 = vlaneseq
    %v2118 = vshrl.u32 %v2117, 7
    %v2119 = vsub.s32 0, %v2118
    %v2120 = vrot.slane %v1123, %v2119
    %v2121 = vlaneseq
    %v2122 = vshrl.u32 %v2121, 7
    %v2123 = vsub.s32 1, %v2122
    %v2124 = vrot.slane %v1123, %v2123
    %v2125 = vlaneseq
    %v2126 = vshrl.u32 %v2125, 7
    %v2127 = vsub.s32 2, %v2126
    %v2128 = vrot.slane %v1123, %v2127
    %v2129 = vlaneseq
    %v2130 = vshrl.u32 %v2129, 7
    %v2131 = vsub.s32 3, %v2130
    %v2132 = vrot.slane %v1123, %v2131
    %v2133 = vlaneseq
    %v2134 = vshrl.u32 %v2133, 7
    %v2135 = vsub.s32 4, %v2134
    %v2136 = vrot.slane %v1123, %v2135
    %v2137 = vlaneseq
    %v2138 = vshrl.u32 %v2137, 7
    %v2139 = vsub.s32 5, %v2138
    %v2140 = vrot.slane %v1123, %v2139
    %v2141 = vlaneseq
    %v2142 = vshrl.u32 %v2141, 7
    %v2143 = vsub.s32 6, %v2142
    %v2144 = vrot.slane %v1123, %v2143
    %v2145 = vlaneseq
    %v2146 = vshrl.u32 %v2145, 7
    %v2147 = vsub.s32 7, %v2146
    %v2148 = vrot.slane %v1123, %v2147
    %v2149 = vlaneseq
    %v2150 = vshrl.u32 %v2149, 7
    %v2151 = vsub.s32 0, %v2150
    %v2152 = vrot.slane %v1124, %v2151
    %v2153 = vlaneseq
    %v2154 = vshrl.u32 %v2153, 7
    %v2155 = vsub.s32 1, %v2154
    %v2156 = vrot.slane %v1124, %v2155
    %v2157 = vlaneseq
    %v2158 = vshrl.u32 %v2157, 7
    %v2159 = vsub.s32 2, %v2158
    %v2160 = vrot.slane %v1124, %v2159
    %v2161 = vlaneseq
    %v2162 = vshrl.u32 %v2161, 7
    %v2163 = vsub.s32 3, %v2162
    %v2164 = vrot.slane %v1124, %v2163
    %v2165 = vlaneseq
    %v2166 = vshrl.u32 %v2165, 7
    %v2167 = vsub.s32 4, %v2166
    %v2168 = vrot.slane %v1124, %v2167
    %v2169 = vlaneseq
    %v2170 = vshrl.u32 %v2169, 7
    %v2171 = vsub.s32 5, %v2170
    %v2172 = vrot.slane %v1124, %v2171
    %v2173 = vlaneseq
    %v2174 = vshrl.u32 %v2173, 7
    %v2175 = vsub.s32 6, %v2174
    %v2176 = vrot.slane %v1124, %v2175
    %v2177 = vlaneseq
    %v2178 = vshrl.u32 %v2177, 7
    %v2179 = vsub.s32 7, %v2178
    %v2180 = vrot.slane %v1124, %v2179
    %v2181 = vcombine.low %v1160, %v1164
    %v2182 = vcombine.low %v1168, %v1172
    %v2183 = vcombine.low %v1176, %v1180
    %v2184 = vcombine.low %v1184, %v1188
    %v2186 = vunpack.c.l.s4 1966171168
    %v2187 = vunpack.c.0.s8 %v2186
    %v2188 = vlaneseq
    %v2189 = vshrl.u32 %v2188, 7
    %v2190 = vsub.s32 %v2187, %v2189
    %v2191 = vrot.slane %v2181, %v2190
    %v2193 = vunpack.c.l.s4 1966171168
    %v2194 = vunpack.c.0.s8 %v2193
    %v2195 = vlaneseq
    %v2196 = vshrl.u32 %v2195, 7
    %v2197 = vsub.s32 %v2194, %v2196
    %v2198 = vrot.slane %v2182, %v2197
    %v2200 = vunpack.c.l.s4 1966171168
    %v2201 = vunpack.c.0.s8 %v2200
    %v2202 = vlaneseq
    %v2203 = vshrl.u32 %v2202, 7
    %v2204 = vsub.s32 %v2201, %v2203
    %v2205 = vrot.slane %v2183, %v2204
    %v2207 = vunpack.c.l.s4 1966171168
    %v2208 = vunpack.c.0.s8 %v2207
    %v2209 = vlaneseq
    %v2210 = vshrl.u32 %v2209, 7
    %v2211 = vsub.s32 %v2208, %v2210
    %v2212 = vrot.slane %v2184, %v2211
    %v2213 = vcombine.low %v2191, %v2198
    %v2214 = vcombine.low %v2205, %v2212
    %v2216 = vunpack.c.l.s4 1966171168
    %v2217 = vunpack.c.0.s8 %v2216
    %v2218 = vlaneseq
    %v2219 = vshrl.u32 %v2218, 7
    %v2220 = vsub.s32 %v2217, %v2219
    %v2221 = vrot.slane %v2213, %v2220
    %v2223 = vunpack.c.l.s4 1966171168
    %v2224 = vunpack.c.0.s8 %v2223
    %v2225 = vlaneseq
    %v2226 = vshrl.u32 %v2225, 7
    %v2227 = vsub.s32 %v2224, %v2226
    %v2228 = vrot.slane %v2214, %v2227
    %v2229 = vcombine.low %v2221, %v2228
    %v2230 = vcombine.low %v1192, %v1196
    %v2231 = vcombine.low %v1200, %v1204
    %v2232 = vcombine.low %v1208, %v1212
    %v2233 = vcombine.low %v1216, %v1220
    %v2235 = vunpack.c.l.s4 1966171168
    %v2236 = vunpack.c.0.s8 %v2235
    %v2237 = vlaneseq
    %v2238 = vshrl.u32 %v2237, 7
    %v2239 = vsub.s32 %v2236, %v2238
    %v2240 = vrot.slane %v2230, %v2239
    %v2242 = vunpack.c.l.s4 1966171168
    %v2243 = vunpack.c.0.s8 %v2242
    %v2244 = vlaneseq
    %v2245 = vshrl.u32 %v2244, 7
    %v2246 = vsub.s32 %v2243, %v2245
    %v2247 = vrot.slane %v2231, %v2246
    %v2249 = vunpack.c.l.s4 1966171168
    %v2250 = vunpack.c.0.s8 %v2249
    %v2251 = vlaneseq
    %v2252 = vshrl.u32 %v2251, 7
    %v2253 = vsub.s32 %v2250, %v2252
    %v2254 = vrot.slane %v2232, %v2253
    %v2256 = vunpack.c.l.s4 1966171168
    %v2257 = vunpack.c.0.s8 %v2256
    %v2258 = vlaneseq
    %v2259 = vshrl.u32 %v2258, 7
    %v2260 = vsub.s32 %v2257, %v2259
    %v2261 = vrot.slane %v2233, %v2260
    %v2262 = vcombine.low %v2240, %v2247
    %v2263 = vcombine.low %v2254, %v2261
    %v2265 = vunpack.c.l.s4 1966171168
    %v2266 = vunpack.c.0.s8 %v2265
    %v2267 = vlaneseq
    %v2268 = vshrl.u32 %v2267, 7
    %v2269 = vsub.s32 %v2266, %v2268
    %v2270 = vrot.slane %v2262, %v2269
    %v2272 = vunpack.c.l.s4 1966171168
    %v2273 = vunpack.c.0.s8 %v2272
    %v2274 = vlaneseq
    %v2275 = vshrl.u32 %v2274, 7
    %v2276 = vsub.s32 %v2273, %v2275
    %v2277 = vrot.slane %v2263, %v2276
    %v2278 = vcombine.low %v2270, %v2277
    %v2279 = vcombine.low %v1224, %v1228
    %v2280 = vcombine.low %v1232, %v1236
    %v2281 = vcombine.low %v1240, %v1244
    %v2282 = vcombine.low %v1248, %v1252
    %v2284 = vunpack.c.l.s4 1966171168
    %v2285 = vunpack.c.0.s8 %v2284
    %v2286 = vlaneseq
    %v2287 = vshrl.u32 %v2286, 7
    %v2288 = vsub.s32 %v2285, %v2287
    %v2289 = vrot.slane %v2279, %v2288
    %v2291 = vunpack.c.l.s4 1966171168
    %v2292 = vunpack.c.0.s8 %v2291
    %v2293 = vlaneseq
    %v2294 = vshrl.u32 %v2293, 7
    %v2295 = vsub.s32 %v2292, %v2294
    %v2296 = vrot.slane %v2280, %v2295
    %v2298 = vunpack.c.l.s4 1966171168
    %v2299 = vunpack.c.0.s8 %v2298
    %v2300 = vlaneseq
    %v2301 = vshrl.u32 %v2300, 7
    %v2302 = vsub.s32 %v2299, %v2301
    %v2303 = vrot.slane %v2281, %v2302
    %v2305 = vunpack.c.l.s4 1966171168
    %v2306 = vunpack.c.0.s8 %v2305
    %v2307 = vlaneseq
    %v2308 = vshrl.u32 %v2307, 7
    %v2309 = vsub.s32 %v2306, %v2308
    %v2310 = vrot.slane %v2282, %v2309
    %v2311 = vcombine.low %v2289, %v2296
    %v2312 = vcombine.low %v2303, %v2310
    %v2314 = vunpack.c.l.s4 1966171168
    %v2315 = vunpack.c.0.s8 %v2314
    %v2316 = vlaneseq
    %v2317 = vshrl.u32 %v2316, 7
    %v2318 = vsub.s32 %v2315, %v2317
    %v2319 = vrot.slane %v2311, %v2318
    %v2321 = vunpack.c.l.s4 1966171168
    %v2322 = vunpack.c.0.s8 %v2321
    %v2323 = vlaneseq
    %v2324 = vshrl.u32 %v2323, 7
    %v2325 = vsub.s32 %v2322, %v2324
    %v2326 = vrot.slane %v2312, %v2325
    %v2327 = vcombine.low %v2319, %v2326
    %v2328 = vcombine.low %v1256, %v1260
    %v2329 = vcombine.low %v1264, %v1268
    %v2330 = vcombine.low %v1272, %v1276
    %v2331 = vcombine.low %v1280, %v1284
    %v2333 = vunpack.c.l.s4 1966171168
    %v2334 = vunpack.c.0.s8 %v2333
    %v2335 = vlaneseq
    %v2336 = vshrl.u32 %v2335, 7
    %v2337 = vsub.s32 %v2334, %v2336
    %v2338 = vrot.slane %v2328, %v2337
    %v2340 = vunpack.c.l.s4 1966171168
    %v2341 = vunpack.c.0.s8 %v2340
    %v2342 = vlaneseq
    %v2343 = vshrl.u32 %v2342, 7
    %v2344 = vsub.s32 %v2341, %v2343
    %v2345 = vrot.slane %v2329, %v2344
    %v2347 = vunpack.c.l.s4 1966171168
    %v2348 = vunpack.c.0.s8 %v2347
    %v2349 = vlaneseq
    %v2350 = vshrl.u32 %v2349, 7
    %v2351 = vsub.s32 %v2348, %v2350
    %v2352 = vrot.slane %v2330, %v2351
    %v2354 = vunpack.c.l.s4 1966171168
    %v2355 = vunpack.c.0.s8 %v2354
    %v2356 = vlaneseq
    %v2357 = vshrl.u32 %v2356, 7
    %v2358 = vsub.s32 %v2355, %v2357
    %v2359 = vrot.slane %v2331, %v2358
    %v2360 = vcombine.low %v2338, %v2345
    %v2361 = vcombine.low %v2352, %v2359
    %v2363 = vunpack.c.l.s4 1966171168
    %v2364 = vunpack.c.0.s8 %v2363
    %v2365 = vlaneseq
    %v2366 = vshrl.u32 %v2365, 7
    %v2367 = vsub.s32 %v2364, %v2366
    %v2368 = vrot.slane %v2360, %v2367
    %v2370 = vunpack.c.l.s4 1966171168
    %v2371 = vunpack.c.0.s8 %v2370
    %v2372 = vlaneseq
    %v2373 = vshrl.u32 %v2372, 7
    %v2374 = vsub.s32 %v2371, %v2373
    %v2375 = vrot.slane %v2361, %v2374
    %v2376 = vcombine.low %v2368, %v2375
    %v2377 = vcombine.low %v1288, %v1292
    %v2378 = vcombine.low %v1296, %v1300
    %v2379 = vcombine.low %v1304, %v1308
    %v2380 = vcombine.low %v1312, %v1316
    %v2382 = vunpack.c.l.s4 1966171168
    %v2383 = vunpack.c.0.s8 %v2382
    %v2384 = vlaneseq
    %v2385 = vshrl.u32 %v2384, 7
    %v2386 = vsub.s32 %v2383, %v2385
    %v2387 = vrot.slane %v2377, %v2386
    %v2389 = vunpack.c.l.s4 1966171168
    %v2390 = vunpack.c.0.s8 %v2389
    %v2391 = vlaneseq
    %v2392 = vshrl.u32 %v2391, 7
    %v2393 = vsub.s32 %v2390, %v2392
    %v2394 = vrot.slane %v2378, %v2393
    %v2396 = vunpack.c.l.s4 1966171168
    %v2397 = vunpack.c.0.s8 %v2396
    %v2398 = vlaneseq
    %v2399 = vshrl.u32 %v2398, 7
    %v2400 = vsub.s32 %v2397, %v2399
    %v2401 = vrot.slane %v2379, %v2400
    %v2403 = vunpack.c.l.s4 1966171168
    %v2404 = vunpack.c.0.s8 %v2403
    %v2405 = vlaneseq
    %v2406 = vshrl.u32 %v2405, 7
    %v2407 = vsub.s32 %v2404, %v2406
    %v2408 = vrot.slane %v2380, %v2407
    %v2409 = vcombine.low %v2387, %v2394
    %v2410 = vcombine.low %v2401, %v2408
    %v2412 = vunpack.c.l.s4 1966171168
    %v2413 = vunpack.c.0.s8 %v2412
    %v2414 = vlaneseq
    %v2415 = vshrl.u32 %v2414, 7
    %v2416 = vsub.s32 %v2413, %v2415
    %v2417 = vrot.slane %v2409, %v2416
    %v2419 = vunpack.c.l.s4 1966171168
    %v2420 = vunpack.c.0.s8 %v2419
    %v2421 = vlaneseq
    %v2422 = vshrl.u32 %v2421, 7
    %v2423 = vsub.s32 %v2420, %v2422
    %v2424 = vrot.slane %v2410, %v2423
    %v2425 = vcombine.low %v2417, %v2424
    %v2426 = vcombine.low %v1320, %v1324
    %v2427 = vcombine.low %v1328, %v1332
    %v2428 = vcombine.low %v1336, %v1340
    %v2429 = vcombine.low %v1344, %v1348
    %v2431 = vunpack.c.l.s4 1966171168
    %v2432 = vunpack.c.0.s8 %v2431
    %v2433 = vlaneseq
    %v2434 = vshrl.u32 %v2433, 7
    %v2435 = vsub.s32 %v2432, %v2434
    %v2436 = vrot.slane %v2426, %v2435
    %v2438 = vunpack.c.l.s4 1966171168
    %v2439 = vunpack.c.0.s8 %v2438
    %v2440 = vlaneseq
    %v2441 = vshrl.u32 %v2440, 7
    %v2442 = vsub.s32 %v2439, %v2441
    %v2443 = vrot.slane %v2427, %v2442
    %v2445 = vunpack.c.l.s4 1966171168
    %v2446 = vunpack.c.0.s8 %v2445
    %v2447 = vlaneseq
    %v2448 = vshrl.u32 %v2447, 7
    %v2449 = vsub.s32 %v2446, %v2448
    %v2450 = vrot.slane %v2428, %v2449
    %v2452 = vunpack.c.l.s4 1966171168
    %v2453 = vunpack.c.0.s8 %v2452
    %v2454 = vlaneseq
    %v2455 = vshrl.u32 %v2454, 7
    %v2456 = vsub.s32 %v2453, %v2455
    %v2457 = vrot.slane %v2429, %v2456
    %v2458 = vcombine.low %v2436, %v2443
    %v2459 = vcombine.low %v2450, %v2457
    %v2461 = vunpack.c.l.s4 1966171168
    %v2462 = vunpack.c.0.s8 %v2461
    %v2463 = vlaneseq
    %v2464 = vshrl.u32 %v2463, 7
    %v2465 = vsub.s32 %v2462, %v2464
    %v2466 = vrot.slane %v2458, %v2465
    %v2468 = vunpack.c.l.s4 1966171168
    %v2469 = vunpack.c.0.s8 %v2468
    %v2470 = vlaneseq
    %v2471 = vshrl.u32 %v2470, 7
    %v2472 = vsub.s32 %v2469, %v2471
    %v2473 = vrot.slane %v2459, %v2472
    %v2474 = vcombine.low %v2466, %v2473
    %v2475 = vcombine.low %v1352, %v1356
    %v2476 = vcombine.low %v1360, %v1364
    %v2477 = vcombine.low %v1368, %v1372
    %v2478 = vcombine.low %v1376, %v1380
    %v2480 = vunpack.c.l.s4 1966171168
    %v2481 = vunpack.c.0.s8 %v2480
    %v2482 = vlaneseq
    %v2483 = vshrl.u32 %v2482, 7
    %v2484 = vsub.s32 %v2481, %v2483
    %v2485 = vrot.slane %v2475, %v2484
    %v2487 = vunpack.c.l.s4 1966171168
    %v2488 = vunpack.c.0.s8 %v2487
    %v2489 = vlaneseq
    %v2490 = vshrl.u32 %v2489, 7
    %v2491 = vsub.s32 %v2488, %v2490
    %v2492 = vrot.slane %v2476, %v2491
    %v2494 = vunpack.c.l.s4 1966171168
    %v2495 = vunpack.c.0.s8 %v2494
    %v2496 = vlaneseq
    %v2497 = vshrl.u32 %v2496, 7
    %v2498 = vsub.s32 %v2495, %v2497
    %v2499 = vrot.slane %v2477, %v2498
    %v2501 = vunpack.c.l.s4 1966171168
    %v2502 = vunpack.c.0.s8 %v2501
    %v2503 = vlaneseq
    %v2504 = vshrl.u32 %v2503, 7
    %v2505 = vsub.s32 %v2502, %v2504
    %v2506 = vrot.slane %v2478, %v2505
    %v2507 = vcombine.low %v2485, %v2492
    %v2508 = vcombine.low %v2499, %v2506
    %v2510 = vunpack.c.l.s4 1966171168
    %v2511 = vunpack.c.0.s8 %v2510
    %v2512 = vlaneseq
    %v2513 = vshrl.u32 %v2512, 7
    %v2514 = vsub.s32 %v2511, %v2513
    %v2515 = vrot.slane %v2507, %v2514
    %v2517 = vunpack.c.l.s4 1966171168
    %v2518 = vunpack.c.0.s8 %v2517
    %v2519 = vlaneseq
    %v2520 = vshrl.u32 %v2519, 7
    %v2521 = vsub.s32 %v2518, %v2520
    %v2522 = vrot.slane %v2508, %v2521
    %v2523 = vcombine.low %v2515, %v2522
    %v2524 = vcombine.low %v1384, %v1388
    %v2525 = vcombine.low %v1392, %v1396
    %v2526 = vcombine.low %v1400, %v1404
    %v2527 = vcombine.low %v1408, %v1412
    %v2529 = vunpack.c.l.s4 1966171168
    %v2530 = vunpack.c.0.s8 %v2529
    %v2531 = vlaneseq
    %v2532 = vshrl.u32 %v2531, 7
    %v2533 = vsub.s32 %v2530, %v2532
    %v2534 = vrot.slane %v2524, %v2533
    %v2536 = vunpack.c.l.s4 1966171168
    %v2537 = vunpack.c.0.s8 %v2536
    %v2538 = vlaneseq
    %v2539 = vshrl.u32 %v2538, 7
    %v2540 = vsub.s32 %v2537, %v2539
    %v2541 = vrot.slane %v2525, %v2540
    %v2543 = vunpack.c.l.s4 1966171168
    %v2544 = vunpack.c.0.s8 %v2543
    %v2545 = vlaneseq
    %v2546 = vshrl.u32 %v2545, 7
    %v2547 = vsub.s32 %v2544, %v2546
    %v2548 = vrot.slane %v2526, %v2547
    %v2550 = vunpack.c.l.s4 1966171168
    %v2551 = vunpack.c.0.s8 %v2550
    %v2552 = vlaneseq
    %v2553 = vshrl.u32 %v2552, 7
    %v2554 = vsub.s32 %v2551, %v2553
    %v2555 = vrot.slane %v2527, %v2554
    %v2556 = vcombine.low %v2534, %v2541
    %v2557 = vcombine.low %v2548, %v2555
    %v2559 = vunpack.c.l.s4 1966171168
    %v2560 = vunpack.c.0.s8 %v2559
    %v2561 = vlaneseq
    %v2562 = vshrl.u32 %v2561, 7
    %v2563 = vsub.s32 %v2560, %v2562
    %v2564 = vrot.slane %v2556, %v2563
    %v2566 = vunpack.c.l.s4 1966171168
    %v2567 = vunpack.c.0.s8 %v2566
    %v2568 = vlaneseq
    %v2569 = vshrl.u32 %v2568, 7
    %v2570 = vsub.s32 %v2567, %v2569
    %v2571 = vrot.slane %v2557, %v2570
    %v2572 = vcombine.low %v2564, %v2571
    %v2573 = vcombine.low %v1416, %v1420
    %v2574 = vcombine.low %v1424, %v1428
    %v2575 = vcombine.low %v1432, %v1436
    %v2576 = vcombine.low %v1440, %v1444
    %v2578 = vunpack.c.l.s4 1966171168
    %v2579 = vunpack.c.0.s8 %v2578
    %v2580 = vlaneseq
    %v2581 = vshrl.u32 %v2580, 7
    %v2582 = vsub.s32 %v2579, %v2581
    %v2583 = vrot.slane %v2573, %v2582
    %v2585 = vunpack.c.l.s4 1966171168
    %v2586 = vunpack.c.0.s8 %v2585
    %v2587 = vlaneseq
    %v2588 = vshrl.u32 %v2587, 7
    %v2589 = vsub.s32 %v2586, %v2588
    %v2590 = vrot.slane %v2574, %v2589
    %v2592 = vunpack.c.l.s4 1966171168
    %v2593 = vunpack.c.0.s8 %v2592
    %v2594 = vlaneseq
    %v2595 = vshrl.u32 %v2594, 7
    %v2596 = vsub.s32 %v2593, %v2595
    %v2597 = vrot.slane %v2575, %v2596
    %v2599 = vunpack.c.l.s4 1966171168
    %v2600 = vunpack.c.0.s8 %v2599
    %v2601 = vlaneseq
    %v2602 = vshrl.u32 %v2601, 7
    %v2603 = vsub.s32 %v2600, %v2602
    %v2604 = vrot.slane %v2576, %v2603
    %v2605 = vcombine.low %v2583, %v2590
    %v2606 = vcombine.low %v2597, %v2604
    %v2608 = vunpack.c.l.s4 1966171168
    %v2609 = vunpack.c.0.s8 %v2608
    %v2610 = vlaneseq
    %v2611 = vshrl.u32 %v2610, 7
    %v2612 = vsub.s32 %v2609, %v2611
    %v2613 = vrot.slane %v2605, %v2612
    %v2615 = vunpack.c.l.s4 1966171168
    %v2616 = vunpack.c.0.s8 %v2615
    %v2617 = vlaneseq
    %v2618 = vshrl.u32 %v2617, 7
    %v2619 = vsub.s32 %v2616, %v2618
    %v2620 = vrot.slane %v2606, %v2619
    %v2621 = vcombine.low %v2613, %v2620
    %v2622 = vcombine.low %v1448, %v1452
    %v2623 = vcombine.low %v1456, %v1460
    %v2624 = vcombine.low %v1464, %v1468
    %v2625 = vcombine.low %v1472, %v1476
    %v2627 = vunpack.c.l.s4 1966171168
    %v2628 = vunpack.c.0.s8 %v2627
    %v2629 = vlaneseq
    %v2630 = vshrl.u32 %v2629, 7
    %v2631 = vsub.s32 %v2628, %v2630
    %v2632 = vrot.slane %v2622, %v2631
    %v2634 = vunpack.c.l.s4 1966171168
    %v2635 = vunpack.c.0.s8 %v2634
    %v2636 = vlaneseq
    %v2637 = vshrl.u32 %v2636, 7
    %v2638 = vsub.s32 %v2635, %v2637
    %v2639 = vrot.slane %v2623, %v2638
    %v2641 = vunpack.c.l.s4 1966171168
    %v2642 = vunpack.c.0.s8 %v2641
    %v2643 = vlaneseq
    %v2644 = vshrl.u32 %v2643, 7
    %v2645 = vsub.s32 %v2642, %v2644
    %v2646 = vrot.slane %v2624, %v2645
    %v2648 = vunpack.c.l.s4 1966171168
    %v2649 = vunpack.c.0.s8 %v2648
    %v2650 = vlaneseq
    %v2651 = vshrl.u32 %v2650, 7
    %v2652 = vsub.s32 %v2649, %v2651
    %v2653 = vrot.slane %v2625, %v2652
    %v2654 = vcombine.low %v2632, %v2639
    %v2655 = vcombine.low %v2646, %v2653
    %v2657 = vunpack.c.l.s4 1966171168
    %v2658 = vunpack.c.0.s8 %v2657
    %v2659 = vlaneseq
    %v2660 = vshrl.u32 %v2659, 7
    %v2661 = vsub.s32 %v2658, %v2660
    %v2662 = vrot.slane %v2654, %v2661
    %v2664 = vunpack.c.l.s4 1966171168
    %v2665 = vunpack.c.0.s8 %v2664
    %v2666 = vlaneseq
    %v2667 = vshrl.u32 %v2666, 7
    %v2668 = vsub.s32 %v2665, %v2667
    %v2669 = vrot.slane %v2655, %v2668
    %v2670 = vcombine.low %v2662, %v2669
    %v2671 = vcombine.low %v1480, %v1484
    %v2672 = vcombine.low %v1488, %v1492
    %v2673 = vcombine.low %v1496, %v1500
    %v2674 = vcombine.low %v1504, %v1508
    %v2676 = vunpack.c.l.s4 1966171168
    %v2677 = vunpack.c.0.s8 %v2676
    %v2678 = vlaneseq
    %v2679 = vshrl.u32 %v2678, 7
    %v2680 = vsub.s32 %v2677, %v2679
    %v2681 = vrot.slane %v2671, %v2680
    %v2683 = vunpack.c.l.s4 1966171168
    %v2684 = vunpack.c.0.s8 %v2683
    %v2685 = vlaneseq
    %v2686 = vshrl.u32 %v2685, 7
    %v2687 = vsub.s32 %v2684, %v2686
    %v2688 = vrot.slane %v2672, %v2687
    %v2690 = vunpack.c.l.s4 1966171168
    %v2691 = vunpack.c.0.s8 %v2690
    %v2692 = vlaneseq
    %v2693 = vshrl.u32 %v2692, 7
    %v2694 = vsub.s32 %v2691, %v2693
    %v2695 = vrot.slane %v2673, %v2694
    %v2697 = vunpack.c.l.s4 1966171168
    %v2698 = vunpack.c.0.s8 %v2697
    %v2699 = vlaneseq
    %v2700 = vshrl.u32 %v2699, 7
    %v2701 = vsub.s32 %v2698, %v2700
    %v2702 = vrot.slane %v2674, %v2701
    %v2703 = vcombine.low %v2681, %v2688
    %v2704 = vcombine.low %v2695, %v2702
    %v2706 = vunpack.c.l.s4 1966171168
    %v2707 = vunpack.c.0.s8 %v2706
    %v2708 = vlaneseq
    %v2709 = vshrl.u32 %v2708, 7
    %v2710 = vsub.s32 %v2707, %v2709
    %v2711 = vrot.slane %v2703, %v2710
    %v2713 = vunpack.c.l.s4 1966171168
    %v2714 = vunpack.c.0.s8 %v2713
    %v2715 = vlaneseq
    %v2716 = vshrl.u32 %v2715, 7
    %v2717 = vsub.s32 %v2714, %v2716
    %v2718 = vrot.slane %v2704, %v2717
    %v2719 = vcombine.low %v2711, %v2718
    %v2720 = vcombine.low %v1512, %v1516
    %v2721 = vcombine.low %v1520, %v1524
    %v2722 = vcombine.low %v1528, %v1532
    %v2723 = vcombine.low %v1536, %v1540
    %v2725 = vunpack.c.l.s4 1966171168
    %v2726 = vunpack.c.0.s8 %v2725
    %v2727 = vlaneseq
    %v2728 = vshrl.u32 %v2727, 7
    %v2729 = vsub.s32 %v2726, %v2728
    %v2730 = vrot.slane %v2720, %v2729
    %v2732 = vunpack.c.l.s4 1966171168
    %v2733 = vunpack.c.0.s8 %v2732
    %v2734 = vlaneseq
    %v2735 = vshrl.u32 %v2734, 7
    %v2736 = vsub.s32 %v2733, %v2735
    %v2737 = vrot.slane %v2721, %v2736
    %v2739 = vunpack.c.l.s4 1966171168
    %v2740 = vunpack.c.0.s8 %v2739
    %v2741 = vlaneseq
    %v2742 = vshrl.u32 %v2741, 7
    %v2743 = vsub.s32 %v2740, %v2742
    %v2744 = vrot.slane %v2722, %v2743
    %v2746 = vunpack.c.l.s4 1966171168
    %v2747 = vunpack.c.0.s8 %v2746
    %v2748 = vlaneseq
    %v2749 = vshrl.u32 %v2748, 7
    %v2750 = vsub.s32 %v2747, %v2749
    %v2751 = vrot.slane %v2723, %v2750
    %v2752 = vcombine.low %v2730, %v2737
    %v2753 = vcombine.low %v2744, %v2751
    %v2755 = vunpack.c.l.s4 1966171168
    %v2756 = vunpack.c.0.s8 %v2755
    %v2757 = vlaneseq
    %v2758 = vshrl.u32 %v2757, 7
    %v2759 = vsub.s32 %v2756, %v2758
    %v2760 = vrot.slane %v2752, %v2759
    %v2762 = vunpack.c.l.s4 1966171168
    %v2763 = vunpack.c.0.s8 %v2762
    %v2764 = vlaneseq
    %v2765 = vshrl.u32 %v2764, 7
    %v2766 = vsub.s32 %v2763, %v2765
    %v2767 = vrot.slane %v2753, %v2766
    %v2768 = vcombine.low %v2760, %v2767
    %v2769 = vcombine.low %v1544, %v1548
    %v2770 = vcombine.low %v1552, %v1556
    %v2771 = vcombine.low %v1560, %v1564
    %v2772 = vcombine.low %v1568, %v1572
    %v2774 = vunpack.c.l.s4 1966171168
    %v2775 = vunpack.c.0.s8 %v2774
    %v2776 = vlaneseq
    %v2777 = vshrl.u32 %v2776, 7
    %v2778 = vsub.s32 %v2775, %v2777
    %v2779 = vrot.slane %v2769, %v2778
    %v2781 = vunpack.c.l.s4 1966171168
    %v2782 = vunpack.c.0.s8 %v2781
    %v2783 = vlaneseq
    %v2784 = vshrl.u32 %v2783, 7
    %v2785 = vsub.s32 %v2782, %v2784
    %v2786 = vrot.slane %v2770, %v2785
    %v2788 = vunpack.c.l.s4 1966171168
    %v2789 = vunpack.c.0.s8 %v2788
    %v2790 = vlaneseq
    %v2791 = vshrl.u32 %v2790, 7
    %v2792 = vsub.s32 %v2789, %v2791
    %v2793 = vrot.slane %v2771, %v2792
    %v2795 = vunpack.c.l.s4 1966171168
    %v2796 = vunpack.c.0.s8 %v2795
    %v2797 = vlaneseq
    %v2798 = vshrl.u32 %v2797, 7
    %v2799 = vsub.s32 %v2796, %v2798
    %v2800 = vrot.slane %v2772, %v2799
    %v2801 = vcombine.low %v2779, %v2786
    %v2802 = vcombine.low %v2793, %v2800
    %v2804 = vunpack.c.l.s4 1966171168
    %v2805 = vunpack.c.0.s8 %v2804
    %v2806 = vlaneseq
    %v2807 = vshrl.u32 %v2806, 7
    %v2808 = vsub.s32 %v2805, %v2807
    %v2809 = vrot.slane %v2801, %v2808
    %v2811 = vunpack.c.l.s4 1966171168
    %v2812 = vunpack.c.0.s8 %v2811
    %v2813 = vlaneseq
    %v2814 = vshrl.u32 %v2813, 7
    %v2815 = vsub.s32 %v2812, %v2814
    %v2816 = vrot.slane %v2802, %v2815
    %v2817 = vcombine.low %v2809, %v2816
    %v2818 = vcombine.low %v1576, %v1580
    %v2819 = vcombine.low %v1584, %v1588
    %v2820 = vcombine.low %v1592, %v1596
    %v2821 = vcombine.low %v1600, %v1604
    %v2823 = vunpack.c.l.s4 1966171168
    %v2824 = vunpack.c.0.s8 %v2823
    %v2825 = vlaneseq
    %v2826 = vshrl.u32 %v2825, 7
    %v2827 = vsub.s32 %v2824, %v2826
    %v2828 = vrot.slane %v2818, %v2827
    %v2830 = vunpack.c.l.s4 1966171168
    %v2831 = vunpack.c.0.s8 %v2830
    %v2832 = vlaneseq
    %v2833 = vshrl.u32 %v2832, 7
    %v2834 = vsub.s32 %v2831, %v2833
    %v2835 = vrot.slane %v2819, %v2834
    %v2837 = vunpack.c.l.s4 1966171168
    %v2838 = vunpack.c.0.s8 %v2837
    %v2839 = vlaneseq
    %v2840 = vshrl.u32 %v2839, 7
    %v2841 = vsub.s32 %v2838, %v2840
    %v2842 = vrot.slane %v2820, %v2841
    %v2844 = vunpack.c.l.s4 1966171168
    %v2845 = vunpack.c.0.s8 %v2844
    %v2846 = vlaneseq
    %v2847 = vshrl.u32 %v2846, 7
    %v2848 = vsub.s32 %v2845, %v2847
    %v2849 = vrot.slane %v2821, %v2848
    %v2850 = vcombine.low %v2828, %v2835
    %v2851 = vcombine.low %v2842, %v2849
    %v2853 = vunpack.c.l.s4 1966171168
    %v2854 = vunpack.c.0.s8 %v2853
    %v2855 = vlaneseq
    %v2856 = vshrl.u32 %v2855, 7
    %v2857 = vsub.s32 %v2854, %v2856
    %v2858 = vrot.slane %v2850, %v2857
    %v2860 = vunpack.c.l.s4 1966171168
    %v2861 = vunpack.c.0.s8 %v2860
    %v2862 = vlaneseq
    %v2863 = vshrl.u32 %v2862, 7
    %v2864 = vsub.s32 %v2861, %v2863
    %v2865 = vrot.slane %v2851, %v2864
    %v2866 = vcombine.low %v2858, %v2865
    %v2867 = vcombine.low %v1608, %v1612
    %v2868 = vcombine.low %v1616, %v1620
    %v2869 = vcombine.low %v1624, %v1628
    %v2870 = vcombine.low %v1632, %v1636
    %v2872 = vunpack.c.l.s4 1966171168
    %v2873 = vunpack.c.0.s8 %v2872
    %v2874 = vlaneseq
    %v2875 = vshrl.u32 %v2874, 7
    %v2876 = vsub.s32 %v2873, %v2875
    %v2877 = vrot.slane %v2867, %v2876
    %v2879 = vunpack.c.l.s4 1966171168
    %v2880 = vunpack.c.0.s8 %v2879
    %v2881 = vlaneseq
    %v2882 = vshrl.u32 %v2881, 7
    %v2883 = vsub.s32 %v2880, %v2882
    %v2884 = vrot.slane %v2868, %v2883
    %v2886 = vunpack.c.l.s4 1966171168
    %v2887 = vunpack.c.0.s8 %v2886
    %v2888 = vlaneseq
    %v2889 = vshrl.u32 %v2888, 7
    %v2890 = vsub.s32 %v2887, %v2889
    %v2891 = vrot.slane %v2869, %v2890
    %v2893 = vunpack.c.l.s4 1966171168
    %v2894 = vunpack.c.0.s8 %v2893
    %v2895 = vlaneseq
    %v2896 = vshrl.u32 %v2895, 7
    %v2897 = vsub.s32 %v2894, %v2896
    %v2898 = vrot.slane %v2870, %v2897
    %v2899 = vcombine.low %v2877, %v2884
    %v2900 = vcombine.low %v2891, %v2898
    %v2902 = vunpack.c.l.s4 1966171168
    %v2903 = vunpack.c.0.s8 %v2902
    %v2904 = vlaneseq
    %v2905 = vshrl.u32 %v2904, 7
    %v2906 = vsub.s32 %v2903, %v2905
    %v2907 = vrot.slane %v2899, %v2906
    %v2909 = vunpack.c.l.s4 1966171168
    %v2910 = vunpack.c.0.s8 %v2909
    %v2911 = vlaneseq
    %v2912 = vshrl.u32 %v2911, 7
    %v2913 = vsub.s32 %v2910, %v2912
    %v2914 = vrot.slane %v2900, %v2913
    %v2915 = vcombine.low %v2907, %v2914
    %v2916 = vcombine.low %v1640, %v1644
    %v2917 = vcombine.low %v1648, %v1652
    %v2918 = vcombine.low %v1656, %v1660
    %v2919 = vcombine.low %v1664, %v1668
    %v2921 = vunpack.c.l.s4 1966171168
    %v2922 = vunpack.c.0.s8 %v2921
    %v2923 = vlaneseq
    %v2924 = vshrl.u32 %v2923, 7
    %v2925 = vsub.s32 %v2922, %v2924
    %v2926 = vrot.slane %v2916, %v2925
    %v2928 = vunpack.c.l.s4 1966171168
    %v2929 = vunpack.c.0.s8 %v2928
    %v2930 = vlaneseq
    %v2931 = vshrl.u32 %v2930, 7
    %v2932 = vsub.s32 %v2929, %v2931
    %v2933 = vrot.slane %v2917, %v2932
    %v2935 = vunpack.c.l.s4 1966171168
    %v2936 = vunpack.c.0.s8 %v2935
    %v2937 = vlaneseq
    %v2938 = vshrl.u32 %v2937, 7
    %v2939 = vsub.s32 %v2936, %v2938
    %v2940 = vrot.slane %v2918, %v2939
    %v2942 = vunpack.c.l.s4 1966171168
    %v2943 = vunpack.c.0.s8 %v2942
    %v2944 = vlaneseq
    %v2945 = vshrl.u32 %v2944, 7
    %v2946 = vsub.s32 %v2943, %v2945
    %v2947 = vrot.slane %v2919, %v2946
    %v2948 = vcombine.low %v2926, %v2933
    %v2949 = vcombine.low %v2940, %v2947
    %v2951 = vunpack.c.l.s4 1966171168
    %v2952 = vunpack.c.0.s8 %v2951
    %v2953 = vlaneseq
    %v2954 = vshrl.u32 %v2953, 7
    %v2955 = vsub.s32 %v2952, %v2954
    %v2956 = vrot.slane %v2948, %v2955
    %v2958 = vunpack.c.l.s4 1966171168
    %v2959 = vunpack.c.0.s8 %v2958
    %v2960 = vlaneseq
    %v2961 = vshrl.u32 %v2960, 7
    %v2962 = vsub.s32 %v2959, %v2961
    %v2963 = vrot.slane %v2949, %v2962
    %v2964 = vcombine.low %v2956, %v2963
    %v2965 = vcombine.low %v1672, %v1676
    %v2966 = vcombine.low %v1680, %v1684
    %v2967 = vcombine.low %v1688, %v1692
    %v2968 = vcombine.low %v1696, %v1700
    %v2970 = vunpack.c.l.s4 1966171168
    %v2971 = vunpack.c.0.s8 %v2970
    %v2972 = vlaneseq
    %v2973 = vshrl.u32 %v2972, 7
    %v2974 = vsub.s32 %v2971, %v2973
    %v2975 = vrot.slane %v2965, %v2974
    %v2977 = vunpack.c.l.s4 1966171168
    %v2978 = vunpack.c.0.s8 %v2977
    %v2979 = vlaneseq
    %v2980 = vshrl.u32 %v2979, 7
    %v2981 = vsub.s32 %v2978, %v2980
    %v2982 = vrot.slane %v2966, %v2981
    %v2984 = vunpack.c.l.s4 1966171168
    %v2985 = vunpack.c.0.s8 %v2984
    %v2986 = vlaneseq
    %v2987 = vshrl.u32 %v2986, 7
    %v2988 = vsub.s32 %v2985, %v2987
    %v2989 = vrot.slane %v2967, %v2988
    %v2991 = vunpack.c.l.s4 1966171168
    %v2992 = vunpack.c.0.s8 %v2991
    %v2993 = vlaneseq
    %v2994 = vshrl.u32 %v2993, 7
    %v2995 = vsub.s32 %v2992, %v2994
    %v2996 = vrot.slane %v2968, %v2995
    %v2997 = vcombine.low %v2975, %v2982
    %v2998 = vcombine.low %v2989, %v2996
    %v3000 = vunpack.c.l.s4 1966171168
    %v3001 = vunpack.c.0.s8 %v3000
    %v3002 = vlaneseq
    %v3003 = vshrl.u32 %v3002, 7
    %v3004 = vsub.s32 %v3001, %v3003
    %v3005 = vrot.slane %v2997, %v3004
    %v3007 = vunpack.c.l.s4 1966171168
    %v3008 = vunpack.c.0.s8 %v3007
    %v3009 = vlaneseq
    %v3010 = vshrl.u32 %v3009, 7
    %v3011 = vsub.s32 %v3008, %v3010
    %v3012 = vrot.slane %v2998, %v3011
    %v3013 = vcombine.low %v3005, %v3012
    %v3014 = vcombine.low %v1704, %v1708
    %v3015 = vcombine.low %v1712, %v1716
    %v3016 = vcombine.low %v1720, %v1724
    %v3017 = vcombine.low %v1728, %v1732
    %v3019 = vunpack.c.l.s4 1966171168
    %v3020 = vunpack.c.0.s8 %v3019
    %v3021 = vlaneseq
    %v3022 = vshrl.u32 %v3021, 7
    %v3023 = vsub.s32 %v3020, %v3022
    %v3024 = vrot.slane %v3014, %v3023
    %v3026 = vunpack.c.l.s4 1966171168
    %v3027 = vunpack.c.0.s8 %v3026
    %v3028 = vlaneseq
    %v3029 = vshrl.u32 %v3028, 7
    %v3030 = vsub.s32 %v3027, %v3029
    %v3031 = vrot.slane %v3015, %v3030
    %v3033 = vunpack.c.l.s4 1966171168
    %v3034 = vunpack.c.0.s8 %v3033
    %v3035 = vlaneseq
    %v3036 = vshrl.u32 %v3035, 7
    %v3037 = vsub.s32 %v3034, %v3036
    %v3038 = vrot.slane %v3016, %v3037
    %v3040 = vunpack.c.l.s4 1966171168
    %v3041 = vunpack.c.0.s8 %v3040
    %v3042 = vlaneseq
    %v3043 = vshrl.u32 %v3042, 7
    %v3044 = vsub.s32 %v3041, %v3043
    %v3045 = vrot.slane %v3017, %v3044
    %v3046 = vcombine.low %v3024, %v3031
    %v3047 = vcombine.low %v3038, %v3045
    %v3049 = vunpack.c.l.s4 1966171168
    %v3050 = vunpack.c.0.s8 %v3049
    %v3051 = vlaneseq
    %v3052 = vshrl.u32 %v3051, 7
    %v3053 = vsub.s32 %v3050, %v3052
    %v3054 = vrot.slane %v3046, %v3053
    %v3056 = vunpack.c.l.s4 1966171168
    %v3057 = vunpack.c.0.s8 %v3056
    %v3058 = vlaneseq
    %v3059 = vshrl.u32 %v3058, 7
    %v3060 = vsub.s32 %v3057, %v3059
    %v3061 = vrot.slane %v3047, %v3060
    %v3062 = vcombine.low %v3054, %v3061
    %v3063 = vcombine.low %v1736, %v1740
    %v3064 = vcombine.low %v1744, %v1748
    %v3065 = vcombine.low %v1752, %v1756
    %v3066 = vcombine.low %v1760, %v1764
    %v3068 = vunpack.c.l.s4 1966171168
    %v3069 = vunpack.c.0.s8 %v3068
    %v3070 = vlaneseq
    %v3071 = vshrl.u32 %v3070, 7
    %v3072 = vsub.s32 %v3069, %v3071
    %v3073 = vrot.slane %v3063, %v3072
    %v3075 = vunpack.c.l.s4 1966171168
    %v3076 = vunpack.c.0.s8 %v3075
    %v3077 = vlaneseq
    %v3078 = vshrl.u32 %v3077, 7
    %v3079 = vsub.s32 %v3076, %v3078
    %v3080 = vrot.slane %v3064, %v3079
    %v3082 = vunpack.c.l.s4 1966171168
    %v3083 = vunpack.c.0.s8 %v3082
    %v3084 = vlaneseq
    %v3085 = vshrl.u32 %v3084, 7
    %v3086 = vsub.s32 %v3083, %v3085
    %v3087 = vrot.slane %v3065, %v3086
    %v3089 = vunpack.c.l.s4 1966171168
    %v3090 = vunpack.c.0.s8 %v3089
    %v3091 = vlaneseq
    %v3092 = vshrl.u32 %v3091, 7
    %v3093 = vsub.s32 %v3090, %v3092
    %v3094 = vrot.slane %v3066, %v3093
    %v3095 = vcombine.low %v3073, %v3080
    %v3096 = vcombine.low %v3087, %v3094
    %v3098 = vunpack.c.l.s4 1966171168
    %v3099 = vunpack.c.0.s8 %v3098
    %v3100 = vlaneseq
    %v3101 = vshrl.u32 %v3100, 7
    %v3102 = vsub.s32 %v3099, %v3101
    %v3103 = vrot.slane %v3095, %v3102
    %v3105 = vunpack.c.l.s4 1966171168
    %v3106 = vunpack.c.0.s8 %v3105
    %v3107 = vlaneseq
    %v3108 = vshrl.u32 %v3107, 7
    %v3109 = vsub.s32 %v3106, %v3108
    %v3110 = vrot.slane %v3096, %v3109
    %v3111 = vcombine.low %v3103, %v3110
    %v3112 = vcombine.low %v1768, %v1772
    %v3113 = vcombine.low %v1776, %v1780
    %v3114 = vcombine.low %v1784, %v1788
    %v3115 = vcombine.low %v1792, %v1796
    %v3117 = vunpack.c.l.s4 1966171168
    %v3118 = vunpack.c.0.s8 %v3117
    %v3119 = vlaneseq
    %v3120 = vshrl.u32 %v3119, 7
    %v3121 = vsub.s32 %v3118, %v3120
    %v3122 = vrot.slane %v3112, %v3121
    %v3124 = vunpack.c.l.s4 1966171168
    %v3125 = vunpack.c.0.s8 %v3124
    %v3126 = vlaneseq
    %v3127 = vshrl.u32 %v3126, 7
    %v3128 = vsub.s32 %v3125, %v3127
    %v3129 = vrot.slane %v3113, %v3128
    %v3131 = vunpack.c.l.s4 1966171168
    %v3132 = vunpack.c.0.s8 %v3131
    %v3133 = vlaneseq
    %v3134 = vshrl.u32 %v3133, 7
    %v3135 = vsub.s32 %v3132, %v3134
    %v3136 = vrot.slane %v3114, %v3135
    %v3138 = vunpack.c.l.s4 1966171168
    %v3139 = vunpack.c.0.s8 %v3138
    %v3140 = vlaneseq
    %v3141 = vshrl.u32 %v3140, 7
    %v3142 = vsub.s32 %v3139, %v3141
    %v3143 = vrot.slane %v3115, %v3142
    %v3144 = vcombine.low %v3122, %v3129
    %v3145 = vcombine.low %v3136, %v3143
    %v3147 = vunpack.c.l.s4 1966171168
    %v3148 = vunpack.c.0.s8 %v3147
    %v3149 = vlaneseq
    %v3150 = vshrl.u32 %v3149, 7
    %v3151 = vsub.s32 %v3148, %v3150
    %v3152 = vrot.slane %v3144, %v3151
    %v3154 = vunpack.c.l.s4 1966171168
    %v3155 = vunpack.c.0.s8 %v3154
    %v3156 = vlaneseq
    %v3157 = vshrl.u32 %v3156, 7
    %v3158 = vsub.s32 %v3155, %v3157
    %v3159 = vrot.slane %v3145, %v3158
    %v3160 = vcombine.low %v3152, %v3159
    %v3161 = vcombine.low %v1800, %v1804
    %v3162 = vcombine.low %v1808, %v1812
    %v3163 = vcombine.low %v1816, %v1820
    %v3164 = vcombine.low %v1824, %v1828
    %v3166 = vunpack.c.l.s4 1966171168
    %v3167 = vunpack.c.0.s8 %v3166
    %v3168 = vlaneseq
    %v3169 = vshrl.u32 %v3168, 7
    %v3170 = vsub.s32 %v3167, %v3169
    %v3171 = vrot.slane %v3161, %v3170
    %v3173 = vunpack.c.l.s4 1966171168
    %v3174 = vunpack.c.0.s8 %v3173
    %v3175 = vlaneseq
    %v3176 = vshrl.u32 %v3175, 7
    %v3177 = vsub.s32 %v3174, %v3176
    %v3178 = vrot.slane %v3162, %v3177
    %v3180 = vunpack.c.l.s4 1966171168
    %v3181 = vunpack.c.0.s8 %v3180
    %v3182 = vlaneseq
    %v3183 = vshrl.u32 %v3182, 7
    %v3184 = vsub.s32 %v3181, %v3183
    %v3185 = vrot.slane %v3163, %v3184
    %v3187 = vunpack.c.l.s4 1966171168
    %v3188 = vunpack.c.0.s8 %v3187
    %v3189 = vlaneseq
    %v3190 = vshrl.u32 %v3189, 7
    %v3191 = vsub.s32 %v3188, %v3190
    %v3192 = vrot.slane %v3164, %v3191
    %v3193 = vcombine.low %v3171, %v3178
    %v3194 = vcombine.low %v3185, %v3192
    %v3196 = vunpack.c.l.s4 1966171168
    %v3197 = vunpack.c.0.s8 %v3196
    %v3198 = vlaneseq
    %v3199 = vshrl.u32 %v3198, 7
    %v3200 = vsub.s32 %v3197, %v3199
    %v3201 = vrot.slane %v3193, %v3200
    %v3203 = vunpack.c.l.s4 1966171168
    %v3204 = vunpack.c.0.s8 %v3203
    %v3205 = vlaneseq
    %v3206 = vshrl.u32 %v3205, 7
    %v3207 = vsub.s32 %v3204, %v3206
    %v3208 = vrot.slane %v3194, %v3207
    %v3209 = vcombine.low %v3201, %v3208
    %v3210 = vcombine.low %v1832, %v1836
    %v3211 = vcombine.low %v1840, %v1844
    %v3212 = vcombine.low %v1848, %v1852
    %v3213 = vcombine.low %v1856, %v1860
    %v3215 = vunpack.c.l.s4 1966171168
    %v3216 = vunpack.c.0.s8 %v3215
    %v3217 = vlaneseq
    %v3218 = vshrl.u32 %v3217, 7
    %v3219 = vsub.s32 %v3216, %v3218
    %v3220 = vrot.slane %v3210, %v3219
    %v3222 = vunpack.c.l.s4 1966171168
    %v3223 = vunpack.c.0.s8 %v3222
    %v3224 = vlaneseq
    %v3225 = vshrl.u32 %v3224, 7
    %v3226 = vsub.s32 %v3223, %v3225
    %v3227 = vrot.slane %v3211, %v3226
    %v3229 = vunpack.c.l.s4 1966171168
    %v3230 = vunpack.c.0.s8 %v3229
    %v3231 = vlaneseq
    %v3232 = vshrl.u32 %v3231, 7
    %v3233 = vsub.s32 %v3230, %v3232
    %v3234 = vrot.slane %v3212, %v3233
    %v3236 = vunpack.c.l.s4 1966171168
    %v3237 = vunpack.c.0.s8 %v3236
    %v3238 = vlaneseq
    %v3239 = vshrl.u32 %v3238, 7
    %v3240 = vsub.s32 %v3237, %v3239
    %v3241 = vrot.slane %v3213, %v3240
    %v3242 = vcombine.low %v3220, %v3227
    %v3243 = vcombine.low %v3234, %v3241
    %v3245 = vunpack.c.l.s4 1966171168
    %v3246 = vunpack.c.0.s8 %v3245
    %v3247 = vlaneseq
    %v3248 = vshrl.u32 %v3247, 7
    %v3249 = vsub.s32 %v3246, %v3248
    %v3250 = vrot.slane %v3242, %v3249
    %v3252 = vunpack.c.l.s4 1966171168
    %v3253 = vunpack.c.0.s8 %v3252
    %v3254 = vlaneseq
    %v3255 = vshrl.u32 %v3254, 7
    %v3256 = vsub.s32 %v3253, %v3255
    %v3257 = vrot.slane %v3243, %v3256
    %v3258 = vcombine.low %v3250, %v3257
    %v3259 = vcombine.low %v1864, %v1868
    %v3260 = vcombine.low %v1872, %v1876
    %v3261 = vcombine.low %v1880, %v1884
    %v3262 = vcombine.low %v1888, %v1892
    %v3264 = vunpack.c.l.s4 1966171168
    %v3265 = vunpack.c.0.s8 %v3264
    %v3266 = vlaneseq
    %v3267 = vshrl.u32 %v3266, 7
    %v3268 = vsub.s32 %v3265, %v3267
    %v3269 = vrot.slane %v3259, %v3268
    %v3271 = vunpack.c.l.s4 1966171168
    %v3272 = vunpack.c.0.s8 %v3271
    %v3273 = vlaneseq
    %v3274 = vshrl.u32 %v3273, 7
    %v3275 = vsub.s32 %v3272, %v3274
    %v3276 = vrot.slane %v3260, %v3275
    %v3278 = vunpack.c.l.s4 1966171168
    %v3279 = vunpack.c.0.s8 %v3278
    %v3280 = vlaneseq
    %v3281 = vshrl.u32 %v3280, 7
    %v3282 = vsub.s32 %v3279, %v3281
    %v3283 = vrot.slane %v3261, %v3282
    %v3285 = vunpack.c.l.s4 1966171168
    %v3286 = vunpack.c.0.s8 %v3285
    %v3287 = vlaneseq
    %v3288 = vshrl.u32 %v3287, 7
    %v3289 = vsub.s32 %v3286, %v3288
    %v3290 = vrot.slane %v3262, %v3289
    %v3291 = vcombine.low %v3269, %v3276
    %v3292 = vcombine.low %v3283, %v3290
    %v3294 = vunpack.c.l.s4 1966171168
    %v3295 = vunpack.c.0.s8 %v3294
    %v3296 = vlaneseq
    %v3297 = vshrl.u32 %v3296, 7
    %v3298 = vsub.s32 %v3295, %v3297
    %v3299 = vrot.slane %v3291, %v3298
    %v3301 = vunpack.c.l.s4 1966171168
    %v3302 = vunpack.c.0.s8 %v3301
    %v3303 = vlaneseq
    %v3304 = vshrl.u32 %v3303, 7
    %v3305 = vsub.s32 %v3302, %v3304
    %v3306 = vrot.slane %v3292, %v3305
    %v3307 = vcombine.low %v3299, %v3306
    %v3308 = vcombine.low %v1896, %v1900
    %v3309 = vcombine.low %v1904, %v1908
    %v3310 = vcombine.low %v1912, %v1916
    %v3311 = vcombine.low %v1920, %v1924
    %v3313 = vunpack.c.l.s4 1966171168
    %v3314 = vunpack.c.0.s8 %v3313
    %v3315 = vlaneseq
    %v3316 = vshrl.u32 %v3315, 7
    %v3317 = vsub.s32 %v3314, %v3316
    %v3318 = vrot.slane %v3308, %v3317
    %v3320 = vunpack.c.l.s4 1966171168
    %v3321 = vunpack.c.0.s8 %v3320
    %v3322 = vlaneseq
    %v3323 = vshrl.u32 %v3322, 7
    %v3324 = vsub.s32 %v3321, %v3323
    %v3325 = vrot.slane %v3309, %v3324
    %v3327 = vunpack.c.l.s4 1966171168
    %v3328 = vunpack.c.0.s8 %v3327
    %v3329 = vlaneseq
    %v3330 = vshrl.u32 %v3329, 7
    %v3331 = vsub.s32 %v3328, %v3330
    %v3332 = vrot.slane %v3310, %v3331
    %v3334 = vunpack.c.l.s4 1966171168
    %v3335 = vunpack.c.0.s8 %v3334
    %v3336 = vlaneseq
    %v3337 = vshrl.u32 %v3336, 7
    %v3338 = vsub.s32 %v3335, %v3337
    %v3339 = vrot.slane %v3311, %v3338
    %v3340 = vcombine.low %v3318, %v3325
    %v3341 = vcombine.low %v3332, %v3339
    %v3343 = vunpack.c.l.s4 1966171168
    %v3344 = vunpack.c.0.s8 %v3343
    %v3345 = vlaneseq
    %v3346 = vshrl.u32 %v3345, 7
    %v3347 = vsub.s32 %v3344, %v3346
    %v3348 = vrot.slane %v3340, %v3347
    %v3350 = vunpack.c.l.s4 1966171168
    %v3351 = vunpack.c.0.s8 %v3350
    %v3352 = vlaneseq
    %v3353 = vshrl.u32 %v3352, 7
    %v3354 = vsub.s32 %v3351, %v3353
    %v3355 = vrot.slane %v3341, %v3354
    %v3356 = vcombine.low %v3348, %v3355
    %v3357 = vcombine.low %v1928, %v1932
    %v3358 = vcombine.low %v1936, %v1940
    %v3359 = vcombine.low %v1944, %v1948
    %v3360 = vcombine.low %v1952, %v1956
    %v3362 = vunpack.c.l.s4 1966171168
    %v3363 = vunpack.c.0.s8 %v3362
    %v3364 = vlaneseq
    %v3365 = vshrl.u32 %v3364, 7
    %v3366 = vsub.s32 %v3363, %v3365
    %v3367 = vrot.slane %v3357, %v3366
    %v3369 = vunpack.c.l.s4 1966171168
    %v3370 = vunpack.c.0.s8 %v3369
    %v3371 = vlaneseq
    %v3372 = vshrl.u32 %v3371, 7
    %v3373 = vsub.s32 %v3370, %v3372
    %v3374 = vrot.slane %v3358, %v3373
    %v3376 = vunpack.c.l.s4 1966171168
    %v3377 = vunpack.c.0.s8 %v3376
    %v3378 = vlaneseq
    %v3379 = vshrl.u32 %v3378, 7
    %v3380 = vsub.s32 %v3377, %v3379
    %v3381 = vrot.slane %v3359, %v3380
    %v3383 = vunpack.c.l.s4 1966171168
    %v3384 = vunpack.c.0.s8 %v3383
    %v3385 = vlaneseq
    %v3386 = vshrl.u32 %v3385, 7
    %v3387 = vsub.s32 %v3384, %v3386
    %v3388 = vrot.slane %v3360, %v3387
    %v3389 = vcombine.low %v3367, %v3374
    %v3390 = vcombine.low %v3381, %v3388
    %v3392 = vunpack.c.l.s4 1966171168
    %v3393 = vunpack.c.0.s8 %v3392
    %v3394 = vlaneseq
    %v3395 = vshrl.u32 %v3394, 7
    %v3396 = vsub.s32 %v3393, %v3395
    %v3397 = vrot.slane %v3389, %v3396
    %v3399 = vunpack.c.l.s4 1966171168
    %v3400 = vunpack.c.0.s8 %v3399
    %v3401 = vlaneseq
    %v3402 = vshrl.u32 %v3401, 7
    %v3403 = vsub.s32 %v3400, %v3402
    %v3404 = vrot.slane %v3390, %v3403
    %v3405 = vcombine.low %v3397, %v3404
    %v3406 = vcombine.low %v1960, %v1964
    %v3407 = vcombine.low %v1968, %v1972
    %v3408 = vcombine.low %v1976, %v1980
    %v3409 = vcombine.low %v1984, %v1988
    %v3411 = vunpack.c.l.s4 1966171168
    %v3412 = vunpack.c.0.s8 %v3411
    %v3413 = vlaneseq
    %v3414 = vshrl.u32 %v3413, 7
    %v3415 = vsub.s32 %v3412, %v3414
    %v3416 = vrot.slane %v3406, %v3415
    %v3418 = vunpack.c.l.s4 1966171168
    %v3419 = vunpack.c.0.s8 %v3418
    %v3420 = vlaneseq
    %v3421 = vshrl.u32 %v3420, 7
    %v3422 = vsub.s32 %v3419, %v3421
    %v3423 = vrot.slane %v3407, %v3422
    %v3425 = vunpack.c.l.s4 1966171168
    %v3426 = vunpack.c.0.s8 %v3425
    %v3427 = vlaneseq
    %v3428 = vshrl.u32 %v3427, 7
    %v3429 = vsub.s32 %v3426, %v3428
    %v3430 = vrot.slane %v3408, %v3429
    %v3432 = vunpack.c.l.s4 1966171168
    %v3433 = vunpack.c.0.s8 %v3432
    %v3434 = vlaneseq
    %v3435 = vshrl.u32 %v3434, 7
    %v3436 = vsub.s32 %v3433, %v3435
    %v3437 = vrot.slane %v3409, %v3436
    %v3438 = vcombine.low %v3416, %v3423
    %v3439 = vcombine.low %v3430, %v3437
    %v3441 = vunpack.c.l.s4 1966171168
    %v3442 = vunpack.c.0.s8 %v3441
    %v3443 = vlaneseq
    %v3444 = vshrl.u32 %v3443, 7
    %v3445 = vsub.s32 %v3442, %v3444
    %v3446 = vrot.slane %v3438, %v3445
    %v3448 = vunpack.c.l.s4 1966171168
    %v3449 = vunpack.c.0.s8 %v3448
    %v3450 = vlaneseq
    %v3451 = vshrl.u32 %v3450, 7
    %v3452 = vsub.s32 %v3449, %v3451
    %v3453 = vrot.slane %v3439, %v3452
    %v3454 = vcombine.low %v3446, %v3453
    %v3455 = vcombine.low %v1992, %v1996
    %v3456 = vcombine.low %v2000, %v2004
    %v3457 = vcombine.low %v2008, %v2012
    %v3458 = vcombine.low %v2016, %v2020
    %v3460 = vunpack.c.l.s4 1966171168
    %v3461 = vunpack.c.0.s8 %v3460
    %v3462 = vlaneseq
    %v3463 = vshrl.u32 %v3462, 7
    %v3464 = vsub.s32 %v3461, %v3463
    %v3465 = vrot.slane %v3455, %v3464
    %v3467 = vunpack.c.l.s4 1966171168
    %v3468 = vunpack.c.0.s8 %v3467
    %v3469 = vlaneseq
    %v3470 = vshrl.u32 %v3469, 7
    %v3471 = vsub.s32 %v3468, %v3470
    %v3472 = vrot.slane %v3456, %v3471
    %v3474 = vunpack.c.l.s4 1966171168
    %v3475 = vunpack.c.0.s8 %v3474
    %v3476 = vlaneseq
    %v3477 = vshrl.u32 %v3476, 7
    %v3478 = vsub.s32 %v3475, %v3477
    %v3479 = vrot.slane %v3457, %v3478
    %v3481 = vunpack.c.l.s4 1966171168
    %v3482 = vunpack.c.0.s8 %v3481
    %v3483 = vlaneseq
    %v3484 = vshrl.u32 %v3483, 7
    %v3485 = vsub.s32 %v3482, %v3484
    %v3486 = vrot.slane %v3458, %v3485
    %v3487 = vcombine.low %v3465, %v3472
    %v3488 = vcombine.low %v3479, %v3486
    %v3490 = vunpack.c.l.s4 1966171168
    %v3491 = vunpack.c.0.s8 %v3490
    %v3492 = vlaneseq
    %v3493 = vshrl.u32 %v3492, 7
    %v3494 = vsub.s32 %v3491, %v3493
    %v3495 = vrot.slane %v3487, %v3494
    %v3497 = vunpack.c.l.s4 1966171168
    %v3498 = vunpack.c.0.s8 %v3497
    %v3499 = vlaneseq
    %v3500 = vshrl.u32 %v3499, 7
    %v3501 = vsub.s32 %v3498, %v3500
    %v3502 = vrot.slane %v3488, %v3501
    %v3503 = vcombine.low %v3495, %v3502
    %v3504 = vcombine.low %v2024, %v2028
    %v3505 = vcombine.low %v2032, %v2036
    %v3506 = vcombine.low %v2040, %v2044
    %v3507 = vcombine.low %v2048, %v2052
    %v3509 = vunpack.c.l.s4 1966171168
    %v3510 = vunpack.c.0.s8 %v3509
    %v3511 = vlaneseq
    %v3512 = vshrl.u32 %v3511, 7
    %v3513 = vsub.s32 %v3510, %v3512
    %v3514 = vrot.slane %v3504, %v3513
    %v3516 = vunpack.c.l.s4 1966171168
    %v3517 = vunpack.c.0.s8 %v3516
    %v3518 = vlaneseq
    %v3519 = vshrl.u32 %v3518, 7
    %v3520 = vsub.s32 %v3517, %v3519
    %v3521 = vrot.slane %v3505, %v3520
    %v3523 = vunpack.c.l.s4 1966171168
    %v3524 = vunpack.c.0.s8 %v3523
    %v3525 = vlaneseq
    %v3526 = vshrl.u32 %v3525, 7
    %v3527 = vsub.s32 %v3524, %v3526
    %v3528 = vrot.slane %v3506, %v3527
    %v3530 = vunpack.c.l.s4 1966171168
    %v3531 = vunpack.c.0.s8 %v3530
    %v3532 = vlaneseq
    %v3533 = vshrl.u32 %v3532, 7
    %v3534 = vsub.s32 %v3531, %v3533
    %v3535 = vrot.slane %v3507, %v3534
    %v3536 = vcombine.low %v3514, %v3521
    %v3537 = vcombine.low %v3528, %v3535
    %v3539 = vunpack.c.l.s4 1966171168
    %v3540 = vunpack.c.0.s8 %v3539
    %v3541 = vlaneseq
    %v3542 = vshrl.u32 %v3541, 7
    %v3543 = vsub.s32 %v3540, %v3542
    %v3544 = vrot.slane %v3536, %v3543
    %v3546 = vunpack.c.l.s4 1966171168
    %v3547 = vunpack.c.0.s8 %v3546
    %v3548 = vlaneseq
    %v3549 = vshrl.u32 %v3548, 7
    %v3550 = vsub.s32 %v3547, %v3549
    %v3551 = vrot.slane %v3537, %v3550
    %v3552 = vcombine.low %v3544, %v3551
    %v3553 = vcombine.low %v2056, %v2060
    %v3554 = vcombine.low %v2064, %v2068
    %v3555 = vcombine.low %v2072, %v2076
    %v3556 = vcombine.low %v2080, %v2084
    %v3558 = vunpack.c.l.s4 1966171168
    %v3559 = vunpack.c.0.s8 %v3558
    %v3560 = vlaneseq
    %v3561 = vshrl.u32 %v3560, 7
    %v3562 = vsub.s32 %v3559, %v3561
    %v3563 = vrot.slane %v3553, %v3562
    %v3565 = vunpack.c.l.s4 1966171168
    %v3566 = vunpack.c.0.s8 %v3565
    %v3567 = vlaneseq
    %v3568 = vshrl.u32 %v3567, 7
    %v3569 = vsub.s32 %v3566, %v3568
    %v3570 = vrot.slane %v3554, %v3569
    %v3572 = vunpack.c.l.s4 1966171168
    %v3573 = vunpack.c.0.s8 %v3572
    %v3574 = vlaneseq
    %v3575 = vshrl.u32 %v3574, 7
    %v3576 = vsub.s32 %v3573, %v3575
    %v3577 = vrot.slane %v3555, %v3576
    %v3579 = vunpack.c.l.s4 1966171168
    %v3580 = vunpack.c.0.s8 %v3579
    %v3581 = vlaneseq
    %v3582 = vshrl.u32 %v3581, 7
    %v3583 = vsub.s32 %v3580, %v3582
    %v3584 = vrot.slane %v3556, %v3583
    %v3585 = vcombine.low %v3563, %v3570
    %v3586 = vcombine.low %v3577, %v3584
    %v3588 = vunpack.c.l.s4 1966171168
    %v3589 = vunpack.c.0.s8 %v3588
    %v3590 = vlaneseq
    %v3591 = vshrl.u32 %v3590, 7
    %v3592 = vsub.s32 %v3589, %v3591
    %v3593 = vrot.slane %v3585, %v3592
    %v3595 = vunpack.c.l.s4 1966171168
    %v3596 = vunpack.c.0.s8 %v3595
    %v3597 = vlaneseq
    %v3598 = vshrl.u32 %v3597, 7
    %v3599 = vsub.s32 %v3596, %v3598
    %v3600 = vrot.slane %v3586, %v3599
    %v3601 = vcombine.low %v3593, %v3600
    %v3602 = vcombine.low %v2088, %v2092
    %v3603 = vcombine.low %v2096, %v2100
    %v3604 = vcombine.low %v2104, %v2108
    %v3605 = vcombine.low %v2112, %v2116
    %v3607 = vunpack.c.l.s4 1966171168
    %v3608 = vunpack.c.0.s8 %v3607
    %v3609 = vlaneseq
    %v3610 = vshrl.u32 %v3609, 7
    %v3611 = vsub.s32 %v3608, %v3610
    %v3612 = vrot.slane %v3602, %v3611
    %v3614 = vunpack.c.l.s4 1966171168
    %v3615 = vunpack.c.0.s8 %v3614
    %v3616 = vlaneseq
    %v3617 = vshrl.u32 %v3616, 7
    %v3618 = vsub.s32 %v3615, %v3617
    %v3619 = vrot.slane %v3603, %v3618
    %v3621 = vunpack.c.l.s4 1966171168
    %v3622 = vunpack.c.0.s8 %v3621
    %v3623 = vlaneseq
    %v3624 = vshrl.u32 %v3623, 7
    %v3625 = vsub.s32 %v3622, %v3624
    %v3626 = vrot.slane %v3604, %v3625
    %v3628 = vunpack.c.l.s4 1966171168
    %v3629 = vunpack.c.0.s8 %v3628
    %v3630 = vlaneseq
    %v3631 = vshrl.u32 %v3630, 7
    %v3632 = vsub.s32 %v3629, %v3631
    %v3633 = vrot.slane %v3605, %v3632
    %v3634 = vcombine.low %v3612, %v3619
    %v3635 = vcombine.low %v3626, %v3633
    %v3637 = vunpack.c.l.s4 1966171168
    %v3638 = vunpack.c.0.s8 %v3637
    %v3639 = vlaneseq
    %v3640 = vshrl.u32 %v3639, 7
    %v3641 = vsub.s32 %v3638, %v3640
    %v3642 = vrot.slane %v3634, %v3641
    %v3644 = vunpack.c.l.s4 1966171168
    %v3645 = vunpack.c.0.s8 %v3644
    %v3646 = vlaneseq
    %v3647 = vshrl.u32 %v3646, 7
    %v3648 = vsub.s32 %v3645, %v3647
    %v3649 = vrot.slane %v3635, %v3648
    %v3650 = vcombine.low %v3642, %v3649
    %v3651 = vcombine.low %v2120, %v2124
    %v3652 = vcombine.low %v2128, %v2132
    %v3653 = vcombine.low %v2136, %v2140
    %v3654 = vcombine.low %v2144, %v2148
    %v3656 = vunpack.c.l.s4 1966171168
    %v3657 = vunpack.c.0.s8 %v3656
    %v3658 = vlaneseq
    %v3659 = vshrl.u32 %v3658, 7
    %v3660 = vsub.s32 %v3657, %v3659
    %v3661 = vrot.slane %v3651, %v3660
    %v3663 = vunpack.c.l.s4 1966171168
    %v3664 = vunpack.c.0.s8 %v3663
    %v3665 = vlaneseq
    %v3666 = vshrl.u32 %v3665, 7
    %v3667 = vsub.s32 %v3664, %v3666
    %v3668 = vrot.slane %v3652, %v3667
    %v3670 = vunpack.c.l.s4 1966171168
    %v3671 = vunpack.c.0.s8 %v3670
    %v3672 = vlaneseq
    %v3673 = vshrl.u32 %v3672, 7
    %v3674 = vsub.s32 %v3671, %v3673
    %v3675 = vrot.slane %v3653, %v3674
    %v3677 = vunpack.c.l.s4 1966171168
    %v3678 = vunpack.c.0.s8 %v3677
    %v3679 = vlaneseq
    %v3680 = vshrl.u32 %v3679, 7
    %v3681 = vsub.s32 %v3678, %v3680
    %v3682 = vrot.slane %v3654, %v3681
    %v3683 = vcombine.low %v3661, %v3668
    %v3684 = vcombine.low %v3675, %v3682
    %v3686 = vunpack.c.l.s4 1966171168
    %v3687 = vunpack.c.0.s8 %v3686
    %v3688 = vlaneseq
    %v3689 = vshrl.u32 %v3688, 7
    %v3690 = vsub.s32 %v3687, %v3689
    %v3691 = vrot.slane %v3683, %v3690
    %v3693 = vunpack.c.l.s4 1966171168
    %v3694 = vunpack.c.0.s8 %v3693
    %v3695 = vlaneseq
    %v3696 = vshrl.u32 %v3695, 7
    %v3697 = vsub.s32 %v3694, %v3696
    %v3698 = vrot.slane %v3684, %v3697
    %v3699 = vcombine.low %v3691, %v3698
    %v3700 = vcombine.low %v2152, %v2156
    %v3701 = vcombine.low %v2160, %v2164
    %v3702 = vcombine.low %v2168, %v2172
    %v3703 = vcombine.low %v2176, %v2180
    %v3705 = vunpack.c.l.s4 1966171168
    %v3706 = vunpack.c.0.s8 %v3705
    %v3707 = vlaneseq
    %v3708 = vshrl.u32 %v3707, 7
    %v3709 = vsub.s32 %v3706, %v3708
    %v3710 = vrot.slane %v3700, %v3709
    %v3712 = vunpack.c.l.s4 1966171168
    %v3713 = vunpack.c.0.s8 %v3712
    %v3714 = vlaneseq
    %v3715 = vshrl.u32 %v3714, 7
    %v3716 = vsub.s32 %v3713, %v3715
    %v3717 = vrot.slane %v3701, %v3716
    %v3719 = vunpack.c.l.s4 1966171168
    %v3720 = vunpack.c.0.s8 %v3719
    %v3721 = vlaneseq
    %v3722 = vshrl.u32 %v3721, 7
    %v3723 = vsub.s32 %v3720, %v3722
    %v3724 = vrot.slane %v3702, %v3723
    %v3726 = vunpack.c.l.s4 1966171168
    %v3727 = vunpack.c.0.s8 %v3726
    %v3728 = vlaneseq
    %v3729 = vshrl.u32 %v3728, 7
    %v3730 = vsub.s32 %v3727, %v3729
    %v3731 = vrot.slane %v3703, %v3730
    %v3732 = vcombine.low %v3710, %v3717
    %v3733 = vcombine.low %v3724, %v3731
    %v3735 = vunpack.c.l.s4 1966171168
    %v3736 = vunpack.c.0.s8 %v3735
    %v3737 = vlaneseq
    %v3738 = vshrl.u32 %v3737, 7
    %v3739 = vsub.s32 %v3736, %v3738
    %v3740 = vrot.slane %v3732, %v3739
    %v3742 = vunpack.c.l.s4 1966171168
    %v3743 = vunpack.c.0.s8 %v3742
    %v3744 = vlaneseq
    %v3745 = vshrl.u32 %v3744, 7
    %v3746 = vsub.s32 %v3743, %v3745
    %v3747 = vrot.slane %v3733, %v3746
    %v3748 = vcombine.low %v3740, %v3747
    %3749 = vset.pattern.permute.xlu0 0
    %3750 = vperm.xlu0 %3749, %v2229
    %v3751 = vpop.permute.xlu0 %3750
    %3752 = vset.pattern.permute.xlu0 0
    %3753 = vperm.xlu0 %3752, %v2278
    %v3754 = vpop.permute.xlu0 %3753
    %3755 = vset.pattern.permute.xlu0 0
    %3756 = vperm.xlu0 %3755, %v2327
    %v3757 = vpop.permute.xlu0 %3756
    %3758 = vset.pattern.permute.xlu0 0
    %3759 = vperm.xlu0 %3758, %v2376
    %v3760 = vpop.permute.xlu0 %3759
    %3761 = vset.pattern.permute.xlu0 0
    %3762 = vperm.xlu0 %3761, %v2425
    %v3763 = vpop.permute.xlu0 %3762
    %3764 = vset.pattern.permute.xlu0 0
    %3765 = vperm.xlu0 %3764, %v2474
    %v3766 = vpop.permute.xlu0 %3765
    %3767 = vset.pattern.permute.xlu0 0
    %3768 = vperm.xlu0 %3767, %v2523
    %v3769 = vpop.permute.xlu0 %3768
    %3770 = vset.pattern.permute.xlu0 0
    %3771 = vperm.xlu0 %3770, %v2572
    %v3772 = vpop.permute.xlu0 %3771
    %3773 = vset.pattern.permute.xlu0 0
    %3774 = vperm.xlu0 %3773, %v2621
    %v3775 = vpop.permute.xlu0 %3774
    %3776 = vset.pattern.permute.xlu0 0
    %3777 = vperm.xlu0 %3776, %v2670
    %v3778 = vpop.permute.xlu0 %3777
    %3779 = vset.pattern.permute.xlu0 0
    %3780 = vperm.xlu0 %3779, %v2719
    %v3781 = vpop.permute.xlu0 %3780
    %3782 = vset.pattern.permute.xlu0 0
    %3783 = vperm.xlu0 %3782, %v2768
    %v3784 = vpop.permute.xlu0 %3783
    %3785 = vset.pattern.permute.xlu0 0
    %3786 = vperm.xlu0 %3785, %v2817
    %v3787 = vpop.permute.xlu0 %3786
    %3788 = vset.pattern.permute.xlu0 0
    %3789 = vperm.xlu0 %3788, %v2866
    %v3790 = vpop.permute.xlu0 %3789
    %3791 = vset.pattern.permute.xlu0 0
    %3792 = vperm.xlu0 %3791, %v2915
    %v3793 = vpop.permute.xlu0 %3792
    %3794 = vset.pattern.permute.xlu0 0
    %3795 = vperm.xlu0 %3794, %v2964
    %v3796 = vpop.permute.xlu0 %3795
    %3797 = vset.pattern.permute.xlu0 0
    %3798 = vperm.xlu0 %3797, %v3013
    %v3799 = vpop.permute.xlu0 %3798
    %3800 = vset.pattern.permute.xlu0 0
    %3801 = vperm.xlu0 %3800, %v3062
    %v3802 = vpop.permute.xlu0 %3801
    %3803 = vset.pattern.permute.xlu0 0
    %3804 = vperm.xlu0 %3803, %v3111
    %v3805 = vpop.permute.xlu0 %3804
    %3806 = vset.pattern.permute.xlu0 0
    %3807 = vperm.xlu0 %3806, %v3160
    %v3808 = vpop.permute.xlu0 %3807
    %3809 = vset.pattern.permute.xlu0 0
    %3810 = vperm.xlu0 %3809, %v3209
    %v3811 = vpop.permute.xlu0 %3810
    %3812 = vset.pattern.permute.xlu0 0
    %3813 = vperm.xlu0 %3812, %v3258
    %v3814 = vpop.permute.xlu0 %3813
    %3815 = vset.pattern.permute.xlu0 0
    %3816 = vperm.xlu0 %3815, %v3307
    %v3817 = vpop.permute.xlu0 %3816
    %3818 = vset.pattern.permute.xlu0 0
    %3819 = vperm.xlu0 %3818, %v3356
    %v3820 = vpop.permute.xlu0 %3819
    %3821 = vset.pattern.permute.xlu0 0
    %3822 = vperm.xlu0 %3821, %v3405
    %v3823 = vpop.permute.xlu0 %3822
    %3824 = vset.pattern.permute.xlu0 0
    %3825 = vperm.xlu0 %3824, %v3454
    %v3826 = vpop.permute.xlu0 %3825
    %3827 = vset.pattern.permute.xlu0 0
    %3828 = vperm.xlu0 %3827, %v3503
    %v3829 = vpop.permute.xlu0 %3828
    %3830 = vset.pattern.permute.xlu0 0
    %3831 = vperm.xlu0 %3830, %v3552
    %v3832 = vpop.permute.xlu0 %3831
    %3833 = vset.pattern.permute.xlu0 0
    %3834 = vperm.xlu0 %3833, %v3601
    %v3835 = vpop.permute.xlu0 %3834
    %3836 = vset.pattern.permute.xlu0 0
    %3837 = vperm.xlu0 %3836, %v3650
    %v3838 = vpop.permute.xlu0 %3837
    %3839 = vset.pattern.permute.xlu0 0
    %3840 = vperm.xlu0 %3839, %v3699
    %v3841 = vpop.permute.xlu0 %3840
    %3842 = vset.pattern.permute.xlu0 0
    %3843 = vperm.xlu0 %3842, %v3748
    %v3844 = vpop.permute.xlu0 %3843
    %v3845 = vlaneseq
    %v3846 = vand.u32 %v3845, 127
    %v3847 = vlaneseq
    %v3848 = vshrl.u32 %v3847, 7
    %v3849 = vsub.s32 %v3846, %v3848
    %v3850 = vrot.slane %v3751, %v3849
    %v3851 = vadd.s32 %v3846, 4294967288
    %v3852 = vlaneseq
    %v3853 = vshrl.u32 %v3852, 7
    %v3854 = vsub.s32 %v3851, %v3853
    %v3855 = vrot.slane %v3754, %v3854
    %vm3856 = vcmask 130112
    %v3857 = vsel %vm3856, %v3855, %v3850
    %v3858 = vadd.s32 %v3846, 4294967280
    %v3859 = vlaneseq
    %v3860 = vshrl.u32 %v3859, 7
    %v3861 = vsub.s32 %v3858, %v3860
    %v3862 = vrot.slane %v3757, %v3861
    %vm3863 = vcmask 195712
    %v3864 = vsel %vm3863, %v3862, %v3857
    %v3865 = vadd.s32 %v3846, 4294967272
    %v3866 = vlaneseq
    %v3867 = vshrl.u32 %v3866, 7
    %v3868 = vsub.s32 %v3865, %v3867
    %v3869 = vrot.slane %v3760, %v3868
    %vm3870 = vcmask 261312
    %v3871 = vsel %vm3870, %v3869, %v3864
    %v3872 = vadd.s32 %v3846, 4294967264
    %v3873 = vlaneseq
    %v3874 = vshrl.u32 %v3873, 7
    %v3875 = vsub.s32 %v3872, %v3874
    %v3876 = vrot.slane %v3763, %v3875
    %vm3877 = vcmask 326912
    %v3878 = vsel %vm3877, %v3876, %v3871
    %v3879 = vadd.s32 %v3846, 4294967256
    %v3880 = vlaneseq
    %v3881 = vshrl.u32 %v3880, 7
    %v3882 = vsub.s32 %v3879, %v3881
    %v3883 = vrot.slane %v3766, %v3882
    %vm3884 = vcmask 392512
    %v3885 = vsel %vm3884, %v3883, %v3878
    %v3886 = vadd.s32 %v3846, 4294967248
    %v3887 = vlaneseq
    %v3888 = vshrl.u32 %v3887, 7
    %v3889 = vsub.s32 %v3886, %v3888
    %v3890 = vrot.slane %v3769, %v3889
    %vm3891 = vcmask 458112
    %v3892 = vsel %vm3891, %v3890, %v3885
    %v3893 = vadd.s32 %v3846, 4294967240
    %v3894 = vlaneseq
    %v3895 = vshrl.u32 %v3894, 7
    %v3896 = vsub.s32 %v3893, %v3895
    %v3897 = vrot.slane %v3772, %v3896
    %vm3898 = vcmask 523712
    %v3899 = vsel %vm3898, %v3897, %v3892
    %v3900 = vadd.s32 %v3846, 4294967232
    %v3901 = vlaneseq
    %v3902 = vshrl.u32 %v3901, 7
    %v3903 = vsub.s32 %v3900, %v3902
    %v3904 = vrot.slane %v3775, %v3903
    %vm3905 = vcmask 589312
    %v3906 = vsel %vm3905, %v3904, %v3899
    %v3907 = vadd.s32 %v3846, 4294967224
    %v3908 = vlaneseq
    %v3909 = vshrl.u32 %v3908, 7
    %v3910 = vsub.s32 %v3907, %v3909
    %v3911 = vrot.slane %v3778, %v3910
    %vm3912 = vcmask 654912
    %v3913 = vsel %vm3912, %v3911, %v3906
    %v3914 = vadd.s32 %v3846, 4294967216
    %v3915 = vlaneseq
    %v3916 = vshrl.u32 %v3915, 7
    %v3917 = vsub.s32 %v3914, %v3916
    %v3918 = vrot.slane %v3781, %v3917
    %vm3919 = vcmask 720512
    %v3920 = vsel %vm3919, %v3918, %v3913
    %v3921 = vadd.s32 %v3846, 4294967208
    %v3922 = vlaneseq
    %v3923 = vshrl.u32 %v3922, 7
    %v3924 = vsub.s32 %v3921, %v3923
    %v3925 = vrot.slane %v3784, %v3924
    %vm3926 = vcmask 786112
    %v3927 = vsel %vm3926, %v3925, %v3920
    %v3928 = vadd.s32 %v3846, 4294967200
    %v3929 = vlaneseq
    %v3930 = vshrl.u32 %v3929, 7
    %v3931 = vsub.s32 %v3928, %v3930
    %v3932 = vrot.slane %v3787, %v3931
    %vm3933 = vcmask 851712
    %v3934 = vsel %vm3933, %v3932, %v3927
    %v3935 = vadd.s32 %v3846, 4294967192
    %v3936 = vlaneseq
    %v3937 = vshrl.u32 %v3936, 7
    %v3938 = vsub.s32 %v3935, %v3937
    %v3939 = vrot.slane %v3790, %v3938
    %vm3940 = vcmask 917312
    %v3941 = vsel %vm3940, %v3939, %v3934
    %v3942 = vadd.s32 %v3846, 4294967184
    %v3943 = vlaneseq
    %v3944 = vshrl.u32 %v3943, 7
    %v3945 = vsub.s32 %v3942, %v3944
    %v3946 = vrot.slane %v3793, %v3945
    %vm3947 = vcmask 982912
    %v3948 = vsel %vm3947, %v3946, %v3941
    %v3949 = vadd.s32 %v3846, 4294967176
    %v3950 = vlaneseq
    %v3951 = vshrl.u32 %v3950, 7
    %v3952 = vsub.s32 %v3949, %v3951
    %v3953 = vrot.slane %v3796, %v3952
    %vm3954 = vcmask 1048512
    %v3955 = vsel %vm3954, %v3953, %v3948
    %v3956 = vlaneseq
    %v3957 = vshrl.u32 %v3956, 7
    %v3958 = vsub.s32 %v3846, %v3957
    %v3959 = vrot.slane %v3799, %v3958
    %v3960 = vlaneseq
    %v3961 = vshrl.u32 %v3960, 7
    %v3962 = vsub.s32 %v3851, %v3961
    %v3963 = vrot.slane %v3802, %v3962
    %v3964 = vsel %vm3856, %v3963, %v3959
    %v3965 = vlaneseq
    %v3966 = vshrl.u32 %v3965, 7
    %v3967 = vsub.s32 %v3858, %v3966
    %v3968 = vrot.slane %v3805, %v3967
    %v3969 = vsel %vm3863, %v3968, %v3964
    %v3970 = vlaneseq
    %v3971 = vshrl.u32 %v3970, 7
    %v3972 = vsub.s32 %v3865, %v3971
    %v3973 = vrot.slane %v3808, %v3972
    %v3974 = vsel %vm3870, %v3973, %v3969
    %v3975 = vlaneseq
    %v3976 = vshrl.u32 %v3975, 7
    %v3977 = vsub.s32 %v3872, %v3976
    %v3978 = vrot.slane %v3811, %v3977
    %v3979 = vsel %vm3877, %v3978, %v3974
    %v3980 = vlaneseq
    %v3981 = vshrl.u32 %v3980, 7
    %v3982 = vsub.s32 %v3879, %v3981
    %v3983 = vrot.slane %v3814, %v3982
    %v3984 = vsel %vm3884, %v3983, %v3979
    %v3985 = vlaneseq
    %v3986 = vshrl.u32 %v3985, 7
    %v3987 = vsub.s32 %v3886, %v3986
    %v3988 = vrot.slane %v3817, %v3987
    %v3989 = vsel %vm3891, %v3988, %v3984
    %v3990 = vlaneseq
    %v3991 = vshrl.u32 %v3990, 7
    %v3992 = vsub.s32 %v3893, %v3991
    %v3993 = vrot.slane %v3820, %v3992
    %v3994 = vsel %vm3898, %v3993, %v3989
    %v3995 = vlaneseq
    %v3996 = vshrl.u32 %v3995, 7
    %v3997 = vsub.s32 %v3900, %v3996
    %v3998 = vrot.slane %v3823, %v3997
    %v3999 = vsel %vm3905, %v3998, %v3994
    %v4000 = vlaneseq
    %v4001 = vshrl.u32 %v4000, 7
    %v4002 = vsub.s32 %v3907, %v4001
    %v4003 = vrot.slane %v3826, %v4002
    %v4004 = vsel %vm3912, %v4003, %v3999
    %v4005 = vlaneseq
    %v4006 = vshrl.u32 %v4005, 7
    %v4007 = vsub.s32 %v3914, %v4006
    %v4008 = vrot.slane %v3829, %v4007
    %v4009 = vsel %vm3919, %v4008, %v4004
    %v4010 = vlaneseq
    %v4011 = vshrl.u32 %v4010, 7
    %v4012 = vsub.s32 %v3921, %v4011
    %v4013 = vrot.slane %v3832, %v4012
    %v4014 = vsel %vm3926, %v4013, %v4009
    %v4015 = vlaneseq
    %v4016 = vshrl.u32 %v4015, 7
    %v4017 = vsub.s32 %v3928, %v4016
    %v4018 = vrot.slane %v3835, %v4017
    %v4019 = vsel %vm3933, %v4018, %v4014
    %v4020 = vlaneseq
    %v4021 = vshrl.u32 %v4020, 7
    %v4022 = vsub.s32 %v3935, %v4021
    %v4023 = vrot.slane %v3838, %v4022
    %v4024 = vsel %vm3940, %v4023, %v4019
    %v4025 = vlaneseq
    %v4026 = vshrl.u32 %v4025, 7
    %v4027 = vsub.s32 %v3942, %v4026
    %v4028 = vrot.slane %v3841, %v4027
    %v4029 = vsel %vm3947, %v4028, %v4024
    %v4030 = vlaneseq
    %v4031 = vshrl.u32 %v4030, 7
    %v4032 = vsub.s32 %v3949, %v4031
    %v4033 = vrot.slane %v3844, %v4032
    %v4034 = vsel %vm3954, %v4033, %v4029
    %v4035 = vcombine.low %v3955, %v4034
    %v4037 = vunpack.c.l.s4 1966171168
    %v4038 = vunpack.c.0.s8 %v4037
    %v4039 = vlaneseq
    %v4040 = vshrl.u32 %v4039, 7
    %v4041 = vsub.s32 %v4038, %v4040
    %v4042 = vrot.slane %v4035, %v4041
    %v4044 = vunpack.c.l.s4 1966171168
    %v4045 = vunpack.c.0.s8 %v4044
    %v4046 = vlaneseq
    %v4047 = vshrl.u32 %v4046, 7
    %v4048 = vsub.s32 %v4045, %v4047
    %v4049 = vrot.slane %v4042, %v4048
    %v4051 = vlaneseq
    %vm4052 = vcmp.ge.s32.totalorder %v4051, 0
    %vm4053 = vcmp.lt.s32.totalorder %v4051, 256
    %vm4054 = vmand %vm4052, %vm4053
    %4055 = vst.msk [vmem:[#allocation3] sm:$0x3] %vm4054, %v4049
    // Predicated region
    $region38: #{tpu_custom_call.1} parent=1 // pred_check
      _
    $region39: #{tpu_custom_call.1} parent=1 // pred_check_branch
      %4057 = sbr.rel (0) target = $region41
    $region40: #{tpu_custom_call.1} parent=1 // pred_region
      %s4059 = ssub.s32 32, 32
      %4060 = vsyncadd [#allocation4], %s4059
      %s4062 = sshll.u32 [#allocation3], 4
      %s4063 = int_to_ptr.vmem [resolvable:$true] %s4062
      %4065 = dma.vmem_to_hbm [thread:$0]  %s4063, 32, %s9, [#allocation4]
    $region41: #{tpu_custom_call.1} parent=1 // pred_fallthru
      _
    // Predicated region
    $region42: #{tpu_custom_call.1} parent=1 // pred_check
      _
    $region43: #{tpu_custom_call.1} parent=1 // pred_check_branch
      %4067 = sbr.rel (0) target = $region45
    $region44: #{tpu_custom_call.1} parent=1 // pred_region
      %4068 = dma.done [#allocation4], 32
    $region45: #{tpu_custom_call.1} parent=1 // pred_fallthru
      _
    %4069 = vsyncpa [#allocation4], 1

</llo_original>
